<compile_context>
chip_gen: v7x
topology: tpu7x:2x2x1
jax: 0.10.0
libtpu: 0.0.40
codegen_flags: <defaults>
</compile_context>

<pallas_src>
import functools

import jax
import jax.numpy as jnp
from jax.experimental import pallas as pl
from jax.experimental.pallas import tpu as pltpu

EPS = 1e-5                     # nn.InstanceNorm2d default
MXU_DTYPE = jnp.bfloat16       # MXU inputs; accumulation and IN stats stay f32
LANE = 128


def _round_up(n, m):
    return (n + m - 1) // m * m


def _largest_divisor_at_most(n, cap):
    cap = max(1, min(cap, n))
    for d in range(cap, 0, -1):
        if n % d == 0:
            return d
    return 1


def _pick_tile_h(H, W):
    # Target th*W ~ 1024 output rows per tile: fills the MXU M dimension and
    # amortizes the ~0.35us per-grid-step overhead while keeping the per-kh
    # (th*Wp, 3*C_out_p) f32 partial product modest.
    # TODO(synk): pad H to the tile (with masked stats) for awkward/prime H.
    cap = max(1, min(H, 1024 // max(W, 1)))
    return _largest_divisor_at_most(H, cap)


def _vmem_capacity_bytes():
    try:
        return int(pltpu.get_tpu_info().vmem_capacity_bytes)
    except Exception:
        return 64 * 1024 * 1024   # conservative default (v7x per-TensorCore)


# ---------------------------------------------------------------------------
# Shared conv tile: 3 MXU dots (one per kh) against a kw-concatenated RHS,
# combined with shifted f32 adds.  Returns the un-normalized (th, W, C_out_p)
# f32 conv output for rows [r0, r0+th).
# ---------------------------------------------------------------------------
def _conv_tile(x_ref, w_ref, r0, th, w_out, c_out_p):
    wp = x_ref.shape[2]          # padded width (multiple of 8)
    c_in_p = x_ref.shape[3]
    acc = jnp.zeros((th, w_out, c_out_p), jnp.float32)
    for kh in range(3):
        # One lane-dense slab load + flatten per kh (instead of 9 shifted slices).
        lhs = x_ref[0, pl.ds(r0 + kh, th), :, :].reshape(th * wp, c_in_p)
        p = jnp.dot(lhs, w_ref[kh], preferred_element_type=jnp.float32)
        p = p.reshape(th, wp, 3 * c_out_p)
        for kw in range(3):
            # Lane slice (kw*C_out_p, aligned) + small sublane shift (kw in {0,1,2}).
            acc = acc + p[:, kw:kw + w_out, kw * c_out_p:(kw + 1) * c_out_p]
    return acc


# ---------------------------------------------------------------------------
# Fused single-pass kernel: conv -> (resident y) -> InstanceNorm -> ReLU.
# Grid = (N, H // th); the output block (1, H, W, C_out_p) is resident across
# the h axis and written back to HBM exactly once per sample.
# ---------------------------------------------------------------------------
def _conv_in_relu_fused_kernel(x_ref, w_ref, o_ref, sum_sc, sq_sc, *, th, use_act):
    h = pl.program_id(1)
    n_h = pl.num_programs(1)
    H, W, c_out_p = o_ref.shape[1], o_ref.shape[2], o_ref.shape[3]
    r0 = pl.multiple_of(h * th, th)

    @pl.when(h == 0)
    def _init():
        sum_sc[...] = jnp.zeros_like(sum_sc)
        sq_sc[...] = jnp.zeros_like(sq_sc)

    acc = _conv_tile(x_ref, w_ref, r0, th, W, c_out_p)
    o_ref[0, pl.ds(r0, th), :, :] = acc

    # Single-pass InstanceNorm statistics (f32).
    sum_sc[...] += jnp.sum(acc, axis=(0, 1))[None, :]
    sq_sc[...] += jnp.sum(acc * acc, axis=(0, 1))[None, :]

    @pl.when(h == n_h - 1)
    def _finalize():
        hw = jnp.float32(H * W)
        mean = sum_sc[...] / hw
        # NOTE: E[y^2]-E[y]^2 in f32 can lose precision when |mean| >> std; the
        # clamp prevents NaN.  Switch to a shifted/two-pass scheme if needed.
        var = jnp.maximum(sq_sc[...] / hw - mean * mean, 0.0)
        scale = jax.lax.rsqrt(var + jnp.float32(EPS))
        shift = -mean * scale
        y = o_ref[...] * scale.reshape(1, 1, 1, -1) + shift.reshape(1, 1, 1, -1)
        if use_act:
            y = jnp.maximum(y, 0.0)
        o_ref[...] = y.astype(o_ref.dtype)


# ---------------------------------------------------------------------------
# Two-pass fallback (used when the resident per-sample y would not fit VMEM).
# Pass 1: conv + stats, y streamed per h tile in bf16.  Pass 2: normalize+ReLU.
# ---------------------------------------------------------------------------
def _conv_stats_kernel(x_ref, w_ref, y_ref, sum_ref, sq_ref, *, th):
    h = pl.program_id(1)
    W, c_out_p = y_ref.shape[2], y_ref.shape[3]
    r0 = pl.multiple_of(h * th, th)

    acc = _conv_tile(x_ref, w_ref, r0, th, W, c_out_p)
    # bf16 intermediate (stats still taken from the f32 acc) -> halves HBM traffic.
    y_ref[...] = acc[None].astype(y_ref.dtype)

    @pl.when(h == 0)
    def _init():
        sum_ref[...] = jnp.zeros_like(sum_ref)
        sq_ref[...] = jnp.zeros_like(sq_ref)

    sum_ref[...] += jnp.sum(acc, axis=(0, 1))[None, None, :]
    sq_ref[...] += jnp.sum(acc * acc, axis=(0, 1))[None, None, :]


def _norm_act_kernel(y_ref, scale_ref, shift_ref, o_ref, *, use_act):
    y = y_ref[...].astype(jnp.float32) * scale_ref[...] + shift_ref[...]
    if use_act:
        y = jnp.maximum(y, 0.0)
    o_ref[...] = y.astype(o_ref.dtype)


# ---------------------------------------------------------------------------
# Wrapper
# ---------------------------------------------------------------------------
def conv_block_forward(x, weight, bias=None, *, use_act=True, tile_h=None,
                       channels_last=False, fuse=None):
    """ConvBlock forward (down=True): reflect-pad 3x3 conv (stride 1),
    InstanceNorm2d(affine=False), optional ReLU.

    x: (N, C_in, H, W) f32; weight: (C_out, C_in, 3, 3); bias: (C_out,) or None.
    Returns (N, C_out, H, W) f32 (or (N, H, W, C_out) if channels_last=True).
    """
    N, C_in, H, W = x.shape
    C_out, c_in_w, KH, KW = weight.shape
    assert c_in_w == C_in and (KH, KW) == (3, 3), "3x3 stride-1 conv only"
    del bias  # exact cancellation: InstanceNorm subtracts the channel mean.

    C_in_p = _round_up(C_in, LANE)
    C_out_p = _round_up(C_out, LANE)
    Wp = _round_up(W + 2, 8)                       # sublane-aligned padded width
    th = _largest_divisor_at_most(H, tile_h) if tile_h else _pick_tile_h(H, W)
    n_h = H // th

    # Reflect pad, NCHW -> NHWC, zero-pad width to Wp and channels to C_in_p, bf16.
    xp = jnp.pad(x, ((0, 0), (0, 0), (1, 1), (1, 1)), mode="reflect")
    xp = xp.transpose(0, 2, 3, 1)                                   # (N,H+2,W+2,C_in)
    xp = jnp.pad(xp, ((0, 0), (0, 0), (0, Wp - (W + 2)), (0, C_in_p - C_in)))
    xp = xp.astype(MXU_DTYPE)

    # (C_out, C_in, 3, 3) -> (3, C_in_p, 3*C_out_p): per kh, the 3 kw taps are
    # concatenated along the output-channel axis (one wide MXU dot per kh).
    w = weight.transpose(2, 3, 1, 0)                                # (3,3,C_in,C_out)
    w = jnp.pad(w, ((0, 0), (0, 0), (0, C_in_p - C_in), (0, C_out_p - C_out)))
    w = w.transpose(0, 2, 1, 3).reshape(3, C_in_p, 3 * C_out_p)
    w = w.astype(MXU_DTYPE)

    # --- VMEM budget (per grid step) and per-generation limit --------------
    vmem_cap = _vmem_capacity_bytes()
    bytes_x = (H + 2) * Wp * C_in_p * 2            # resident bf16 sample
    bytes_w = 3 * C_in_p * 3 * C_out_p * 2         # concatenated weights
    bytes_y_full = H * W * C_out_p * 4             # resident f32 conv output
    bytes_tmp = th * Wp * 3 * C_out_p * 4 + 2 * th * W * C_out_p * 4
    # NOTE: the constant-index weight spec is still double-buffered by default;
    # single-buffering it (pl.Buffered(1)) would save bytes_w of VMEM.
    fused_need = 2 * bytes_x + 2 * bytes_w + 2 * bytes_y_full + bytes_tmp + (1 << 20)
    two_pass_need = (2 * bytes_x + 2 * bytes_w + 2 * th * W * C_out_p * 2
                     + bytes_tmp + (1 << 20))

    use_fused = fuse if fuse is not None else (fused_need <= int(0.85 * vmem_cap))
    need = fused_need if use_fused else two_pass_need
    vmem_limit = int(min(0.9 * vmem_cap, max(2 * need, 32 << 20)))
    # TODO(synk): halo-slab input streaming (memory_space=pl.ANY + make_async_copy)
    # when even the two-pass residency exceeds VMEM (very large spatial sizes).

    x_spec = pl.BlockSpec((1, H + 2, Wp, C_in_p), lambda n, h: (n, 0, 0, 0))
    w_spec = pl.BlockSpec((3, C_in_p, 3 * C_out_p), lambda n, h: (0, 0, 0))

    if use_fused:
        # --- single fused pass: conv -> IN -> ReLU, one HBM write per sample ---
        out_nhwc = pl.pallas_call(
            functools.partial(_conv_in_relu_fused_kernel, th=th, use_act=use_act),
            grid=(N, n_h),
            in_specs=[x_spec, w_spec],
            out_specs=pl.BlockSpec((1, H, W, C_out_p), lambda n, h: (n, 0, 0, 0)),
            out_shape=jax.ShapeDtypeStruct((N, H, W, C_out_p), jnp.float32),
            scratch_shapes=[
                pltpu.VMEM((1, C_out_p), jnp.float32),   # per-channel sum
                pltpu.VMEM((1, C_out_p), jnp.float32),   # per-channel sum of squares
            ],
            compiler_params=pltpu.CompilerParams(
                dimension_semantics=("parallel", "arbitrary"),
                vmem_limit_bytes=vmem_limit),
        )(xp, w)
    else:
        # --- two-pass fallback: streamed bf16 intermediate ---------------------
        y, s1, s2 = pl.pallas_call(
            functools.partial(_conv_stats_kernel, th=th),
            grid=(N, n_h),
            in_specs=[x_spec, w_spec],
            out_specs=(
                pl.BlockSpec((1, th, W, C_out_p), lambda n, h: (n, h, 0, 0)),
                pl.BlockSpec((1, 1, C_out_p), lambda n, h: (n, 0, 0)),
                pl.BlockSpec((1, 1, C_out_p), lambda n, h: (n, 0, 0)),
            ),
            out_shape=(
                jax.ShapeDtypeStruct((N, H, W, C_out_p), MXU_DTYPE),
                jax.ShapeDtypeStruct((N, 1, C_out_p), jnp.float32),
                jax.ShapeDtypeStruct((N, 1, C_out_p), jnp.float32),
            ),
            compiler_params=pltpu.CompilerParams(
                dimension_semantics=("parallel", "arbitrary"),
                vmem_limit_bytes=vmem_limit),
        )(xp, w)

        hw = jnp.float32(H * W)
        mean = s1[:, 0, :] / hw
        var = jnp.maximum(s2[:, 0, :] / hw - mean * mean, 0.0)
        inv = jax.lax.rsqrt(var + jnp.float32(EPS))
        scale = inv[:, None, :]
        shift = (-mean * inv)[:, None, :]

        out_nhwc = pl.pallas_call(
            functools.partial(_norm_act_kernel, use_act=use_act),
            grid=(N, n_h),
            in_specs=[
                pl.BlockSpec((1, th, W, C_out_p), lambda n, h: (n, h, 0, 0)),
                pl.BlockSpec((1, 1, C_out_p), lambda n, h: (n, 0, 0)),
                pl.BlockSpec((1, 1, C_out_p), lambda n, h: (n, 0, 0)),
            ],
            out_specs=pl.BlockSpec((1, th, W, C_out_p), lambda n, h: (n, h, 0, 0)),
            out_shape=jax.ShapeDtypeStruct((N, H, W, C_out_p), jnp.float32),
            compiler_params=pltpu.CompilerParams(
                dimension_semantics=("parallel", "parallel"),
                vmem_limit_bytes=vmem_limit),
        )(y, scale, shift)

    if channels_last:
        # Avoids the NCHW transpose entirely for NHWC consumers (perf review).
        return out_nhwc[..., :C_out]
    # Single fused XLA slice+transpose pass for drop-in NCHW semantics.
    return out_nhwc[..., :C_out].transpose(0, 3, 1, 2)


def conv_block_reference(x, weight, bias):
    """Pure-JAX f32 reference (with bias, which cancels under InstanceNorm)."""
    y = jax.lax.conv_general_dilated(
        jnp.pad(x, ((0, 0), (0, 0), (1, 1), (1, 1)), mode="reflect"),
        weight,
        window_strides=(1, 1),
        padding="VALID",
        dimension_numbers=("NCHW", "OIHW", "NCHW"),
    ) + bias[None, :, None, None]
    mean = jnp.mean(y, axis=(2, 3), keepdims=True)
    var = jnp.mean((y - mean) ** 2, axis=(2, 3), keepdims=True)
    y = (y - mean) * jax.lax.rsqrt(var + EPS)
    return jnp.maximum(y, 0.0)


if __name__ == "__main__":
    key = jax.random.PRNGKey(0)
    k_x, k_w, k_b = jax.random.split(key, 3)

    N, C_in, C_out, H, W = 2, 4, 8, 16, 16

    x = jax.random.normal(k_x, (N, C_in, H, W), dtype=jnp.float32)
    # Deterministic synthetic parameters (shapes from nn.Conv2d(C_in, C_out, 3)).
    weight = 0.1 * jax.random.normal(k_w, (C_out, C_in, 3, 3), dtype=jnp.float32)
    bias = 0.1 * jax.random.normal(k_b, (C_out,), dtype=jnp.float32)

    ref = conv_block_reference(x, weight, bias)

    # Primary (fused single-pass) path.
    out = jax.block_until_ready(conv_block_forward(x, weight, bias))
    assert out.shape == (N, C_out, H, W)
    # bf16 MXU inputs (f32 accumulation / f32 IN stats) -> ~1e-2 level deviations.
    err = float(jnp.max(jnp.abs(out - ref)))
    assert jnp.allclose(out, ref, atol=5e-2, rtol=5e-2), f"fused mismatch: {err}"

    # Two-pass fallback path (bf16 intermediate) — exercised for correctness.
    out2 = jax.block_until_ready(conv_block_forward(x, weight, bias, fuse=False))
    err2 = float(jnp.max(jnp.abs(out2 - ref)))
    assert jnp.allclose(out2, ref, atol=5e-2, rtol=5e-2), f"two-pass mismatch: {err2}"

    print("KERNEL_OK")
</pallas_src>

<mosaic_0001>
module attributes {stable_mosaic.version = 11 : i64} {
  func.func @_conv_in_relu_fused_kernel(%arg0: i32, %arg1: i32, %arg2: memref<1x18x24x128xbf16, #tpu.memory_space<vmem>>, %arg3: memref<3x128x384xbf16, #tpu.memory_space<vmem>>, %arg4: memref<1x16x16x128xf32, #tpu.memory_space<vmem>>, %arg5: memref<1x128xf32, #tpu.memory_space<vmem>>, %arg6: memref<1x128xf32, #tpu.memory_space<vmem>>) attributes {dimension_semantics = [#tpu.dimension_semantics<parallel>, #tpu.dimension_semantics<arbitrary>], iteration_bounds = array<i64: 2, 1>, scalar_prefetch = 0 : i64, scratch_operands = 2 : i64, tpu.core_type = #tpu.core_type<tc>, window_params = [{transform_indices = @transform_0, window_bounds = array<i64: 1, 18, 24, 128>}, {pipeline_mode = #tpu.pipeline_mode<synchronous>, transform_indices = @transform_1, window_bounds = array<i64: 3, 128, 384>}, {transform_indices = @transform_2, window_bounds = array<i64: 1, 16, 16, 128>}]} {
    %c16_i32 = arith.constant 16 : i32
    %0 = arith.muli %arg1, %c16_i32 : i32
    %1 = tpu.assume_multiple %0, 16 : i32
    %c0_i32 = arith.constant 0 : i32
    %2 = arith.cmpi eq, %arg1, %c0_i32 : i32
    %3 = arith.extui %2 : i1 to i32
    %c0_i32_0 = arith.constant 0 : i32
    %4 = arith.cmpi ne, %3, %c0_i32_0 : i32
    scf.if %4 {
      %cst_35 = arith.constant 0.000000e+00 : f32
      %69 = vector.broadcast %cst_35 : f32 to vector<1x128xf32>
      %c0_36 = arith.constant 0 : index
      %c0_37 = arith.constant 0 : index
      %70 = vector.load %arg5[%c0_36, %c0_37] : memref<1x128xf32, #tpu.memory_space<vmem>>, vector<1x128xf32>
      tpu.vector_store %arg5[%c0_36, %c0_37], %69 {strides = array<i32>} : memref<1x128xf32, #tpu.memory_space<vmem>>, vector<1x128xf32>,
      %cst_38 = arith.constant 0.000000e+00 : f32
      %71 = vector.broadcast %cst_38 : f32 to vector<1x128xf32>
      %c0_39 = arith.constant 0 : index
      %c0_40 = arith.constant 0 : index
      %72 = vector.load %arg6[%c0_39, %c0_40] : memref<1x128xf32, #tpu.memory_space<vmem>>, vector<1x128xf32>
      tpu.vector_store %arg6[%c0_39, %c0_40], %71 {strides = array<i32>} : memref<1x128xf32, #tpu.memory_space<vmem>>, vector<1x128xf32>,
    } else {
    }
    %cst = arith.constant 0.000000e+00 : f32
    %5 = vector.broadcast %cst : f32 to vector<16x16x128xf32>
    %c0_i32_1 = arith.constant 0 : i32
    %6 = arith.addi %1, %c0_i32_1 : i32
    %c0 = arith.constant 0 : index
    %7 = arith.index_cast %6 : i32 to index
    %c0_2 = arith.constant 0 : index
    %c0_3 = arith.constant 0 : index
    %8 = vector.load %arg2[%c0, %7, %c0_2, %c0_3] : memref<1x18x24x128xbf16, #tpu.memory_space<vmem>>, vector<1x16x24x128xbf16>
    %9 = vector.shape_cast %8 : vector<1x16x24x128xbf16> to vector<16x24x128xbf16>
    %10 = vector.shape_cast %9 : vector<16x24x128xbf16> to vector<384x128xbf16>
    %c0_4 = arith.constant 0 : index
    %c0_5 = arith.constant 0 : index
    %c0_6 = arith.constant 0 : index
    %11 = vector.load %arg3[%c0_4, %c0_5, %c0_6] : memref<3x128x384xbf16, #tpu.memory_space<vmem>>, vector<1x128x384xbf16>
    %12 = vector.shape_cast %11 : vector<1x128x384xbf16> to vector<128x384xbf16>
    %cst_7 = arith.constant dense<0.000000e+00> : vector<384x384xf32>
    %13 = tpu.matmul %10, %12, %cst_7 {dimension_numbers = #tpu.dot_dimension_numbers<[1], [0], [0], [1], [0, 0, 1, 1], [], []>} : vector<384x128xbf16>, vector<128x384xbf16>, vector<384x384xf32> -> vector<384x384xf32>
    %14 = vector.shape_cast %13 : vector<384x384xf32> to vector<16x24x384xf32>
    %15 = vector.extract_strided_slice %14 {offsets = [0, 0, 0], sizes = [16, 16, 128], strides = [1, 1, 1]} : vector<16x24x384xf32> to vector<16x16x128xf32>
    %16 = arith.addf %5, %15 : vector<16x16x128xf32>
    %17 = vector.extract_strided_slice %14 {offsets = [0, 1, 128], sizes = [16, 16, 128], strides = [1, 1, 1]} : vector<16x24x384xf32> to vector<16x16x128xf32>
    %18 = arith.addf %16, %17 : vector<16x16x128xf32>
    %19 = vector.extract_strided_slice %14 {offsets = [0, 2, 256], sizes = [16, 16, 128], strides = [1, 1, 1]} : vector<16x24x384xf32> to vector<16x16x128xf32>
    %20 = arith.addf %18, %19 : vector<16x16x128xf32>
    %c1_i32 = arith.constant 1 : i32
    %21 = arith.addi %1, %c1_i32 : i32
    %c0_8 = arith.constant 0 : index
    %22 = arith.index_cast %21 : i32 to index
    %c0_9 = arith.constant 0 : index
    %c0_10 = arith.constant 0 : index
    %23 = vector.load %arg2[%c0_8, %22, %c0_9, %c0_10] : memref<1x18x24x128xbf16, #tpu.memory_space<vmem>>, vector<1x16x24x128xbf16>
    %24 = vector.shape_cast %23 : vector<1x16x24x128xbf16> to vector<16x24x128xbf16>
    %25 = vector.shape_cast %24 : vector<16x24x128xbf16> to vector<384x128xbf16>
    %c1 = arith.constant 1 : index
    %c0_11 = arith.constant 0 : index
    %c0_12 = arith.constant 0 : index
    %26 = vector.load %arg3[%c1, %c0_11, %c0_12] : memref<3x128x384xbf16, #tpu.memory_space<vmem>>, vector<1x128x384xbf16>
    %27 = vector.shape_cast %26 : vector<1x128x384xbf16> to vector<128x384xbf16>
    %cst_13 = arith.constant dense<0.000000e+00> : vector<384x384xf32>
    %28 = tpu.matmul %25, %27, %cst_13 {dimension_numbers = #tpu.dot_dimension_numbers<[1], [0], [0], [1], [0, 0, 1, 1], [], []>} : vector<384x128xbf16>, vector<128x384xbf16>, vector<384x384xf32> -> vector<384x384xf32>
    %29 = vector.shape_cast %28 : vector<384x384xf32> to vector<16x24x384xf32>
    %30 = vector.extract_strided_slice %29 {offsets = [0, 0, 0], sizes = [16, 16, 128], strides = [1, 1, 1]} : vector<16x24x384xf32> to vector<16x16x128xf32>
    %31 = arith.addf %20, %30 : vector<16x16x128xf32>
    %32 = vector.extract_strided_slice %29 {offsets = [0, 1, 128], sizes = [16, 16, 128], strides = [1, 1, 1]} : vector<16x24x384xf32> to vector<16x16x128xf32>
    %33 = arith.addf %31, %32 : vector<16x16x128xf32>
    %34 = vector.extract_strided_slice %29 {offsets = [0, 2, 256], sizes = [16, 16, 128], strides = [1, 1, 1]} : vector<16x24x384xf32> to vector<16x16x128xf32>
    %35 = arith.addf %33, %34 : vector<16x16x128xf32>
    %c2_i32 = arith.constant 2 : i32
    %36 = arith.addi %1, %c2_i32 : i32
    %c0_14 = arith.constant 0 : index
    %37 = arith.index_cast %36 : i32 to index
    %c0_15 = arith.constant 0 : index
    %c0_16 = arith.constant 0 : index
    %38 = vector.load %arg2[%c0_14, %37, %c0_15, %c0_16] : memref<1x18x24x128xbf16, #tpu.memory_space<vmem>>, vector<1x16x24x128xbf16>
    %39 = vector.shape_cast %38 : vector<1x16x24x128xbf16> to vector<16x24x128xbf16>
    %40 = vector.shape_cast %39 : vector<16x24x128xbf16> to vector<384x128xbf16>
    %c2 = arith.constant 2 : index
    %c0_17 = arith.constant 0 : index
    %c0_18 = arith.constant 0 : index
    %41 = vector.load %arg3[%c2, %c0_17, %c0_18] : memref<3x128x384xbf16, #tpu.memory_space<vmem>>, vector<1x128x384xbf16>
    %42 = vector.shape_cast %41 : vector<1x128x384xbf16> to vector<128x384xbf16>
    %cst_19 = arith.constant dense<0.000000e+00> : vector<384x384xf32>
    %43 = tpu.matmul %40, %42, %cst_19 {dimension_numbers = #tpu.dot_dimension_numbers<[1], [0], [0], [1], [0, 0, 1, 1], [], []>} : vector<384x128xbf16>, vector<128x384xbf16>, vector<384x384xf32> -> vector<384x384xf32>
    %44 = vector.shape_cast %43 : vector<384x384xf32> to vector<16x24x384xf32>
    %45 = vector.extract_strided_slice %44 {offsets = [0, 0, 0], sizes = [16, 16, 128], strides = [1, 1, 1]} : vector<16x24x384xf32> to vector<16x16x128xf32>
    %46 = arith.addf %35, %45 : vector<16x16x128xf32>
    %47 = vector.extract_strided_slice %44 {offsets = [0, 1, 128], sizes = [16, 16, 128], strides = [1, 1, 1]} : vector<16x24x384xf32> to vector<16x16x128xf32>
    %48 = arith.addf %46, %47 : vector<16x16x128xf32>
    %49 = vector.extract_strided_slice %44 {offsets = [0, 2, 256], sizes = [16, 16, 128], strides = [1, 1, 1]} : vector<16x24x384xf32> to vector<16x16x128xf32>
    %50 = arith.addf %48, %49 : vector<16x16x128xf32>
    %c0_20 = arith.constant 0 : index
    %51 = arith.index_cast %1 : i32 to index
    %c0_21 = arith.constant 0 : index
    %c0_22 = arith.constant 0 : index
    %52 = vector.load %arg4[%c0_20, %51, %c0_21, %c0_22] : memref<1x16x16x128xf32, #tpu.memory_space<vmem>>, vector<1x16x16x128xf32>
    %53 = vector.shape_cast %52 : vector<1x16x16x128xf32> to vector<16x16x128xf32>
    %54 = vector.shape_cast %50 : vector<16x16x128xf32> to vector<1x16x16x128xf32>
    tpu.vector_store %arg4[%c0_20, %51, %c0_21, %c0_22], %54 {strides = array<i32>} : memref<1x16x16x128xf32, #tpu.memory_space<vmem>>, vector<1x16x16x128xf32>,
    %c0_23 = arith.constant 0 : index
    %c0_24 = arith.constant 0 : index
    %55 = vector.load %arg5[%c0_23, %c0_24] : memref<1x128xf32, #tpu.memory_space<vmem>>, vector<1x128xf32>
    %cst_25 = arith.constant dense<0.000000e+00> : vector<128xf32>
    %56 = vector.multi_reduction <add>, %50, %cst_25 [0, 1] : vector<16x16x128xf32> to vector<128xf32>
    %57 = vector.shape_cast %56 : vector<128xf32> to vector<1x128xf32>
    %58 = arith.addf %55, %57 : vector<1x128xf32>
    %c0_26 = arith.constant 0 : index
    %c0_27 = arith.constant 0 : index
    %59 = vector.load %arg5[%c0_26, %c0_27] : memref<1x128xf32, #tpu.memory_space<vmem>>, vector<1x128xf32>
    tpu.vector_store %arg5[%c0_26, %c0_27], %58 {strides = array<i32>} : memref<1x128xf32, #tpu.memory_space<vmem>>, vector<1x128xf32>,
    %c0_28 = arith.constant 0 : index
    %c0_29 = arith.constant 0 : index
    %60 = vector.load %arg6[%c0_28, %c0_29] : memref<1x128xf32, #tpu.memory_space<vmem>>, vector<1x128xf32>
    %61 = arith.mulf %50, %50 : vector<16x16x128xf32>
    %cst_30 = arith.constant dense<0.000000e+00> : vector<128xf32>
    %62 = vector.multi_reduction <add>, %61, %cst_30 [0, 1] : vector<16x16x128xf32> to vector<128xf32>
    %63 = vector.shape_cast %62 : vector<128xf32> to vector<1x128xf32>
    %64 = arith.addf %60, %63 : vector<1x128xf32>
    %c0_31 = arith.constant 0 : index
    %c0_32 = arith.constant 0 : index
    %65 = vector.load %arg6[%c0_31, %c0_32] : memref<1x128xf32, #tpu.memory_space<vmem>>, vector<1x128xf32>
    tpu.vector_store %arg6[%c0_31, %c0_32], %64 {strides = array<i32>} : memref<1x128xf32, #tpu.memory_space<vmem>>, vector<1x128xf32>,
    %c0_i32_33 = arith.constant 0 : i32
    %66 = arith.cmpi eq, %arg1, %c0_i32_33 : i32
    %67 = arith.extui %66 : i1 to i32
    %c0_i32_34 = arith.constant 0 : i32
    %68 = arith.cmpi ne, %67, %c0_i32_34 : i32
    scf.if %68 {
      %c0_35 = arith.constant 0 : index
      %c0_36 = arith.constant 0 : index
      %69 = vector.load %arg5[%c0_35, %c0_36] : memref<1x128xf32, #tpu.memory_space<vmem>>, vector<1x128xf32>
      %cst_37 = arith.constant 2.560000e+02 : f32
      %70 = vector.broadcast %cst_37 : f32 to vector<1x128xf32>
      %71 = arith.divf %69, %70 : vector<1x128xf32>
      %c0_38 = arith.constant 0 : index
      %c0_39 = arith.constant 0 : index
      %72 = vector.load %arg6[%c0_38, %c0_39] : memref<1x128xf32, #tpu.memory_space<vmem>>, vector<1x128xf32>
      %cst_40 = arith.constant 2.560000e+02 : f32
      %73 = vector.broadcast %cst_40 : f32 to vector<1x128xf32>
      %74 = arith.divf %72, %73 : vector<1x128xf32>
      %75 = arith.mulf %71, %71 : vector<1x128xf32>
      %76 = arith.subf %74, %75 : vector<1x128xf32>
      %cst_41 = arith.constant 0.000000e+00 : f32
      %77 = vector.broadcast %cst_41 : f32 to vector<1x128xf32>
      %78 = arith.maximumf %76, %77 : vector<1x128xf32>
      %cst_42 = arith.constant 9.99999974E-6 : f32
      %79 = vector.broadcast %cst_42 : f32 to vector<1x128xf32>
      %80 = arith.addf %78, %79 : vector<1x128xf32>
      %81 = math.rsqrt %80 : vector<1x128xf32>
      %cst_43 = arith.constant 0.000000e+00 : f32
      %82 = vector.broadcast %cst_43 : f32 to vector<1x128xf32>
      %83 = arith.subf %82, %71 : vector<1x128xf32>
      %84 = arith.mulf %83, %81 : vector<1x128xf32>
      %c0_44 = arith.constant 0 : index
      %c0_45 = arith.constant 0 : index
      %c0_46 = arith.constant 0 : index
      %c0_47 = arith.constant 0 : index
      %85 = vector.load %arg4[%c0_44, %c0_45, %c0_46, %c0_47] : memref<1x16x16x128xf32, #tpu.memory_space<vmem>>, vector<1x16x16x128xf32>
      %86 = vector.shape_cast %81 : vector<1x128xf32> to vector<1x1x1x128xf32>
      %87 = vector.broadcast %86 : vector<1x1x1x128xf32> to vector<1x16x16x128xf32>
      %88 = arith.mulf %85, %87 : vector<1x16x16x128xf32>
      %89 = vector.shape_cast %84 : vector<1x128xf32> to vector<1x1x1x128xf32>
      %90 = vector.broadcast %89 : vector<1x1x1x128xf32> to vector<1x16x16x128xf32>
      %91 = arith.addf %88, %90 : vector<1x16x16x128xf32>
      %cst_48 = arith.constant 0.000000e+00 : f32
      %92 = vector.broadcast %cst_48 : f32 to vector<1x16x16x128xf32>
      %93 = arith.maximumf %91, %92 : vector<1x16x16x128xf32>
      %c0_49 = arith.constant 0 : index
      %c0_50 = arith.constant 0 : index
      %c0_51 = arith.constant 0 : index
      %c0_52 = arith.constant 0 : index
      %94 = vector.load %arg4[%c0_49, %c0_50, %c0_51, %c0_52] : memref<1x16x16x128xf32, #tpu.memory_space<vmem>>, vector<1x16x16x128xf32>
      tpu.vector_store %arg4[%c0_49, %c0_50, %c0_51, %c0_52], %93 {strides = array<i32>} : memref<1x16x16x128xf32, #tpu.memory_space<vmem>>, vector<1x16x16x128xf32>,
    } else {
    }
    return
  }
  func.func @transform_0(%arg0: i32, %arg1: i32) -> (i32, i32, i32, i32) {
    %c0_i32 = arith.constant 0 : i32
    %c0_i32_0 = arith.constant 0 : i32
    %c0_i32_1 = arith.constant 0 : i32
    %c0_i32_2 = arith.constant 0 : i32
    return %arg0, %c0_i32, %c0_i32_0, %c0_i32_1 : i32, i32, i32, i32
  }
  func.func @transform_1(%arg0: i32, %arg1: i32) -> (i32, i32, i32) {
    %c0_i32 = arith.constant 0 : i32
    %c0_i32_0 = arith.constant 0 : i32
    %c0_i32_1 = arith.constant 0 : i32
    %c0_i32_2 = arith.constant 0 : i32
    return %c0_i32, %c0_i32_0, %c0_i32_1 : i32, i32, i32
  }
  func.func @transform_2(%arg0: i32, %arg1: i32) -> (i32, i32, i32, i32) {
    %c0_i32 = arith.constant 0 : i32
    %c0_i32_0 = arith.constant 0 : i32
    %c0_i32_1 = arith.constant 0 : i32
    %c0_i32_2 = arith.constant 0 : i32
    return %arg0, %c0_i32, %c0_i32_0, %c0_i32_1 : i32, i32, i32, i32
  }
}

</mosaic_0001>

<llo_original>
// kernel: tpu_custom_call.1
$region0: #{tpu_custom_call.1}
  #allocation0 [shape = 'u32[]', space=smem, size = 0x4, offset = 0x4, fixed_abs, tag = 'smem constant byte address 0x4 - core index']
  #allocation1 [shape = 'u32[144,128]{1,0:T(1,128)}', space=vmem, size = 0x12000, scoped, tag = 'internal scratch']
  #allocation2 [shape = 'f32[1,128]{1,0:T(1,128)}', space=vmem, size = 0x200, scoped, tag = 'scratch operand']
  #allocation3 [shape = 'f32[1,128]{1,0:T(1,128)}', space=vmem, size = 0x200, scoped, tag = 'scratch operand']
  %s0 = inlined_call_operand.hbm [shape: bf16[2,18,24,128], index: 0, kind: input, shape index: {}]
  %s1 = inlined_call_operand.hbm [shape: bf16[3,128,384], index: 1, kind: input, shape index: {}]
  %s2 = inlined_call_operand.hbm [shape: f32[2,16,16,128], index: 2, kind: output, shape index: {}]
  %s3 = sld [smem:[#allocation0]]
  $region57: #{tpu_custom_call.1} parent=0
    _
  %s5 = ssub.s32 1, %s3
  %s6 = scalar_select 0, %s5, %s3
  $region1: #{tpu_custom_call.1} parent=0
    #allocation4 [shape = 'u8[221184]{0}', space=vmem, size = 0x36000, scoped, tag = 'input window, operand 0']
    #allocation5 [shape = 's32[2]{0}', space=sflag, size = 0x8, scoped, tag = 'scoped memory for tpu_custom_call.1']
    #allocation6 [shape = 's32[2]{0}', space=sflag, size = 0x8, scoped, tag = 'scoped memory for tpu_custom_call.1']
    #allocation7 [shape = 'u8[294912]{0}', space=vmem, size = 0x48000, scoped, tag = 'input window, operand 1, single buffered']
    #allocation8 [shape = 's32[1]{0}', space=sflag, size = 0x4, scoped, tag = 'scoped memory for tpu_custom_call.1']
    #allocation9 [shape = 'u8[262144]{0}', space=vmem, size = 0x40000, scoped, tag = 'output window, operand 0']
    %7 = vsyncpa [#allocation5], 0
    %s8 = scalar_lea.sflag [#allocation5], 1
    %9 = vsyncpa %s8, 0
    %10 = vsyncpa [#allocation8], 0
    %11 = vsyncpa [#allocation6], 0
    %s12 = scalar_lea.sflag [#allocation6], 1
    %13 = vsyncpa %s12, 0
    loop: start=0, step=1, limit=4
    $region2: #{tpu_custom_call.1} parent=1 // loop_pre_header
      _
    $region3: #{tpu_custom_call.1} parent=1 // loop_header
      %s15 = sphi 0, %s19
      %p16 = scmp.ge.s32.totalorder %s15, 4
      %s22 = sphi 0, %s34
      %s23 = sphi 0, %s30
      %s24 = sphi 0, %s22
      %s25 = sphi 0, %s23
      %s26 = sphi 0, %s24
      %s27 = sphi 0, %s25
      %s37 = sphi 0, %s39
      %s40 = sphi 0, %s37
      %s41 = sphi 0, %s40
      %s57 = sphi 0, %s41
      %s61 = sphi 0, %s61
      %s63 = sphi 0, %s61
      %s64 = sphi 0, %s63
      %s78 = sphi 0, %s64
      %s84 = sphi 0, %s86
      %s87 = sphi 0, %s84
      %s88 = sphi 0, %s87
      %s104 = sphi 0, %s88
    $region4: #{tpu_custom_call.1} parent=1 // loop_header_branch
      %18 = sbr.rel (%p16) target = $region8
    $region5: #{tpu_custom_call.1} parent=1 // loop_body
      %s20 = ssub.s32 %s15, 1
      %s21 = ssub.s32 %s15, 2
      %s28 = sadd.s32 1, %s23
      %p29 = scmp.ge.s32.totalorder %s28, 1
      %s30 = scalar_select %p29, 0, %s28
      %s31 = sadd.s32 1, %s22
      %s32 = scalar_select %p29, %s31, %s22
      %p33 = scmp.ge.s32.totalorder %s32, 2
      %s34 = scalar_select %p33, 0, %s32
      %s35 = ssub.s32 %s22, %s34
      %p36 = scmp.eq.s32.totalorder %s35, 0
      %s38 = sadd.s32 %s37, 1
      %s39 = scalar_select %p36, %s37, %s38
      %p42 = pneg %p36
      %p43 = scmp.eq.s32.totalorder %s15, 1
      %p44 = por %p42, %p43
      %p45 = scmp.ne.s32.totalorder %s37, %s40
      %p46 = scmp.eq.s32.totalorder %s15, 0
      %p47 = por %p45, %p46
      %p48 = scmp.ne.s32.totalorder %s37, %s40
      %p49 = scmp.eq.s32.totalorder %s20, 1
      %p50 = por %p48, %p49
      %p51 = scmp.ne.s32.totalorder %s40, %s41
      %p52 = scmp.eq.s32.totalorder %s20, 0
      %p53 = por %p51, %p52
      %p54 = scmp.ne.s32.totalorder %s40, %s41
      %p55 = scmp.eq.s32.totalorder %s21, 1
      %p56 = por %p54, %p55
      %p58 = scmp.ne.s32.totalorder %s41, %s57
      %p59 = scmp.eq.s32.totalorder %s21, 0
      %p60 = por %p58, %p59
      %s62 = sadd.s32 %s61, 1
      %p65 = scmp.eq.s32.totalorder %s15, 1
      %p66 = scmp.ne.s32.totalorder %s61, %s63
      %p67 = scmp.eq.s32.totalorder %s15, 0
      %p68 = por %p66, %p67
      %p69 = scmp.ne.s32.totalorder %s61, %s63
      %p70 = scmp.eq.s32.totalorder %s20, 1
      %p71 = por %p69, %p70
      %p72 = scmp.ne.s32.totalorder %s63, %s64
      %p73 = scmp.eq.s32.totalorder %s20, 0
      %p74 = por %p72, %p73
      %p75 = scmp.ne.s32.totalorder %s63, %s64
      %p76 = scmp.eq.s32.totalorder %s21, 1
      %p77 = por %p75, %p76
      %p79 = scmp.ne.s32.totalorder %s64, %s78
      %p80 = scmp.eq.s32.totalorder %s21, 0
      %p81 = por %p79, %p80
      %s82 = ssub.s32 %s22, %s34
      %p83 = scmp.eq.s32.totalorder %s82, 0
      %s85 = sadd.s32 %s84, 1
      %s86 = scalar_select %p83, %s84, %s85
      %p89 = pneg %p83
      %p90 = scmp.eq.s32.totalorder %s15, 1
      %p91 = por %p89, %p90
      %p92 = scmp.ne.s32.totalorder %s84, %s87
      %p93 = scmp.eq.s32.totalorder %s15, 0
      %p94 = por %p92, %p93
      %p95 = scmp.ne.s32.totalorder %s84, %s87
      %p96 = scmp.eq.s32.totalorder %s20, 1
      %p97 = por %p95, %p96
      %p98 = scmp.ne.s32.totalorder %s87, %s88
      %p99 = scmp.eq.s32.totalorder %s20, 0
      %p100 = por %p98, %p99
      %p101 = scmp.ne.s32.totalorder %s87, %s88
      %p102 = scmp.eq.s32.totalorder %s21, 1
      %p103 = por %p101, %p102
      %p105 = scmp.ne.s32.totalorder %s88, %s104
      %p106 = scmp.eq.s32.totalorder %s21, 0
      %p107 = por %p105, %p106
      %p108 = scmp.le.s32.totalorder 1, %s15
      %p109 = scmp.lt.s32.totalorder %s15, 3
      %p110 = pnand %p108, %p109
      %p111 = pneg %p110
      // Predicated region
      $region9: #{tpu_custom_call.1} parent=5 // pred_check
        _
      $region10: #{tpu_custom_call.1} parent=5 // pred_check_branch
        %113 = sbr.rel (%p110) target = $region12
      $region11: #{tpu_custom_call.1} parent=5 // pred_region
        %s114 = ssub.s32 %s15, 1
        // Predicated region
        $region13: #{tpu_custom_call.1} parent=11 // pred_check
          %p115 = pneg %p74
        $region14: #{tpu_custom_call.1} parent=11 // pred_check_branch
          %117 = sbr.rel (%p115) target = $region16
        $region15: #{tpu_custom_call.1} parent=11 // pred_region
          %s119 = ssub.s32 9216, 9216
          %120 = vsyncadd [#allocation8], %s119
          %s121 = sshll.u32 [#allocation7], 4
          %s122 = int_to_ptr.vmem [resolvable:$true] %s121
          %127 = dma.hbm_to_vmem [thread:$0]  %s1, 9216, %s122, [#allocation8], 192, 192, 12
        $region16: #{tpu_custom_call.1} parent=11 // pred_fallthru
          _
      $region12: #{tpu_custom_call.1} parent=5 // pred_fallthru
        _
      %p128 = scmp.lt.s32.totalorder %s15, 2
      // Predicated region
      $region17: #{tpu_custom_call.1} parent=5 // pred_check
        %p129 = pneg %p128
      $region18: #{tpu_custom_call.1} parent=5 // pred_check_branch
        %131 = sbr.rel (%p129) target = $region20
      $region19: #{tpu_custom_call.1} parent=5 // pred_region
        // Predicated region
        $region21: #{tpu_custom_call.1} parent=19 // pred_check
          %p132 = pneg %p47
        $region22: #{tpu_custom_call.1} parent=19 // pred_check_branch
          %134 = sbr.rel (%p132) target = $region24
        $region23: #{tpu_custom_call.1} parent=19 // pred_region
          %s135 = sand.u32 %s37, 1
          %s136 = scalar_lea.sflag [#allocation5], %s135
          %s137 = sand.u32 %s37, 1
          %s138 = smul.addr %s137, 216
          %s139 = scalar_lea.vmem [#allocation4], %s138
          %s141 = ssub.s32 3456, 3456
          %142 = vsyncadd %s136, %s141
          %s143 = smul.addr %s22, 54
          %s144 = smul.addr %s143, 64
          %s145 = scalar_lea.hbm %s0, %s144
          %s146 = sshll.u32 %s139, 4
          %s147 = int_to_ptr.vmem [resolvable:$true] %s146
          %152 = dma.hbm_to_vmem [thread:$0]  %s145, 3456, %s147, %s136, 64, 64, 4
        $region24: #{tpu_custom_call.1} parent=19 // pred_fallthru
          _
      $region20: #{tpu_custom_call.1} parent=5 // pred_fallthru
        _
      %p153 = scmp.le.s32.totalorder 1, %s15
      %p154 = scmp.lt.s32.totalorder %s15, 3
      %p155 = pnand %p153, %p154
      %p156 = pneg %p155
      // Predicated region
      $region25: #{tpu_custom_call.1} parent=5 // pred_check
        _
      $region26: #{tpu_custom_call.1} parent=5 // pred_check_branch
        %158 = sbr.rel (%p155) target = $region28
      $region27: #{tpu_custom_call.1} parent=5 // pred_region
        %s159 = ssub.s32 %s15, 1
        %s160 = sand.u32 %s40, 1
        %s161 = scalar_lea.sflag [#allocation5], %s160
        %s162 = sand.u32 %s40, 1
        %s163 = smul.addr %s162, 216
        %s164 = scalar_lea.vmem [#allocation4], %s163
        // Predicated region
        $region29: #{tpu_custom_call.1} parent=27 // pred_check
          %p165 = pneg %p53
        $region30: #{tpu_custom_call.1} parent=27 // pred_check_branch
          %167 = sbr.rel (%p165) target = $region32
        $region31: #{tpu_custom_call.1} parent=27 // pred_region
          %168 = dma.done %s161, 3456
        $region32: #{tpu_custom_call.1} parent=27 // pred_fallthru
          _
        // Predicated region
        $region33: #{tpu_custom_call.1} parent=27 // pred_check
          %p169 = pneg %p74
        $region34: #{tpu_custom_call.1} parent=27 // pred_check_branch
          %171 = sbr.rel (%p169) target = $region36
        $region35: #{tpu_custom_call.1} parent=27 // pred_region
          %172 = dma.done [#allocation8], 9216
        $region36: #{tpu_custom_call.1} parent=27 // pred_fallthru
          _
        %s173 = sand.u32 %s40, 1
        %s174 = scalar_lea.sflag [#allocation5], %s173
        %s175 = sand.u32 %s40, 1
        %s176 = smul.addr %s175, 216
        %s177 = scalar_lea.vmem [#allocation4], %s176
        %p178 = pneg %p53
        %p179 = pneg %p50
        %p180 = pneg %p74
        %p181 = pneg %p71
        %p182 = pneg %p100
        %p183 = pneg %p97
        %s184 = sand.u32 %s87, 1
        %s185 = scalar_lea.sflag [#allocation6], %s184
        %s186 = sand.u32 %s87, 1
        %s187 = smul.addr %s186, 256
        %s188 = scalar_lea.vmem [#allocation9], %s187
        %s190 = smul.u32 %s25, 16
        %p191 = scmp.eq.s32.totalorder %s25, 0
        // Predicated region
        $region37: #{tpu_custom_call.1} parent=27 // pred_check
          %p192 = pneg %p191
        $region38: #{tpu_custom_call.1} parent=27 // pred_check_branch
          %194 = sbr.rel (%p192) target = $region40
        $region39: #{tpu_custom_call.1} parent=27 // pred_region
          %195 = vst [vmem:[#allocation2] sm:$0x1] 0.0
          %196 = vst [vmem:[#allocation3] sm:$0x1] 0.0
        $region40: #{tpu_custom_call.1} parent=27 // pred_fallthru
          _
        %s197 = smul.u32 %s190, 3
        %s198 = smul.addr %s197, 4
        %s199 = scalar_lea.vmem %s164, %s198 [#allocation4]
        %v200 = vld [vmem:[%s199] sm:$0xf]
        %v201 = vld [vmem:[%s199 + $0x4] sm:$0xf]
        %v202 = vld [vmem:[%s199 + $0x8] sm:$0xf]
        %v203 = vld [vmem:[%s199 + $0xc] sm:$0xf]
        %v204 = vld [vmem:[%s199 + $0x10] sm:$0xf]
        %v205 = vld [vmem:[%s199 + $0x14] sm:$0xf]
        %v206 = vld [vmem:[%s199 + $0x18] sm:$0xf]
        %v207 = vld [vmem:[%s199 + $0x1c] sm:$0xf]
        %v208 = vld [vmem:[%s199 + $0x20] sm:$0xf]
        %v209 = vld [vmem:[%s199 + $0x24] sm:$0xf]
        %v210 = vld [vmem:[%s199 + $0x28] sm:$0xf]
        %v211 = vld [vmem:[%s199 + $0x2c] sm:$0xf]
        %v212 = vld [vmem:[%s199 + $0x30] sm:$0xf]
        %v213 = vld [vmem:[%s199 + $0x34] sm:$0xf]
        %v214 = vld [vmem:[%s199 + $0x38] sm:$0xf]
        %v215 = vld [vmem:[%s199 + $0x3c] sm:$0xf]
        %v216 = vld [vmem:[%s199 + $0x40] sm:$0xf]
        %v217 = vld [vmem:[%s199 + $0x44] sm:$0xf]
        %v218 = vld [vmem:[%s199 + $0x48] sm:$0xf]
        %v219 = vld [vmem:[%s199 + $0x4c] sm:$0xf]
        %v220 = vld [vmem:[%s199 + $0x50] sm:$0xf]
        %v221 = vld [vmem:[%s199 + $0x54] sm:$0xf]
        %v222 = vld [vmem:[%s199 + $0x58] sm:$0xf]
        %v223 = vld [vmem:[%s199 + $0x5c] sm:$0xf]
        %v224 = vld [vmem:[%s199 + $0x60] sm:$0xf]
        %v225 = vld [vmem:[%s199 + $0x64] sm:$0xf]
        %v226 = vld [vmem:[%s199 + $0x68] sm:$0xf]
        %v227 = vld [vmem:[%s199 + $0x6c] sm:$0xf]
        %v228 = vld [vmem:[%s199 + $0x70] sm:$0xf]
        %v229 = vld [vmem:[%s199 + $0x74] sm:$0xf]
        %v230 = vld [vmem:[%s199 + $0x78] sm:$0xf]
        %v231 = vld [vmem:[%s199 + $0x7c] sm:$0xf]
        %v232 = vld [vmem:[%s199 + $0x80] sm:$0xf]
        %v233 = vld [vmem:[%s199 + $0x84] sm:$0xf]
        %v234 = vld [vmem:[%s199 + $0x88] sm:$0xf]
        %v235 = vld [vmem:[%s199 + $0x8c] sm:$0xf]
        %v236 = vld [vmem:[%s199 + $0x90] sm:$0xf]
        %v237 = vld [vmem:[%s199 + $0x94] sm:$0xf]
        %v238 = vld [vmem:[%s199 + $0x98] sm:$0xf]
        %v239 = vld [vmem:[%s199 + $0x9c] sm:$0xf]
        %v240 = vld [vmem:[%s199 + $0xa0] sm:$0xf]
        %v241 = vld [vmem:[%s199 + $0xa4] sm:$0xf]
        %v242 = vld [vmem:[%s199 + $0xa8] sm:$0xf]
        %v243 = vld [vmem:[%s199 + $0xac] sm:$0xf]
        %v244 = vld [vmem:[%s199 + $0xb0] sm:$0xf]
        %v245 = vld [vmem:[%s199 + $0xb4] sm:$0xf]
        %v246 = vld [vmem:[%s199 + $0xb8] sm:$0xf]
        %v247 = vld [vmem:[%s199 + $0xbc] sm:$0xf]
        %v248 = vld [vmem:[#allocation7] sm:$0xff]
        %v249 = vld [vmem:[#allocation7 + $0x8] sm:$0xf]
        %v250 = vld [vmem:[#allocation7 + $0xc] sm:$0xff]
        %v251 = vld [vmem:[#allocation7 + $0x14] sm:$0xf]
        %v252 = vld [vmem:[#allocation7 + $0x18] sm:$0xff]
        %v253 = vld [vmem:[#allocation7 + $0x20] sm:$0xf]
        %v254 = vld [vmem:[#allocation7 + $0x24] sm:$0xff]
        %v255 = vld [vmem:[#allocation7 + $0x2c] sm:$0xf]
        %v256 = vld [vmem:[#allocation7 + $0x30] sm:$0xff]
        %v257 = vld [vmem:[#allocation7 + $0x38] sm:$0xf]
        %v258 = vld [vmem:[#allocation7 + $0x3c] sm:$0xff]
        %v259 = vld [vmem:[#allocation7 + $0x44] sm:$0xf]
        %v260 = vld [vmem:[#allocation7 + $0x48] sm:$0xff]
        %v261 = vld [vmem:[#allocation7 + $0x50] sm:$0xf]
        %v262 = vld [vmem:[#allocation7 + $0x54] sm:$0xff]
        %v263 = vld [vmem:[#allocation7 + $0x5c] sm:$0xf]
        %v264 = vld [vmem:[#allocation7 + $0x60] sm:$0xff]
        %v265 = vld [vmem:[#allocation7 + $0x68] sm:$0xf]
        %v266 = vld [vmem:[#allocation7 + $0x6c] sm:$0xff]
        %v267 = vld [vmem:[#allocation7 + $0x74] sm:$0xf]
        %v268 = vld [vmem:[#allocation7 + $0x78] sm:$0xff]
        %v269 = vld [vmem:[#allocation7 + $0x80] sm:$0xf]
        %v270 = vld [vmem:[#allocation7 + $0x84] sm:$0xff]
        %v271 = vld [vmem:[#allocation7 + $0x8c] sm:$0xf]
        %v272 = vld [vmem:[#allocation7 + $0x90] sm:$0xff]
        %v273 = vld [vmem:[#allocation7 + $0x98] sm:$0xf]
        %v274 = vld [vmem:[#allocation7 + $0x9c] sm:$0xff]
        %v275 = vld [vmem:[#allocation7 + $0xa4] sm:$0xf]
        %v276 = vld [vmem:[#allocation7 + $0xa8] sm:$0xff]
        %v277 = vld [vmem:[#allocation7 + $0xb0] sm:$0xf]
        %v278 = vld [vmem:[#allocation7 + $0xb4] sm:$0xff]
        %v279 = vld [vmem:[#allocation7 + $0xbc] sm:$0xf]
        %v328 = vunpack.c.l.b16 %v200
        %v329 = vunpack.c.l.b16 %v201
        %v330 = vunpack.c.l.b16 %v202
        %v331 = vunpack.c.l.b16 %v203
        %v332 = vunpack.c.l.b16 %v204
        %v333 = vunpack.c.l.b16 %v205
        %v334 = vunpack.c.l.b16 %v206
        %v335 = vunpack.c.l.b16 %v207
        %v336 = vunpack.c.l.b16 %v208
        %v337 = vunpack.c.l.b16 %v209
        %v338 = vunpack.c.l.b16 %v210
        %v339 = vunpack.c.l.b16 %v211
        %v340 = vunpack.c.l.b16 %v212
        %v341 = vunpack.c.l.b16 %v213
        %v342 = vunpack.c.l.b16 %v214
        %v343 = vunpack.c.l.b16 %v215
        %v344 = vunpack.c.l.b16 %v216
        %v345 = vunpack.c.l.b16 %v217
        %v346 = vunpack.c.l.b16 %v218
        %v347 = vunpack.c.l.b16 %v219
        %v348 = vunpack.c.l.b16 %v220
        %v349 = vunpack.c.l.b16 %v221
        %v350 = vunpack.c.l.b16 %v222
        %v351 = vunpack.c.l.b16 %v223
        %v352 = vunpack.c.l.b16 %v224
        %v353 = vunpack.c.l.b16 %v225
        %v354 = vunpack.c.l.b16 %v226
        %v355 = vunpack.c.l.b16 %v227
        %v356 = vunpack.c.l.b16 %v228
        %v357 = vunpack.c.l.b16 %v229
        %v358 = vunpack.c.l.b16 %v230
        %v359 = vunpack.c.l.b16 %v231
        %v360 = vunpack.c.l.b16 %v232
        %v361 = vunpack.c.l.b16 %v233
        %v362 = vunpack.c.l.b16 %v234
        %v363 = vunpack.c.l.b16 %v235
        %v364 = vunpack.c.l.b16 %v236
        %v365 = vunpack.c.l.b16 %v237
        %v366 = vunpack.c.l.b16 %v238
        %v367 = vunpack.c.l.b16 %v239
        %v368 = vunpack.c.l.b16 %v240
        %v369 = vunpack.c.l.b16 %v241
        %v370 = vunpack.c.l.b16 %v242
        %v371 = vunpack.c.l.b16 %v243
        %v372 = vunpack.c.l.b16 %v244
        %v373 = vunpack.c.l.b16 %v245
        %v374 = vunpack.c.l.b16 %v246
        %v375 = vunpack.c.l.b16 %v247
        %v376 = vpack.c.b16 %v329, %v328
        %v377 = vpack.c.b16 %v331, %v330
        %v378 = vpack.c.b16 %v333, %v332
        %v379 = vpack.c.b16 %v335, %v334
        %v380 = vpack.c.b16 %v337, %v336
        %v381 = vpack.c.b16 %v339, %v338
        %v382 = vpack.c.b16 %v341, %v340
        %v383 = vpack.c.b16 %v343, %v342
        %v384 = vpack.c.b16 %v345, %v344
        %v385 = vpack.c.b16 %v347, %v346
        %v386 = vpack.c.b16 %v349, %v348
        %v387 = vpack.c.b16 %v351, %v350
        %v388 = vpack.c.b16 %v353, %v352
        %v389 = vpack.c.b16 %v355, %v354
        %v390 = vpack.c.b16 %v357, %v356
        %v391 = vpack.c.b16 %v359, %v358
        %v392 = vpack.c.b16 %v361, %v360
        %v393 = vpack.c.b16 %v363, %v362
        %v394 = vpack.c.b16 %v365, %v364
        %v395 = vpack.c.b16 %v367, %v366
        %v396 = vpack.c.b16 %v369, %v368
        %v397 = vpack.c.b16 %v371, %v370
        %v398 = vpack.c.b16 %v373, %v372
        %v399 = vpack.c.b16 %v375, %v374
        %v456 = vunpack.c.l.b16 %v248
        %v457 = vunpack.c.h.b16 %v248
        %v458 = vunpack.c.l.b16 %v249
        %v459 = vunpack.c.l.b16 %v250
        %v460 = vunpack.c.h.b16 %v250
        %v461 = vunpack.c.l.b16 %v251
        %v462 = vunpack.c.l.b16 %v252
        %v463 = vunpack.c.h.b16 %v252
        %v464 = vunpack.c.l.b16 %v253
        %v465 = vunpack.c.l.b16 %v254
        %v466 = vunpack.c.h.b16 %v254
        %v467 = vunpack.c.l.b16 %v255
        %v468 = vunpack.c.l.b16 %v256
        %v469 = vunpack.c.h.b16 %v256
        %v470 = vunpack.c.l.b16 %v257
        %v471 = vunpack.c.l.b16 %v258
        %v472 = vunpack.c.h.b16 %v258
        %v473 = vunpack.c.l.b16 %v259
        %v474 = vunpack.c.l.b16 %v260
        %v475 = vunpack.c.h.b16 %v260
        %v476 = vunpack.c.l.b16 %v261
        %v477 = vunpack.c.l.b16 %v262
        %v478 = vunpack.c.h.b16 %v262
        %v479 = vunpack.c.l.b16 %v263
        %v480 = vunpack.c.l.b16 %v264
        %v481 = vunpack.c.h.b16 %v264
        %v482 = vunpack.c.l.b16 %v265
        %v483 = vunpack.c.l.b16 %v266
        %v484 = vunpack.c.h.b16 %v266
        %v485 = vunpack.c.l.b16 %v267
        %v486 = vunpack.c.l.b16 %v268
        %v487 = vunpack.c.h.b16 %v268
        %v488 = vunpack.c.l.b16 %v269
        %v489 = vunpack.c.l.b16 %v270
        %v490 = vunpack.c.h.b16 %v270
        %v491 = vunpack.c.l.b16 %v271
        %v492 = vunpack.c.l.b16 %v272
        %v493 = vunpack.c.h.b16 %v272
        %v494 = vunpack.c.l.b16 %v273
        %v495 = vunpack.c.l.b16 %v274
        %v496 = vunpack.c.h.b16 %v274
        %v497 = vunpack.c.l.b16 %v275
        %v498 = vunpack.c.l.b16 %v276
        %v499 = vunpack.c.h.b16 %v276
        %v500 = vunpack.c.l.b16 %v277
        %v501 = vunpack.c.l.b16 %v278
        %v502 = vunpack.c.h.b16 %v278
        %v503 = vunpack.c.l.b16 %v279
        %v504 = vpack.c.b16 %v459, %v456
        %v505 = vpack.c.b16 %v460, %v457
        %v506 = vpack.c.b16 %v461, %v458
        %v507 = vpack.c.b16 %v465, %v462
        %v508 = vpack.c.b16 %v466, %v463
        %v509 = vpack.c.b16 %v467, %v464
        %v510 = vpack.c.b16 %v471, %v468
        %v511 = vpack.c.b16 %v472, %v469
        %v512 = vpack.c.b16 %v473, %v470
        %v513 = vpack.c.b16 %v477, %v474
        %v514 = vpack.c.b16 %v478, %v475
        %v515 = vpack.c.b16 %v479, %v476
        %v516 = vpack.c.b16 %v483, %v480
        %v517 = vpack.c.b16 %v484, %v481
        %v518 = vpack.c.b16 %v485, %v482
        %v519 = vpack.c.b16 %v489, %v486
        %v520 = vpack.c.b16 %v490, %v487
        %v521 = vpack.c.b16 %v491, %v488
        %v522 = vpack.c.b16 %v495, %v492
        %v523 = vpack.c.b16 %v496, %v493
        %v524 = vpack.c.b16 %v497, %v494
        %v525 = vpack.c.b16 %v501, %v498
        %v526 = vpack.c.b16 %v502, %v499
        %v527 = vpack.c.b16 %v503, %v500
        %552 = vmatprep.subr.bf16.mxu0 %v505
        %553 = vmatpush1.bf16.msra.mxu0 %v504
        %554 = vmatprep.subr.bf16.mxu0 %v508
        %555 = vmatpush1.bf16.msra.mxu0 %v507
        %556 = vmatprep.subr.bf16.mxu0 %v511
        %557 = vmatpush1.bf16.msra.mxu0 %v510
        %558 = vmatprep.subr.bf16.mxu0 %v514
        %559 = vmatpush1.bf16.msra.mxu0 %v513
        %560 = vmatprep.subr.bf16.mxu0 %v517
        %561 = vmatpush1.bf16.msra.mxu0 %v516
        %562 = vmatprep.subr.bf16.mxu0 %v520
        %563 = vmatpush1.bf16.msra.mxu0 %v519
        %564 = vmatprep.subr.bf16.mxu0 %v523
        %565 = vmatpush1.bf16.msra.mxu0 %v522
        %566 = vmatprep.subr.bf16.mxu0 %v526
        %567 = vmatpush1.bf16.msra.mxu0 %v525
        %568 = vmatprep.subr.bf16.mxu0 0
        %569 = vmatpush1.bf16.msra.mxu0 0
        %570 = vmatprep.subr.bf16.mxu0 0
        %571 = vmatpush1.bf16.msra.mxu0 0
        %572 = vmatprep.subr.bf16.mxu0 0
        %573 = vmatpush1.bf16.msra.mxu0 0
        %574 = vmatprep.subr.bf16.mxu0 0
        %575 = vmatpush1.bf16.msra.mxu0 0
        %576 = vmatprep.subr.bf16.mxu0 0
        %577 = vmatpush1.bf16.msra.mxu0 0
        %578 = vmatprep.subr.bf16.mxu0 0
        %579 = vmatpush1.bf16.msra.mxu0 0
        %580 = vmatprep.subr.bf16.mxu0 0
        %581 = vmatpush1.bf16.msra.mxu0 0
        %582 = vmatprep.subr.bf16.mxu0 0
        %583 = vmatpush1.bf16.msra.mxu0 0
        %584 = vmatprep.mubr.bf16.mxu0 0
        %585 = vmatmul.mubr.bf16.gmra.mrb[0].mxu0 %v376
        %v586 = vpop.f32.mrb[0].mxu0
        %v587 = vadd.f32 0.0, %v586
        %v588 = vpop.f32.mrb[0].mxu0
        %v589 = vadd.f32 0.0, %v588
        %v590 = vpop.f32.mrb[0].mxu0
        %v591 = vadd.f32 0.0, %v590
        %v592 = vpop.f32.mrb[0].mxu0
        %v593 = vadd.f32 0.0, %v592
        %594 = vmatprep.mubr.bf16.mxu0 0
        %595 = vmatmul.mubr.bf16.gmra.mrb[0].mxu0 %v377
        %v596 = vpop.f32.mrb[0].mxu0
        %v597 = vpop.f32.mrb[0].mxu0
        %v598 = vadd.f32 0.0, %v597
        %v599 = vpop.f32.mrb[0].mxu0
        %v600 = vadd.f32 0.0, %v599
        %v601 = vpop.f32.mrb[0].mxu0
        %v602 = vadd.f32 0.0, %v601
        %603 = vmatprep.mubr.bf16.mxu0 0
        %604 = vmatmul.mubr.bf16.gmra.mrb[0].mxu0 %v378
        %v605 = vpop.f32.mrb[0].mxu0
        %v606 = vadd.f32 0.0, %v605
        %v607 = vpop.f32.mrb[0].mxu0
        %v608 = vadd.f32 0.0, %v607
        %v609 = vpop.f32.mrb[0].mxu0
        %v610 = vpop.f32.mrb[0].mxu0
        %v611 = vadd.f32 0.0, %v610
        %612 = vmatprep.mubr.bf16.mxu0 0
        %613 = vmatmul.mubr.bf16.gmra.mrb[0].mxu0 %v379
        %v614 = vpop.f32.mrb[0].mxu0
        %v615 = vadd.f32 0.0, %v614
        %v616 = vpop.f32.mrb[0].mxu0
        %v617 = vadd.f32 0.0, %v616
        %v618 = vpop.f32.mrb[0].mxu0
        %v619 = vadd.f32 0.0, %v618
        %v620 = vpop.f32.mrb[0].mxu0
        %v621 = vadd.f32 0.0, %v620
        %622 = vmatprep.mubr.bf16.mxu0 0
        %623 = vmatmul.mubr.bf16.gmra.mrb[0].mxu0 %v380
        %v624 = vpop.f32.mrb[0].mxu0
        %v625 = vpop.f32.mrb[0].mxu0
        %v626 = vadd.f32 0.0, %v625
        %v627 = vpop.f32.mrb[0].mxu0
        %v628 = vadd.f32 0.0, %v627
        %v629 = vpop.f32.mrb[0].mxu0
        %v630 = vadd.f32 0.0, %v629
        %631 = vmatprep.mubr.bf16.mxu0 0
        %632 = vmatmul.mubr.bf16.gmra.mrb[0].mxu0 %v381
        %v633 = vpop.f32.mrb[0].mxu0
        %v634 = vadd.f32 0.0, %v633
        %v635 = vpop.f32.mrb[0].mxu0
        %v636 = vadd.f32 0.0, %v635
        %v637 = vpop.f32.mrb[0].mxu0
        %v638 = vpop.f32.mrb[0].mxu0
        %v639 = vadd.f32 0.0, %v638
        %640 = vmatprep.mubr.bf16.mxu0 0
        %641 = vmatmul.mubr.bf16.gmra.mrb[0].mxu0 %v382
        %v642 = vpop.f32.mrb[0].mxu0
        %v643 = vadd.f32 0.0, %v642
        %v644 = vpop.f32.mrb[0].mxu0
        %v645 = vadd.f32 0.0, %v644
        %v646 = vpop.f32.mrb[0].mxu0
        %v647 = vadd.f32 0.0, %v646
        %v648 = vpop.f32.mrb[0].mxu0
        %v649 = vadd.f32 0.0, %v648
        %650 = vmatprep.mubr.bf16.mxu0 0
        %651 = vmatmul.mubr.bf16.gmra.mrb[0].mxu0 %v383
        %v652 = vpop.f32.mrb[0].mxu0
        %v653 = vpop.f32.mrb[0].mxu0
        %v654 = vadd.f32 0.0, %v653
        %v655 = vpop.f32.mrb[0].mxu0
        %v656 = vadd.f32 0.0, %v655
        %v657 = vpop.f32.mrb[0].mxu0
        %v658 = vadd.f32 0.0, %v657
        %659 = vmatprep.mubr.bf16.mxu0 0
        %660 = vmatmul.mubr.bf16.gmra.mrb[0].mxu0 %v384
        %v661 = vpop.f32.mrb[0].mxu0
        %v662 = vadd.f32 0.0, %v661
        %v663 = vpop.f32.mrb[0].mxu0
        %v664 = vadd.f32 0.0, %v663
        %v665 = vpop.f32.mrb[0].mxu0
        %v666 = vpop.f32.mrb[0].mxu0
        %v667 = vadd.f32 0.0, %v666
        %668 = vmatprep.mubr.bf16.mxu0 0
        %669 = vmatmul.mubr.bf16.gmra.mrb[0].mxu0 %v385
        %v670 = vpop.f32.mrb[0].mxu0
        %v671 = vadd.f32 0.0, %v670
        %v672 = vpop.f32.mrb[0].mxu0
        %v673 = vadd.f32 0.0, %v672
        %v674 = vpop.f32.mrb[0].mxu0
        %v675 = vadd.f32 0.0, %v674
        %v676 = vpop.f32.mrb[0].mxu0
        %v677 = vadd.f32 0.0, %v676
        %678 = vmatprep.mubr.bf16.mxu0 0
        %679 = vmatmul.mubr.bf16.gmra.mrb[0].mxu0 %v386
        %v680 = vpop.f32.mrb[0].mxu0
        %v681 = vpop.f32.mrb[0].mxu0
        %v682 = vadd.f32 0.0, %v681
        %v683 = vpop.f32.mrb[0].mxu0
        %v684 = vadd.f32 0.0, %v683
        %v685 = vpop.f32.mrb[0].mxu0
        %v686 = vadd.f32 0.0, %v685
        %687 = vmatprep.mubr.bf16.mxu0 0
        %688 = vmatmul.mubr.bf16.gmra.mrb[0].mxu0 %v387
        %v689 = vpop.f32.mrb[0].mxu0
        %v690 = vadd.f32 0.0, %v689
        %v691 = vpop.f32.mrb[0].mxu0
        %v692 = vadd.f32 0.0, %v691
        %v693 = vpop.f32.mrb[0].mxu0
        %v694 = vpop.f32.mrb[0].mxu0
        %v695 = vadd.f32 0.0, %v694
        %696 = vmatprep.mubr.bf16.mxu0 0
        %697 = vmatmul.mubr.bf16.gmra.mrb[0].mxu0 %v388
        %v698 = vpop.f32.mrb[0].mxu0
        %v699 = vadd.f32 0.0, %v698
        %v700 = vpop.f32.mrb[0].mxu0
        %v701 = vadd.f32 0.0, %v700
        %v702 = vpop.f32.mrb[0].mxu0
        %v703 = vadd.f32 0.0, %v702
        %v704 = vpop.f32.mrb[0].mxu0
        %v705 = vadd.f32 0.0, %v704
        %706 = vmatprep.mubr.bf16.mxu0 0
        %707 = vmatmul.mubr.bf16.gmra.mrb[0].mxu0 %v389
        %v708 = vpop.f32.mrb[0].mxu0
        %v709 = vpop.f32.mrb[0].mxu0
        %v710 = vadd.f32 0.0, %v709
        %v711 = vpop.f32.mrb[0].mxu0
        %v712 = vadd.f32 0.0, %v711
        %v713 = vpop.f32.mrb[0].mxu0
        %v714 = vadd.f32 0.0, %v713
        %715 = vmatprep.mubr.bf16.mxu0 0
        %716 = vmatmul.mubr.bf16.gmra.mrb[0].mxu0 %v390
        %v717 = vpop.f32.mrb[0].mxu0
        %v718 = vadd.f32 0.0, %v717
        %v719 = vpop.f32.mrb[0].mxu0
        %v720 = vadd.f32 0.0, %v719
        %v721 = vpop.f32.mrb[0].mxu0
        %v722 = vpop.f32.mrb[0].mxu0
        %v723 = vadd.f32 0.0, %v722
        %724 = vmatprep.mubr.bf16.mxu0 0
        %725 = vmatmul.mubr.bf16.gmra.mrb[0].mxu0 %v391
        %v726 = vpop.f32.mrb[0].mxu0
        %v727 = vadd.f32 0.0, %v726
        %v728 = vpop.f32.mrb[0].mxu0
        %v729 = vadd.f32 0.0, %v728
        %v730 = vpop.f32.mrb[0].mxu0
        %v731 = vadd.f32 0.0, %v730
        %v732 = vpop.f32.mrb[0].mxu0
        %v733 = vadd.f32 0.0, %v732
        %734 = vmatprep.mubr.bf16.mxu0 0
        %735 = vmatmul.mubr.bf16.gmra.mrb[0].mxu0 %v392
        %v736 = vpop.f32.mrb[0].mxu0
        %v737 = vpop.f32.mrb[0].mxu0
        %v738 = vadd.f32 0.0, %v737
        %v739 = vpop.f32.mrb[0].mxu0
        %v740 = vadd.f32 0.0, %v739
        %v741 = vpop.f32.mrb[0].mxu0
        %v742 = vadd.f32 0.0, %v741
        %743 = vmatprep.mubr.bf16.mxu0 0
        %744 = vmatmul.mubr.bf16.gmra.mrb[0].mxu0 %v393
        %v745 = vpop.f32.mrb[0].mxu0
        %v746 = vadd.f32 0.0, %v745
        %v747 = vpop.f32.mrb[0].mxu0
        %v748 = vadd.f32 0.0, %v747
        %v749 = vpop.f32.mrb[0].mxu0
        %v750 = vpop.f32.mrb[0].mxu0
        %v751 = vadd.f32 0.0, %v750
        %752 = vmatprep.mubr.bf16.mxu0 0
        %753 = vmatmul.mubr.bf16.gmra.mrb[0].mxu0 %v394
        %v754 = vpop.f32.mrb[0].mxu0
        %v755 = vadd.f32 0.0, %v754
        %v756 = vpop.f32.mrb[0].mxu0
        %v757 = vadd.f32 0.0, %v756
        %v758 = vpop.f32.mrb[0].mxu0
        %v759 = vadd.f32 0.0, %v758
        %v760 = vpop.f32.mrb[0].mxu0
        %v761 = vadd.f32 0.0, %v760
        %762 = vmatprep.mubr.bf16.mxu0 0
        %763 = vmatmul.mubr.bf16.gmra.mrb[0].mxu0 %v395
        %v764 = vpop.f32.mrb[0].mxu0
        %v765 = vpop.f32.mrb[0].mxu0
        %v766 = vadd.f32 0.0, %v765
        %v767 = vpop.f32.mrb[0].mxu0
        %v768 = vadd.f32 0.0, %v767
        %v769 = vpop.f32.mrb[0].mxu0
        %v770 = vadd.f32 0.0, %v769
        %771 = vmatprep.mubr.bf16.mxu0 0
        %772 = vmatmul.mubr.bf16.gmra.mrb[0].mxu0 %v396
        %v773 = vpop.f32.mrb[0].mxu0
        %v774 = vadd.f32 0.0, %v773
        %v775 = vpop.f32.mrb[0].mxu0
        %v776 = vadd.f32 0.0, %v775
        %v777 = vpop.f32.mrb[0].mxu0
        %v778 = vpop.f32.mrb[0].mxu0
        %v779 = vadd.f32 0.0, %v778
        %780 = vmatprep.mubr.bf16.mxu0 0
        %781 = vmatmul.mubr.bf16.gmra.mrb[0].mxu0 %v397
        %v782 = vpop.f32.mrb[0].mxu0
        %v783 = vadd.f32 0.0, %v782
        %v784 = vpop.f32.mrb[0].mxu0
        %v785 = vadd.f32 0.0, %v784
        %v786 = vpop.f32.mrb[0].mxu0
        %v787 = vadd.f32 0.0, %v786
        %v788 = vpop.f32.mrb[0].mxu0
        %v789 = vadd.f32 0.0, %v788
        %790 = vmatprep.mubr.bf16.mxu0 0
        %791 = vmatmul.mubr.bf16.gmra.mrb[0].mxu0 %v398
        %v792 = vpop.f32.mrb[0].mxu0
        %v793 = vpop.f32.mrb[0].mxu0
        %v794 = vadd.f32 0.0, %v793
        %v795 = vpop.f32.mrb[0].mxu0
        %v796 = vadd.f32 0.0, %v795
        %v797 = vpop.f32.mrb[0].mxu0
        %v798 = vadd.f32 0.0, %v797
        %799 = vmatprep.mubr.bf16.mxu0 0
        %800 = vmatmul.mubr.bf16.gmra.mrb[0].mxu0 %v399
        %v801 = vpop.f32.mrb[0].mxu0
        %v802 = vadd.f32 0.0, %v801
        %v803 = vpop.f32.mrb[0].mxu0
        %v804 = vadd.f32 0.0, %v803
        %v805 = vpop.f32.mrb[0].mxu0
        %v806 = vpop.f32.mrb[0].mxu0
        %v807 = vadd.f32 0.0, %v806
        %808 = vdwg.mxu0
        %809 = vmatprep.subr.bf16.mxu0 0
        %810 = vmatpush1.bf16.msra.mxu0 %v506
        %811 = vmatprep.subr.bf16.mxu0 0
        %812 = vmatpush1.bf16.msra.mxu0 %v509
        %813 = vmatprep.subr.bf16.mxu0 0
        %814 = vmatpush1.bf16.msra.mxu0 %v512
        %815 = vmatprep.subr.bf16.mxu0 0
        %816 = vmatpush1.bf16.msra.mxu0 %v515
        %817 = vmatprep.subr.bf16.mxu0 0
        %818 = vmatpush1.bf16.msra.mxu0 %v518
        %819 = vmatprep.subr.bf16.mxu0 0
        %820 = vmatpush1.bf16.msra.mxu0 %v521
        %821 = vmatprep.subr.bf16.mxu0 0
        %822 = vmatpush1.bf16.msra.mxu0 %v524
        %823 = vmatprep.subr.bf16.mxu0 0
        %824 = vmatpush1.bf16.msra.mxu0 %v527
        %825 = vmatprep.subr.bf16.mxu0 0
        %826 = vmatpush1.bf16.msra.mxu0 0
        %827 = vmatprep.subr.bf16.mxu0 0
        %828 = vmatpush1.bf16.msra.mxu0 0
        %829 = vmatprep.subr.bf16.mxu0 0
        %830 = vmatpush1.bf16.msra.mxu0 0
        %831 = vmatprep.subr.bf16.mxu0 0
        %832 = vmatpush1.bf16.msra.mxu0 0
        %833 = vmatprep.subr.bf16.mxu0 0
        %834 = vmatpush1.bf16.msra.mxu0 0
        %835 = vmatprep.subr.bf16.mxu0 0
        %836 = vmatpush1.bf16.msra.mxu0 0
        %837 = vmatprep.subr.bf16.mxu0 0
        %838 = vmatpush1.bf16.msra.mxu0 0
        %839 = vmatprep.subr.bf16.mxu0 0
        %840 = vmatpush1.bf16.msra.mxu0 0
        %841 = vmatprep.mubr.bf16.mxu0 0
        %842 = vmatmul.mubr.bf16.gmra.mrb[0].mxu0 %v376
        %v843 = vpop.f32.mrb[0].mxu0
        %v844 = vadd.f32 0.0, %v843
        %v845 = vpop.f32.mrb[0].mxu0
        %v846 = vpop.f32.mrb[0].mxu0
        %v847 = vadd.f32 0.0, %v846
        %v848 = vpop.f32.mrb[0].mxu0
        %849 = vmatprep.mubr.bf16.mxu0 0
        %850 = vmatmul.mubr.bf16.gmra.mrb[0].mxu0 %v377
        %v851 = vpop.f32.mrb[0].mxu0
        %v852 = vadd.f32 0.0, %v851
        %v853 = vpop.f32.mrb[0].mxu0
        %v854 = vpop.f32.mrb[0].mxu0
        %v855 = vadd.f32 0.0, %v854
        %v856 = vpop.f32.mrb[0].mxu0
        %857 = vmatprep.mubr.bf16.mxu0 0
        %858 = vmatmul.mubr.bf16.gmra.mrb[0].mxu0 %v378
        %v859 = vpop.f32.mrb[0].mxu0
        %v860 = vadd.f32 0.0, %v859
        %v861 = vpop.f32.mrb[0].mxu0
        %v862 = vpop.f32.mrb[0].mxu0
        %v863 = vadd.f32 0.0, %v862
        %v864 = vpop.f32.mrb[0].mxu0
        %865 = vmatprep.mubr.bf16.mxu0 0
        %866 = vmatmul.mubr.bf16.gmra.mrb[0].mxu0 %v379
        %v867 = vpop.f32.mrb[0].mxu0
        %v868 = vadd.f32 0.0, %v867
        %v869 = vpop.f32.mrb[0].mxu0
        %v870 = vpop.f32.mrb[0].mxu0
        %v871 = vadd.f32 0.0, %v870
        %v872 = vpop.f32.mrb[0].mxu0
        %873 = vmatprep.mubr.bf16.mxu0 0
        %874 = vmatmul.mubr.bf16.gmra.mrb[0].mxu0 %v380
        %v875 = vpop.f32.mrb[0].mxu0
        %v876 = vadd.f32 0.0, %v875
        %v877 = vpop.f32.mrb[0].mxu0
        %v878 = vpop.f32.mrb[0].mxu0
        %v879 = vadd.f32 0.0, %v878
        %v880 = vpop.f32.mrb[0].mxu0
        %881 = vmatprep.mubr.bf16.mxu0 0
        %882 = vmatmul.mubr.bf16.gmra.mrb[0].mxu0 %v381
        %v883 = vpop.f32.mrb[0].mxu0
        %v884 = vadd.f32 0.0, %v883
        %v885 = vpop.f32.mrb[0].mxu0
        %v886 = vpop.f32.mrb[0].mxu0
        %v887 = vadd.f32 0.0, %v886
        %v888 = vpop.f32.mrb[0].mxu0
        %889 = vmatprep.mubr.bf16.mxu0 0
        %890 = vmatmul.mubr.bf16.gmra.mrb[0].mxu0 %v382
        %v891 = vpop.f32.mrb[0].mxu0
        %v892 = vadd.f32 0.0, %v891
        %v893 = vpop.f32.mrb[0].mxu0
        %v894 = vpop.f32.mrb[0].mxu0
        %v895 = vadd.f32 0.0, %v894
        %v896 = vpop.f32.mrb[0].mxu0
        %897 = vmatprep.mubr.bf16.mxu0 0
        %898 = vmatmul.mubr.bf16.gmra.mrb[0].mxu0 %v383
        %v899 = vpop.f32.mrb[0].mxu0
        %v900 = vadd.f32 0.0, %v899
        %v901 = vpop.f32.mrb[0].mxu0
        %v902 = vpop.f32.mrb[0].mxu0
        %v903 = vadd.f32 0.0, %v902
        %v904 = vpop.f32.mrb[0].mxu0
        %905 = vmatprep.mubr.bf16.mxu0 0
        %906 = vmatmul.mubr.bf16.gmra.mrb[0].mxu0 %v384
        %v907 = vpop.f32.mrb[0].mxu0
        %v908 = vadd.f32 0.0, %v907
        %v909 = vpop.f32.mrb[0].mxu0
        %v910 = vpop.f32.mrb[0].mxu0
        %v911 = vadd.f32 0.0, %v910
        %v912 = vpop.f32.mrb[0].mxu0
        %913 = vmatprep.mubr.bf16.mxu0 0
        %914 = vmatmul.mubr.bf16.gmra.mrb[0].mxu0 %v385
        %v915 = vpop.f32.mrb[0].mxu0
        %v916 = vadd.f32 0.0, %v915
        %v917 = vpop.f32.mrb[0].mxu0
        %v918 = vpop.f32.mrb[0].mxu0
        %v919 = vadd.f32 0.0, %v918
        %v920 = vpop.f32.mrb[0].mxu0
        %921 = vmatprep.mubr.bf16.mxu0 0
        %922 = vmatmul.mubr.bf16.gmra.mrb[0].mxu0 %v386
        %v923 = vpop.f32.mrb[0].mxu0
        %v924 = vadd.f32 0.0, %v923
        %v925 = vpop.f32.mrb[0].mxu0
        %v926 = vpop.f32.mrb[0].mxu0
        %v927 = vadd.f32 0.0, %v926
        %v928 = vpop.f32.mrb[0].mxu0
        %929 = vmatprep.mubr.bf16.mxu0 0
        %930 = vmatmul.mubr.bf16.gmra.mrb[0].mxu0 %v387
        %v931 = vpop.f32.mrb[0].mxu0
        %v932 = vadd.f32 0.0, %v931
        %v933 = vpop.f32.mrb[0].mxu0
        %v934 = vpop.f32.mrb[0].mxu0
        %v935 = vadd.f32 0.0, %v934
        %v936 = vpop.f32.mrb[0].mxu0
        %937 = vmatprep.mubr.bf16.mxu0 0
        %938 = vmatmul.mubr.bf16.gmra.mrb[0].mxu0 %v388
        %v939 = vpop.f32.mrb[0].mxu0
        %v940 = vadd.f32 0.0, %v939
        %v941 = vpop.f32.mrb[0].mxu0
        %v942 = vpop.f32.mrb[0].mxu0
        %v943 = vadd.f32 0.0, %v942
        %v944 = vpop.f32.mrb[0].mxu0
        %945 = vmatprep.mubr.bf16.mxu0 0
        %946 = vmatmul.mubr.bf16.gmra.mrb[0].mxu0 %v389
        %v947 = vpop.f32.mrb[0].mxu0
        %v948 = vadd.f32 0.0, %v947
        %v949 = vpop.f32.mrb[0].mxu0
        %v950 = vpop.f32.mrb[0].mxu0
        %v951 = vadd.f32 0.0, %v950
        %v952 = vpop.f32.mrb[0].mxu0
        %953 = vmatprep.mubr.bf16.mxu0 0
        %954 = vmatmul.mubr.bf16.gmra.mrb[0].mxu0 %v390
        %v955 = vpop.f32.mrb[0].mxu0
        %v956 = vadd.f32 0.0, %v955
        %v957 = vpop.f32.mrb[0].mxu0
        %v958 = vpop.f32.mrb[0].mxu0
        %v959 = vadd.f32 0.0, %v958
        %v960 = vpop.f32.mrb[0].mxu0
        %961 = vmatprep.mubr.bf16.mxu0 0
        %962 = vmatmul.mubr.bf16.gmra.mrb[0].mxu0 %v391
        %v963 = vpop.f32.mrb[0].mxu0
        %v964 = vadd.f32 0.0, %v963
        %v965 = vpop.f32.mrb[0].mxu0
        %v966 = vpop.f32.mrb[0].mxu0
        %v967 = vadd.f32 0.0, %v966
        %v968 = vpop.f32.mrb[0].mxu0
        %969 = vmatprep.mubr.bf16.mxu0 0
        %970 = vmatmul.mubr.bf16.gmra.mrb[0].mxu0 %v392
        %v971 = vpop.f32.mrb[0].mxu0
        %v972 = vadd.f32 0.0, %v971
        %v973 = vpop.f32.mrb[0].mxu0
        %v974 = vpop.f32.mrb[0].mxu0
        %v975 = vadd.f32 0.0, %v974
        %v976 = vpop.f32.mrb[0].mxu0
        %977 = vmatprep.mubr.bf16.mxu0 0
        %978 = vmatmul.mubr.bf16.gmra.mrb[0].mxu0 %v393
        %v979 = vpop.f32.mrb[0].mxu0
        %v980 = vadd.f32 0.0, %v979
        %v981 = vpop.f32.mrb[0].mxu0
        %v982 = vpop.f32.mrb[0].mxu0
        %v983 = vadd.f32 0.0, %v982
        %v984 = vpop.f32.mrb[0].mxu0
        %985 = vmatprep.mubr.bf16.mxu0 0
        %986 = vmatmul.mubr.bf16.gmra.mrb[0].mxu0 %v394
        %v987 = vpop.f32.mrb[0].mxu0
        %v988 = vadd.f32 0.0, %v987
        %v989 = vpop.f32.mrb[0].mxu0
        %v990 = vpop.f32.mrb[0].mxu0
        %v991 = vadd.f32 0.0, %v990
        %v992 = vpop.f32.mrb[0].mxu0
        %993 = vmatprep.mubr.bf16.mxu0 0
        %994 = vmatmul.mubr.bf16.gmra.mrb[0].mxu0 %v395
        %v995 = vpop.f32.mrb[0].mxu0
        %v996 = vadd.f32 0.0, %v995
        %v997 = vpop.f32.mrb[0].mxu0
        %v998 = vpop.f32.mrb[0].mxu0
        %v999 = vadd.f32 0.0, %v998
        %v1000 = vpop.f32.mrb[0].mxu0
        %1001 = vmatprep.mubr.bf16.mxu0 0
        %1002 = vmatmul.mubr.bf16.gmra.mrb[0].mxu0 %v396
        %v1003 = vpop.f32.mrb[0].mxu0
        %v1004 = vadd.f32 0.0, %v1003
        %v1005 = vpop.f32.mrb[0].mxu0
        %v1006 = vpop.f32.mrb[0].mxu0
        %v1007 = vadd.f32 0.0, %v1006
        %v1008 = vpop.f32.mrb[0].mxu0
        %1009 = vmatprep.mubr.bf16.mxu0 0
        %1010 = vmatmul.mubr.bf16.gmra.mrb[0].mxu0 %v397
        %v1011 = vpop.f32.mrb[0].mxu0
        %v1012 = vadd.f32 0.0, %v1011
        %v1013 = vpop.f32.mrb[0].mxu0
        %v1014 = vpop.f32.mrb[0].mxu0
        %v1015 = vadd.f32 0.0, %v1014
        %v1016 = vpop.f32.mrb[0].mxu0
        %1017 = vmatprep.mubr.bf16.mxu0 0
        %1018 = vmatmul.mubr.bf16.gmra.mrb[0].mxu0 %v398
        %v1019 = vpop.f32.mrb[0].mxu0
        %v1020 = vadd.f32 0.0, %v1019
        %v1021 = vpop.f32.mrb[0].mxu0
        %v1022 = vpop.f32.mrb[0].mxu0
        %v1023 = vadd.f32 0.0, %v1022
        %v1024 = vpop.f32.mrb[0].mxu0
        %1025 = vmatprep.mubr.bf16.mxu0 0
        %1026 = vmatmul.mubr.bf16.gmra.mrb[0].mxu0 %v399
        %v1027 = vpop.f32.mrb[0].mxu0
        %v1028 = vadd.f32 0.0, %v1027
        %v1029 = vpop.f32.mrb[0].mxu0
        %v1030 = vpop.f32.mrb[0].mxu0
        %v1031 = vadd.f32 0.0, %v1030
        %v1032 = vpop.f32.mrb[0].mxu0
        %1033 = vdwg.mxu0
        %v1034 = vadd.f32 %v587, 0.0
        %v1035 = vadd.f32 %v591, 0.0
        %v1036 = vadd.f32 %v600, 0.0
        %v1037 = vadd.f32 %v606, 0.0
        %v1038 = vadd.f32 %v615, 0.0
        %v1039 = vadd.f32 %v619, 0.0
        %v1040 = vadd.f32 %v628, 0.0
        %v1041 = vadd.f32 %v634, 0.0
        %v1042 = vadd.f32 %v643, 0.0
        %v1043 = vadd.f32 %v647, 0.0
        %v1044 = vadd.f32 %v656, 0.0
        %v1045 = vadd.f32 %v662, 0.0
        %v1046 = vadd.f32 %v671, 0.0
        %v1047 = vadd.f32 %v675, 0.0
        %v1048 = vadd.f32 %v684, 0.0
        %v1049 = vadd.f32 %v690, 0.0
        %v1050 = vadd.f32 %v699, 0.0
        %v1051 = vadd.f32 %v703, 0.0
        %v1052 = vadd.f32 %v712, 0.0
        %v1053 = vadd.f32 %v718, 0.0
        %v1054 = vadd.f32 %v727, 0.0
        %v1055 = vadd.f32 %v731, 0.0
        %v1056 = vadd.f32 %v740, 0.0
        %v1057 = vadd.f32 %v746, 0.0
        %v1058 = vadd.f32 %v755, 0.0
        %v1059 = vadd.f32 %v759, 0.0
        %v1060 = vadd.f32 %v768, 0.0
        %v1061 = vadd.f32 %v774, 0.0
        %v1062 = vadd.f32 %v783, 0.0
        %v1063 = vadd.f32 %v787, 0.0
        %v1064 = vadd.f32 %v796, 0.0
        %v1065 = vadd.f32 %v802, 0.0
        %vm1114 = vcmask 1046528
        %v1115 = vrot.slane %v589, 1
        %v1116 = vrot.slane %v593, 1
        %v1117 = vsel %vm1114, %v1115, %v1116
        %v1118 = vrot.slane %v598, 1
        %v1119 = vsel %vm1114, %v1116, %v1118
        %v1120 = vrot.slane %v602, 1
        %v1121 = vrot.slane %v608, 1
        %v1122 = vsel %vm1114, %v1120, %v1121
        %v1123 = vrot.slane %v611, 1
        %v1124 = vsel %vm1114, %v1121, %v1123
        %v1125 = vrot.slane %v617, 1
        %v1126 = vrot.slane %v621, 1
        %v1127 = vsel %vm1114, %v1125, %v1126
        %v1128 = vrot.slane %v626, 1
        %v1129 = vsel %vm1114, %v1126, %v1128
        %v1130 = vrot.slane %v630, 1
        %v1131 = vrot.slane %v636, 1
        %v1132 = vsel %vm1114, %v1130, %v1131
        %v1133 = vrot.slane %v639, 1
        %v1134 = vsel %vm1114, %v1131, %v1133
        %v1135 = vrot.slane %v645, 1
        %v1136 = vrot.slane %v649, 1
        %v1137 = vsel %vm1114, %v1135, %v1136
        %v1138 = vrot.slane %v654, 1
        %v1139 = vsel %vm1114, %v1136, %v1138
        %v1140 = vrot.slane %v658, 1
        %v1141 = vrot.slane %v664, 1
        %v1142 = vsel %vm1114, %v1140, %v1141
        %v1143 = vrot.slane %v667, 1
        %v1144 = vsel %vm1114, %v1141, %v1143
        %v1145 = vrot.slane %v673, 1
        %v1146 = vrot.slane %v677, 1
        %v1147 = vsel %vm1114, %v1145, %v1146
        %v1148 = vrot.slane %v682, 1
        %v1149 = vsel %vm1114, %v1146, %v1148
        %v1150 = vrot.slane %v686, 1
        %v1151 = vrot.slane %v692, 1
        %v1152 = vsel %vm1114, %v1150, %v1151
        %v1153 = vrot.slane %v695, 1
        %v1154 = vsel %vm1114, %v1151, %v1153
        %v1155 = vrot.slane %v701, 1
        %v1156 = vrot.slane %v705, 1
        %v1157 = vsel %vm1114, %v1155, %v1156
        %v1158 = vrot.slane %v710, 1
        %v1159 = vsel %vm1114, %v1156, %v1158
        %v1160 = vrot.slane %v714, 1
        %v1161 = vrot.slane %v720, 1
        %v1162 = vsel %vm1114, %v1160, %v1161
        %v1163 = vrot.slane %v723, 1
        %v1164 = vsel %vm1114, %v1161, %v1163
        %v1165 = vrot.slane %v729, 1
        %v1166 = vrot.slane %v733, 1
        %v1167 = vsel %vm1114, %v1165, %v1166
        %v1168 = vrot.slane %v738, 1
        %v1169 = vsel %vm1114, %v1166, %v1168
        %v1170 = vrot.slane %v742, 1
        %v1171 = vrot.slane %v748, 1
        %v1172 = vsel %vm1114, %v1170, %v1171
        %v1173 = vrot.slane %v751, 1
        %v1174 = vsel %vm1114, %v1171, %v1173
        %v1175 = vrot.slane %v757, 1
        %v1176 = vrot.slane %v761, 1
        %v1177 = vsel %vm1114, %v1175, %v1176
        %v1178 = vrot.slane %v766, 1
        %v1179 = vsel %vm1114, %v1176, %v1178
        %v1180 = vrot.slane %v770, 1
        %v1181 = vrot.slane %v776, 1
        %v1182 = vsel %vm1114, %v1180, %v1181
        %v1183 = vrot.slane %v779, 1
        %v1184 = vsel %vm1114, %v1181, %v1183
        %v1185 = vrot.slane %v785, 1
        %v1186 = vrot.slane %v789, 1
        %v1187 = vsel %vm1114, %v1185, %v1186
        %v1188 = vrot.slane %v794, 1
        %v1189 = vsel %vm1114, %v1186, %v1188
        %v1190 = vrot.slane %v798, 1
        %v1191 = vrot.slane %v804, 1
        %v1192 = vsel %vm1114, %v1190, %v1191
        %v1193 = vrot.slane %v807, 1
        %v1194 = vsel %vm1114, %v1191, %v1193
        %v1227 = vadd.f32 %v1034, %v1117
        %v1228 = vadd.f32 %v1035, %v1119
        %v1229 = vadd.f32 %v1036, %v1122
        %v1230 = vadd.f32 %v1037, %v1124
        %v1231 = vadd.f32 %v1038, %v1127
        %v1232 = vadd.f32 %v1039, %v1129
        %v1233 = vadd.f32 %v1040, %v1132
        %v1234 = vadd.f32 %v1041, %v1134
        %v1235 = vadd.f32 %v1042, %v1137
        %v1236 = vadd.f32 %v1043, %v1139
        %v1237 = vadd.f32 %v1044, %v1142
        %v1238 = vadd.f32 %v1045, %v1144
        %v1239 = vadd.f32 %v1046, %v1147
        %v1240 = vadd.f32 %v1047, %v1149
        %v1241 = vadd.f32 %v1048, %v1152
        %v1242 = vadd.f32 %v1049, %v1154
        %v1243 = vadd.f32 %v1050, %v1157
        %v1244 = vadd.f32 %v1051, %v1159
        %v1245 = vadd.f32 %v1052, %v1162
        %v1246 = vadd.f32 %v1053, %v1164
        %v1247 = vadd.f32 %v1054, %v1167
        %v1248 = vadd.f32 %v1055, %v1169
        %v1249 = vadd.f32 %v1056, %v1172
        %v1250 = vadd.f32 %v1057, %v1174
        %v1251 = vadd.f32 %v1058, %v1177
        %v1252 = vadd.f32 %v1059, %v1179
        %v1253 = vadd.f32 %v1060, %v1182
        %v1254 = vadd.f32 %v1061, %v1184
        %v1255 = vadd.f32 %v1062, %v1187
        %v1256 = vadd.f32 %v1063, %v1189
        %v1257 = vadd.f32 %v1064, %v1192
        %v1258 = vadd.f32 %v1065, %v1194
        %vm1307 = vcmask 1045504
        %v1308 = vrot.slane %v844, 2
        %v1309 = vrot.slane %v847, 2
        %v1310 = vsel %vm1307, %v1308, %v1309
        %v1311 = vrot.slane %v852, 2
        %v1312 = vsel %vm1307, %v1309, %v1311
        %v1313 = vrot.slane %v855, 2
        %v1314 = vrot.slane %v860, 2
        %v1315 = vsel %vm1307, %v1313, %v1314
        %v1316 = vrot.slane %v863, 2
        %v1317 = vsel %vm1307, %v1314, %v1316
        %v1318 = vrot.slane %v868, 2
        %v1319 = vrot.slane %v871, 2
        %v1320 = vsel %vm1307, %v1318, %v1319
        %v1321 = vrot.slane %v876, 2
        %v1322 = vsel %vm1307, %v1319, %v1321
        %v1323 = vrot.slane %v879, 2
        %v1324 = vrot.slane %v884, 2
        %v1325 = vsel %vm1307, %v1323, %v1324
        %v1326 = vrot.slane %v887, 2
        %v1327 = vsel %vm1307, %v1324, %v1326
        %v1328 = vrot.slane %v892, 2
        %v1329 = vrot.slane %v895, 2
        %v1330 = vsel %vm1307, %v1328, %v1329
        %v1331 = vrot.slane %v900, 2
        %v1332 = vsel %vm1307, %v1329, %v1331
        %v1333 = vrot.slane %v903, 2
        %v1334 = vrot.slane %v908, 2
        %v1335 = vsel %vm1307, %v1333, %v1334
        %v1336 = vrot.slane %v911, 2
        %v1337 = vsel %vm1307, %v1334, %v1336
        %v1338 = vrot.slane %v916, 2
        %v1339 = vrot.slane %v919, 2
        %v1340 = vsel %vm1307, %v1338, %v1339
        %v1341 = vrot.slane %v924, 2
        %v1342 = vsel %vm1307, %v1339, %v1341
        %v1343 = vrot.slane %v927, 2
        %v1344 = vrot.slane %v932, 2
        %v1345 = vsel %vm1307, %v1343, %v1344
        %v1346 = vrot.slane %v935, 2
        %v1347 = vsel %vm1307, %v1344, %v1346
        %v1348 = vrot.slane %v940, 2
        %v1349 = vrot.slane %v943, 2
        %v1350 = vsel %vm1307, %v1348, %v1349
        %v1351 = vrot.slane %v948, 2
        %v1352 = vsel %vm1307, %v1349, %v1351
        %v1353 = vrot.slane %v951, 2
        %v1354 = vrot.slane %v956, 2
        %v1355 = vsel %vm1307, %v1353, %v1354
        %v1356 = vrot.slane %v959, 2
        %v1357 = vsel %vm1307, %v1354, %v1356
        %v1358 = vrot.slane %v964, 2
        %v1359 = vrot.slane %v967, 2
        %v1360 = vsel %vm1307, %v1358, %v1359
        %v1361 = vrot.slane %v972, 2
        %v1362 = vsel %vm1307, %v1359, %v1361
        %v1363 = vrot.slane %v975, 2
        %v1364 = vrot.slane %v980, 2
        %v1365 = vsel %vm1307, %v1363, %v1364
        %v1366 = vrot.slane %v983, 2
        %v1367 = vsel %vm1307, %v1364, %v1366
        %v1368 = vrot.slane %v988, 2
        %v1369 = vrot.slane %v991, 2
        %v1370 = vsel %vm1307, %v1368, %v1369
        %v1371 = vrot.slane %v996, 2
        %v1372 = vsel %vm1307, %v1369, %v1371
        %v1373 = vrot.slane %v999, 2
        %v1374 = vrot.slane %v1004, 2
        %v1375 = vsel %vm1307, %v1373, %v1374
        %v1376 = vrot.slane %v1007, 2
        %v1377 = vsel %vm1307, %v1374, %v1376
        %v1378 = vrot.slane %v1012, 2
        %v1379 = vrot.slane %v1015, 2
        %v1380 = vsel %vm1307, %v1378, %v1379
        %v1381 = vrot.slane %v1020, 2
        %v1382 = vsel %vm1307, %v1379, %v1381
        %v1383 = vrot.slane %v1023, 2
        %v1384 = vrot.slane %v1028, 2
        %v1385 = vsel %vm1307, %v1383, %v1384
        %v1386 = vrot.slane %v1031, 2
        %v1387 = vsel %vm1307, %v1384, %v1386
        %v1420 = vadd.f32 %v1227, %v1310
        %v1421 = vadd.f32 %v1228, %v1312
        %v1422 = vadd.f32 %v1229, %v1315
        %v1423 = vadd.f32 %v1230, %v1317
        %v1424 = vadd.f32 %v1231, %v1320
        %v1425 = vadd.f32 %v1232, %v1322
        %v1426 = vadd.f32 %v1233, %v1325
        %v1427 = vadd.f32 %v1234, %v1327
        %v1428 = vadd.f32 %v1235, %v1330
        %v1429 = vadd.f32 %v1236, %v1332
        %v1430 = vadd.f32 %v1237, %v1335
        %v1431 = vadd.f32 %v1238, %v1337
        %v1432 = vadd.f32 %v1239, %v1340
        %v1433 = vadd.f32 %v1240, %v1342
        %v1434 = vadd.f32 %v1241, %v1345
        %v1435 = vadd.f32 %v1242, %v1347
        %v1436 = vadd.f32 %v1243, %v1350
        %v1437 = vadd.f32 %v1244, %v1352
        %v1438 = vadd.f32 %v1245, %v1355
        %v1439 = vadd.f32 %v1246, %v1357
        %v1440 = vadd.f32 %v1247, %v1360
        %v1441 = vadd.f32 %v1248, %v1362
        %v1442 = vadd.f32 %v1249, %v1365
        %v1443 = vadd.f32 %v1250, %v1367
        %v1444 = vadd.f32 %v1251, %v1370
        %v1445 = vadd.f32 %v1252, %v1372
        %v1446 = vadd.f32 %v1253, %v1375
        %v1447 = vadd.f32 %v1254, %v1377
        %v1448 = vadd.f32 %v1255, %v1380
        %v1449 = vadd.f32 %v1256, %v1382
        %v1450 = vadd.f32 %v1257, %v1385
        %v1451 = vadd.f32 %v1258, %v1387
        %s1452 = sadd.s32 %s190, 1
        %s1453 = smul.u32 %s1452, 3
        %s1454 = smul.addr %s1453, 4
        %s1455 = scalar_lea.vmem %s164, %s1454 [#allocation4]
        %v1456 = vld [vmem:[%s1455] sm:$0xf]
        %v1457 = vld [vmem:[%s1455 + $0x4] sm:$0xf]
        %v1458 = vld [vmem:[%s1455 + $0x8] sm:$0xf]
        %v1459 = vld [vmem:[%s1455 + $0xc] sm:$0xf]
        %v1460 = vld [vmem:[%s1455 + $0x10] sm:$0xf]
        %v1461 = vld [vmem:[%s1455 + $0x14] sm:$0xf]
        %v1462 = vld [vmem:[%s1455 + $0x18] sm:$0xf]
        %v1463 = vld [vmem:[%s1455 + $0x1c] sm:$0xf]
        %v1464 = vld [vmem:[%s1455 + $0x20] sm:$0xf]
        %v1465 = vld [vmem:[%s1455 + $0x24] sm:$0xf]
        %v1466 = vld [vmem:[%s1455 + $0x28] sm:$0xf]
        %v1467 = vld [vmem:[%s1455 + $0x2c] sm:$0xf]
        %v1468 = vld [vmem:[%s1455 + $0x30] sm:$0xf]
        %v1469 = vld [vmem:[%s1455 + $0x34] sm:$0xf]
        %v1470 = vld [vmem:[%s1455 + $0x38] sm:$0xf]
        %v1471 = vld [vmem:[%s1455 + $0x3c] sm:$0xf]
        %v1472 = vld [vmem:[%s1455 + $0x40] sm:$0xf]
        %v1473 = vld [vmem:[%s1455 + $0x44] sm:$0xf]
        %v1474 = vld [vmem:[%s1455 + $0x48] sm:$0xf]
        %v1475 = vld [vmem:[%s1455 + $0x4c] sm:$0xf]
        %v1476 = vld [vmem:[%s1455 + $0x50] sm:$0xf]
        %v1477 = vld [vmem:[%s1455 + $0x54] sm:$0xf]
        %v1478 = vld [vmem:[%s1455 + $0x58] sm:$0xf]
        %v1479 = vld [vmem:[%s1455 + $0x5c] sm:$0xf]
        %v1480 = vld [vmem:[%s1455 + $0x60] sm:$0xf]
        %v1481 = vld [vmem:[%s1455 + $0x64] sm:$0xf]
        %v1482 = vld [vmem:[%s1455 + $0x68] sm:$0xf]
        %v1483 = vld [vmem:[%s1455 + $0x6c] sm:$0xf]
        %v1484 = vld [vmem:[%s1455 + $0x70] sm:$0xf]
        %v1485 = vld [vmem:[%s1455 + $0x74] sm:$0xf]
        %v1486 = vld [vmem:[%s1455 + $0x78] sm:$0xf]
        %v1487 = vld [vmem:[%s1455 + $0x7c] sm:$0xf]
        %v1488 = vld [vmem:[%s1455 + $0x80] sm:$0xf]
        %v1489 = vld [vmem:[%s1455 + $0x84] sm:$0xf]
        %v1490 = vld [vmem:[%s1455 + $0x88] sm:$0xf]
        %v1491 = vld [vmem:[%s1455 + $0x8c] sm:$0xf]
        %v1492 = vld [vmem:[%s1455 + $0x90] sm:$0xf]
        %v1493 = vld [vmem:[%s1455 + $0x94] sm:$0xf]
        %v1494 = vld [vmem:[%s1455 + $0x98] sm:$0xf]
        %v1495 = vld [vmem:[%s1455 + $0x9c] sm:$0xf]
        %v1496 = vld [vmem:[%s1455 + $0xa0] sm:$0xf]
        %v1497 = vld [vmem:[%s1455 + $0xa4] sm:$0xf]
        %v1498 = vld [vmem:[%s1455 + $0xa8] sm:$0xf]
        %v1499 = vld [vmem:[%s1455 + $0xac] sm:$0xf]
        %v1500 = vld [vmem:[%s1455 + $0xb0] sm:$0xf]
        %v1501 = vld [vmem:[%s1455 + $0xb4] sm:$0xf]
        %v1502 = vld [vmem:[%s1455 + $0xb8] sm:$0xf]
        %v1503 = vld [vmem:[%s1455 + $0xbc] sm:$0xf]
        %s1504 = scalar_lea.vmem [#allocation7], 192
        %v1505 = vld [vmem:[%s1504] sm:$0xff]
        %v1506 = vld [vmem:[%s1504 + $0x8] sm:$0xf]
        %v1507 = vld [vmem:[%s1504 + $0xc] sm:$0xff]
        %v1508 = vld [vmem:[%s1504 + $0x14] sm:$0xf]
        %v1509 = vld [vmem:[%s1504 + $0x18] sm:$0xff]
        %v1510 = vld [vmem:[%s1504 + $0x20] sm:$0xf]
        %v1511 = vld [vmem:[%s1504 + $0x24] sm:$0xff]
        %v1512 = vld [vmem:[%s1504 + $0x2c] sm:$0xf]
        %v1513 = vld [vmem:[%s1504 + $0x30] sm:$0xff]
        %v1514 = vld [vmem:[%s1504 + $0x38] sm:$0xf]
        %v1515 = vld [vmem:[%s1504 + $0x3c] sm:$0xff]
        %v1516 = vld [vmem:[%s1504 + $0x44] sm:$0xf]
        %v1517 = vld [vmem:[%s1504 + $0x48] sm:$0xff]
        %v1518 = vld [vmem:[%s1504 + $0x50] sm:$0xf]
        %v1519 = vld [vmem:[%s1504 + $0x54] sm:$0xff]
        %v1520 = vld [vmem:[%s1504 + $0x5c] sm:$0xf]
        %v1521 = vld [vmem:[%s1504 + $0x60] sm:$0xff]
        %v1522 = vld [vmem:[%s1504 + $0x68] sm:$0xf]
        %v1523 = vld [vmem:[%s1504 + $0x6c] sm:$0xff]
        %v1524 = vld [vmem:[%s1504 + $0x74] sm:$0xf]
        %v1525 = vld [vmem:[%s1504 + $0x78] sm:$0xff]
        %v1526 = vld [vmem:[%s1504 + $0x80] sm:$0xf]
        %v1527 = vld [vmem:[%s1504 + $0x84] sm:$0xff]
        %v1528 = vld [vmem:[%s1504 + $0x8c] sm:$0xf]
        %v1529 = vld [vmem:[%s1504 + $0x90] sm:$0xff]
        %v1530 = vld [vmem:[%s1504 + $0x98] sm:$0xf]
        %v1531 = vld [vmem:[%s1504 + $0x9c] sm:$0xff]
        %v1532 = vld [vmem:[%s1504 + $0xa4] sm:$0xf]
        %v1533 = vld [vmem:[%s1504 + $0xa8] sm:$0xff]
        %v1534 = vld [vmem:[%s1504 + $0xb0] sm:$0xf]
        %v1535 = vld [vmem:[%s1504 + $0xb4] sm:$0xff]
        %v1536 = vld [vmem:[%s1504 + $0xbc] sm:$0xf]
        %v1585 = vunpack.c.l.b16 %v1456
        %v1586 = vunpack.c.l.b16 %v1457
        %v1587 = vunpack.c.l.b16 %v1458
        %v1588 = vunpack.c.l.b16 %v1459
        %v1589 = vunpack.c.l.b16 %v1460
        %v1590 = vunpack.c.l.b16 %v1461
        %v1591 = vunpack.c.l.b16 %v1462
        %v1592 = vunpack.c.l.b16 %v1463
        %v1593 = vunpack.c.l.b16 %v1464
        %v1594 = vunpack.c.l.b16 %v1465
        %v1595 = vunpack.c.l.b16 %v1466
        %v1596 = vunpack.c.l.b16 %v1467
        %v1597 = vunpack.c.l.b16 %v1468
        %v1598 = vunpack.c.l.b16 %v1469
        %v1599 = vunpack.c.l.b16 %v1470
        %v1600 = vunpack.c.l.b16 %v1471
        %v1601 = vunpack.c.l.b16 %v1472
        %v1602 = vunpack.c.l.b16 %v1473
        %v1603 = vunpack.c.l.b16 %v1474
        %v1604 = vunpack.c.l.b16 %v1475
        %v1605 = vunpack.c.l.b16 %v1476
        %v1606 = vunpack.c.l.b16 %v1477
        %v1607 = vunpack.c.l.b16 %v1478
        %v1608 = vunpack.c.l.b16 %v1479
        %v1609 = vunpack.c.l.b16 %v1480
        %v1610 = vunpack.c.l.b16 %v1481
        %v1611 = vunpack.c.l.b16 %v1482
        %v1612 = vunpack.c.l.b16 %v1483
        %v1613 = vunpack.c.l.b16 %v1484
        %v1614 = vunpack.c.l.b16 %v1485
        %v1615 = vunpack.c.l.b16 %v1486
        %v1616 = vunpack.c.l.b16 %v1487
        %v1617 = vunpack.c.l.b16 %v1488
        %v1618 = vunpack.c.l.b16 %v1489
        %v1619 = vunpack.c.l.b16 %v1490
        %v1620 = vunpack.c.l.b16 %v1491
        %v1621 = vunpack.c.l.b16 %v1492
        %v1622 = vunpack.c.l.b16 %v1493
        %v1623 = vunpack.c.l.b16 %v1494
        %v1624 = vunpack.c.l.b16 %v1495
        %v1625 = vunpack.c.l.b16 %v1496
        %v1626 = vunpack.c.l.b16 %v1497
        %v1627 = vunpack.c.l.b16 %v1498
        %v1628 = vunpack.c.l.b16 %v1499
        %v1629 = vunpack.c.l.b16 %v1500
        %v1630 = vunpack.c.l.b16 %v1501
        %v1631 = vunpack.c.l.b16 %v1502
        %v1632 = vunpack.c.l.b16 %v1503
        %v1633 = vpack.c.b16 %v1586, %v1585
        %v1634 = vpack.c.b16 %v1588, %v1587
        %v1635 = vpack.c.b16 %v1590, %v1589
        %v1636 = vpack.c.b16 %v1592, %v1591
        %v1637 = vpack.c.b16 %v1594, %v1593
        %v1638 = vpack.c.b16 %v1596, %v1595
        %v1639 = vpack.c.b16 %v1598, %v1597
        %v1640 = vpack.c.b16 %v1600, %v1599
        %v1641 = vpack.c.b16 %v1602, %v1601
        %v1642 = vpack.c.b16 %v1604, %v1603
        %v1643 = vpack.c.b16 %v1606, %v1605
        %v1644 = vpack.c.b16 %v1608, %v1607
        %v1645 = vpack.c.b16 %v1610, %v1609
        %v1646 = vpack.c.b16 %v1612, %v1611
        %v1647 = vpack.c.b16 %v1614, %v1613
        %v1648 = vpack.c.b16 %v1616, %v1615
        %v1649 = vpack.c.b16 %v1618, %v1617
        %v1650 = vpack.c.b16 %v1620, %v1619
        %v1651 = vpack.c.b16 %v1622, %v1621
        %v1652 = vpack.c.b16 %v1624, %v1623
        %v1653 = vpack.c.b16 %v1626, %v1625
        %v1654 = vpack.c.b16 %v1628, %v1627
        %v1655 = vpack.c.b16 %v1630, %v1629
        %v1656 = vpack.c.b16 %v1632, %v1631
        %v1713 = vunpack.c.l.b16 %v1505
        %v1714 = vunpack.c.h.b16 %v1505
        %v1715 = vunpack.c.l.b16 %v1506
        %v1716 = vunpack.c.l.b16 %v1507
        %v1717 = vunpack.c.h.b16 %v1507
        %v1718 = vunpack.c.l.b16 %v1508
        %v1719 = vunpack.c.l.b16 %v1509
        %v1720 = vunpack.c.h.b16 %v1509
        %v1721 = vunpack.c.l.b16 %v1510
        %v1722 = vunpack.c.l.b16 %v1511
        %v1723 = vunpack.c.h.b16 %v1511
        %v1724 = vunpack.c.l.b16 %v1512
        %v1725 = vunpack.c.l.b16 %v1513
        %v1726 = vunpack.c.h.b16 %v1513
        %v1727 = vunpack.c.l.b16 %v1514
        %v1728 = vunpack.c.l.b16 %v1515
        %v1729 = vunpack.c.h.b16 %v1515
        %v1730 = vunpack.c.l.b16 %v1516
        %v1731 = vunpack.c.l.b16 %v1517
        %v1732 = vunpack.c.h.b16 %v1517
        %v1733 = vunpack.c.l.b16 %v1518
        %v1734 = vunpack.c.l.b16 %v1519
        %v1735 = vunpack.c.h.b16 %v1519
        %v1736 = vunpack.c.l.b16 %v1520
        %v1737 = vunpack.c.l.b16 %v1521
        %v1738 = vunpack.c.h.b16 %v1521
        %v1739 = vunpack.c.l.b16 %v1522
        %v1740 = vunpack.c.l.b16 %v1523
        %v1741 = vunpack.c.h.b16 %v1523
        %v1742 = vunpack.c.l.b16 %v1524
        %v1743 = vunpack.c.l.b16 %v1525
        %v1744 = vunpack.c.h.b16 %v1525
        %v1745 = vunpack.c.l.b16 %v1526
        %v1746 = vunpack.c.l.b16 %v1527
        %v1747 = vunpack.c.h.b16 %v1527
        %v1748 = vunpack.c.l.b16 %v1528
        %v1749 = vunpack.c.l.b16 %v1529
        %v1750 = vunpack.c.h.b16 %v1529
        %v1751 = vunpack.c.l.b16 %v1530
        %v1752 = vunpack.c.l.b16 %v1531
        %v1753 = vunpack.c.h.b16 %v1531
        %v1754 = vunpack.c.l.b16 %v1532
        %v1755 = vunpack.c.l.b16 %v1533
        %v1756 = vunpack.c.h.b16 %v1533
        %v1757 = vunpack.c.l.b16 %v1534
        %v1758 = vunpack.c.l.b16 %v1535
        %v1759 = vunpack.c.h.b16 %v1535
        %v1760 = vunpack.c.l.b16 %v1536
        %v1761 = vpack.c.b16 %v1716, %v1713
        %v1762 = vpack.c.b16 %v1717, %v1714
        %v1763 = vpack.c.b16 %v1718, %v1715
        %v1764 = vpack.c.b16 %v1722, %v1719
        %v1765 = vpack.c.b16 %v1723, %v1720
        %v1766 = vpack.c.b16 %v1724, %v1721
        %v1767 = vpack.c.b16 %v1728, %v1725
        %v1768 = vpack.c.b16 %v1729, %v1726
        %v1769 = vpack.c.b16 %v1730, %v1727
        %v1770 = vpack.c.b16 %v1734, %v1731
        %v1771 = vpack.c.b16 %v1735, %v1732
        %v1772 = vpack.c.b16 %v1736, %v1733
        %v1773 = vpack.c.b16 %v1740, %v1737
        %v1774 = vpack.c.b16 %v1741, %v1738
        %v1775 = vpack.c.b16 %v1742, %v1739
        %v1776 = vpack.c.b16 %v1746, %v1743
        %v1777 = vpack.c.b16 %v1747, %v1744
        %v1778 = vpack.c.b16 %v1748, %v1745
        %v1779 = vpack.c.b16 %v1752, %v1749
        %v1780 = vpack.c.b16 %v1753, %v1750
        %v1781 = vpack.c.b16 %v1754, %v1751
        %v1782 = vpack.c.b16 %v1758, %v1755
        %v1783 = vpack.c.b16 %v1759, %v1756
        %v1784 = vpack.c.b16 %v1760, %v1757
        %1809 = vmatprep.subr.bf16.mxu0 %v1762
        %1810 = vmatpush1.bf16.msra.mxu0 %v1761
        %1811 = vmatprep.subr.bf16.mxu0 %v1765
        %1812 = vmatpush1.bf16.msra.mxu0 %v1764
        %1813 = vmatprep.subr.bf16.mxu0 %v1768
        %1814 = vmatpush1.bf16.msra.mxu0 %v1767
        %1815 = vmatprep.subr.bf16.mxu0 %v1771
        %1816 = vmatpush1.bf16.msra.mxu0 %v1770
        %1817 = vmatprep.subr.bf16.mxu0 %v1774
        %1818 = vmatpush1.bf16.msra.mxu0 %v1773
        %1819 = vmatprep.subr.bf16.mxu0 %v1777
        %1820 = vmatpush1.bf16.msra.mxu0 %v1776
        %1821 = vmatprep.subr.bf16.mxu0 %v1780
        %1822 = vmatpush1.bf16.msra.mxu0 %v1779
        %1823 = vmatprep.subr.bf16.mxu0 %v1783
        %1824 = vmatpush1.bf16.msra.mxu0 %v1782
        %1825 = vmatprep.subr.bf16.mxu0 0
        %1826 = vmatpush1.bf16.msra.mxu0 0
        %1827 = vmatprep.subr.bf16.mxu0 0
        %1828 = vmatpush1.bf16.msra.mxu0 0
        %1829 = vmatprep.subr.bf16.mxu0 0
        %1830 = vmatpush1.bf16.msra.mxu0 0
        %1831 = vmatprep.subr.bf16.mxu0 0
        %1832 = vmatpush1.bf16.msra.mxu0 0
        %1833 = vmatprep.subr.bf16.mxu0 0
        %1834 = vmatpush1.bf16.msra.mxu0 0
        %1835 = vmatprep.subr.bf16.mxu0 0
        %1836 = vmatpush1.bf16.msra.mxu0 0
        %1837 = vmatprep.subr.bf16.mxu0 0
        %1838 = vmatpush1.bf16.msra.mxu0 0
        %1839 = vmatprep.subr.bf16.mxu0 0
        %1840 = vmatpush1.bf16.msra.mxu0 0
        %1841 = vmatprep.mubr.bf16.mxu0 0
        %1842 = vmatmul.mubr.bf16.gmra.mrb[0].mxu0 %v1633
        %v1843 = vpop.f32.mrb[0].mxu0
        %v1844 = vadd.f32 0.0, %v1843
        %v1845 = vpop.f32.mrb[0].mxu0
        %v1846 = vadd.f32 0.0, %v1845
        %v1847 = vpop.f32.mrb[0].mxu0
        %v1848 = vadd.f32 0.0, %v1847
        %v1849 = vpop.f32.mrb[0].mxu0
        %v1850 = vadd.f32 0.0, %v1849
        %1851 = vmatprep.mubr.bf16.mxu0 0
        %1852 = vmatmul.mubr.bf16.gmra.mrb[0].mxu0 %v1634
        %v1853 = vpop.f32.mrb[0].mxu0
        %v1854 = vpop.f32.mrb[0].mxu0
        %v1855 = vadd.f32 0.0, %v1854
        %v1856 = vpop.f32.mrb[0].mxu0
        %v1857 = vadd.f32 0.0, %v1856
        %v1858 = vpop.f32.mrb[0].mxu0
        %v1859 = vadd.f32 0.0, %v1858
        %1860 = vmatprep.mubr.bf16.mxu0 0
        %1861 = vmatmul.mubr.bf16.gmra.mrb[0].mxu0 %v1635
        %v1862 = vpop.f32.mrb[0].mxu0
        %v1863 = vadd.f32 0.0, %v1862
        %v1864 = vpop.f32.mrb[0].mxu0
        %v1865 = vadd.f32 0.0, %v1864
        %v1866 = vpop.f32.mrb[0].mxu0
        %v1867 = vpop.f32.mrb[0].mxu0
        %v1868 = vadd.f32 0.0, %v1867
        %1869 = vmatprep.mubr.bf16.mxu0 0
        %1870 = vmatmul.mubr.bf16.gmra.mrb[0].mxu0 %v1636
        %v1871 = vpop.f32.mrb[0].mxu0
        %v1872 = vadd.f32 0.0, %v1871
        %v1873 = vpop.f32.mrb[0].mxu0
        %v1874 = vadd.f32 0.0, %v1873
        %v1875 = vpop.f32.mrb[0].mxu0
        %v1876 = vadd.f32 0.0, %v1875
        %v1877 = vpop.f32.mrb[0].mxu0
        %v1878 = vadd.f32 0.0, %v1877
        %1879 = vmatprep.mubr.bf16.mxu0 0
        %1880 = vmatmul.mubr.bf16.gmra.mrb[0].mxu0 %v1637
        %v1881 = vpop.f32.mrb[0].mxu0
        %v1882 = vpop.f32.mrb[0].mxu0
        %v1883 = vadd.f32 0.0, %v1882
        %v1884 = vpop.f32.mrb[0].mxu0
        %v1885 = vadd.f32 0.0, %v1884
        %v1886 = vpop.f32.mrb[0].mxu0
        %v1887 = vadd.f32 0.0, %v1886
        %1888 = vmatprep.mubr.bf16.mxu0 0
        %1889 = vmatmul.mubr.bf16.gmra.mrb[0].mxu0 %v1638
        %v1890 = vpop.f32.mrb[0].mxu0
        %v1891 = vadd.f32 0.0, %v1890
        %v1892 = vpop.f32.mrb[0].mxu0
        %v1893 = vadd.f32 0.0, %v1892
        %v1894 = vpop.f32.mrb[0].mxu0
        %v1895 = vpop.f32.mrb[0].mxu0
        %v1896 = vadd.f32 0.0, %v1895
        %1897 = vmatprep.mubr.bf16.mxu0 0
        %1898 = vmatmul.mubr.bf16.gmra.mrb[0].mxu0 %v1639
        %v1899 = vpop.f32.mrb[0].mxu0
        %v1900 = vadd.f32 0.0, %v1899
        %v1901 = vpop.f32.mrb[0].mxu0
        %v1902 = vadd.f32 0.0, %v1901
        %v1903 = vpop.f32.mrb[0].mxu0
        %v1904 = vadd.f32 0.0, %v1903
        %v1905 = vpop.f32.mrb[0].mxu0
        %v1906 = vadd.f32 0.0, %v1905
        %1907 = vmatprep.mubr.bf16.mxu0 0
        %1908 = vmatmul.mubr.bf16.gmra.mrb[0].mxu0 %v1640
        %v1909 = vpop.f32.mrb[0].mxu0
        %v1910 = vpop.f32.mrb[0].mxu0
        %v1911 = vadd.f32 0.0, %v1910
        %v1912 = vpop.f32.mrb[0].mxu0
        %v1913 = vadd.f32 0.0, %v1912
        %v1914 = vpop.f32.mrb[0].mxu0
        %v1915 = vadd.f32 0.0, %v1914
        %1916 = vmatprep.mubr.bf16.mxu0 0
        %1917 = vmatmul.mubr.bf16.gmra.mrb[0].mxu0 %v1641
        %v1918 = vpop.f32.mrb[0].mxu0
        %v1919 = vadd.f32 0.0, %v1918
        %v1920 = vpop.f32.mrb[0].mxu0
        %v1921 = vadd.f32 0.0, %v1920
        %v1922 = vpop.f32.mrb[0].mxu0
        %v1923 = vpop.f32.mrb[0].mxu0
        %v1924 = vadd.f32 0.0, %v1923
        %1925 = vmatprep.mubr.bf16.mxu0 0
        %1926 = vmatmul.mubr.bf16.gmra.mrb[0].mxu0 %v1642
        %v1927 = vpop.f32.mrb[0].mxu0
        %v1928 = vadd.f32 0.0, %v1927
        %v1929 = vpop.f32.mrb[0].mxu0
        %v1930 = vadd.f32 0.0, %v1929
        %v1931 = vpop.f32.mrb[0].mxu0
        %v1932 = vadd.f32 0.0, %v1931
        %v1933 = vpop.f32.mrb[0].mxu0
        %v1934 = vadd.f32 0.0, %v1933
        %1935 = vmatprep.mubr.bf16.mxu0 0
        %1936 = vmatmul.mubr.bf16.gmra.mrb[0].mxu0 %v1643
        %v1937 = vpop.f32.mrb[0].mxu0
        %v1938 = vpop.f32.mrb[0].mxu0
        %v1939 = vadd.f32 0.0, %v1938
        %v1940 = vpop.f32.mrb[0].mxu0
        %v1941 = vadd.f32 0.0, %v1940
        %v1942 = vpop.f32.mrb[0].mxu0
        %v1943 = vadd.f32 0.0, %v1942
        %1944 = vmatprep.mubr.bf16.mxu0 0
        %1945 = vmatmul.mubr.bf16.gmra.mrb[0].mxu0 %v1644
        %v1946 = vpop.f32.mrb[0].mxu0
        %v1947 = vadd.f32 0.0, %v1946
        %v1948 = vpop.f32.mrb[0].mxu0
        %v1949 = vadd.f32 0.0, %v1948
        %v1950 = vpop.f32.mrb[0].mxu0
        %v1951 = vpop.f32.mrb[0].mxu0
        %v1952 = vadd.f32 0.0, %v1951
        %1953 = vmatprep.mubr.bf16.mxu0 0
        %1954 = vmatmul.mubr.bf16.gmra.mrb[0].mxu0 %v1645
        %v1955 = vpop.f32.mrb[0].mxu0
        %v1956 = vadd.f32 0.0, %v1955
        %v1957 = vpop.f32.mrb[0].mxu0
        %v1958 = vadd.f32 0.0, %v1957
        %v1959 = vpop.f32.mrb[0].mxu0
        %v1960 = vadd.f32 0.0, %v1959
        %v1961 = vpop.f32.mrb[0].mxu0
        %v1962 = vadd.f32 0.0, %v1961
        %1963 = vmatprep.mubr.bf16.mxu0 0
        %1964 = vmatmul.mubr.bf16.gmra.mrb[0].mxu0 %v1646
        %v1965 = vpop.f32.mrb[0].mxu0
        %v1966 = vpop.f32.mrb[0].mxu0
        %v1967 = vadd.f32 0.0, %v1966
        %v1968 = vpop.f32.mrb[0].mxu0
        %v1969 = vadd.f32 0.0, %v1968
        %v1970 = vpop.f32.mrb[0].mxu0
        %v1971 = vadd.f32 0.0, %v1970
        %1972 = vmatprep.mubr.bf16.mxu0 0
        %1973 = vmatmul.mubr.bf16.gmra.mrb[0].mxu0 %v1647
        %v1974 = vpop.f32.mrb[0].mxu0
        %v1975 = vadd.f32 0.0, %v1974
        %v1976 = vpop.f32.mrb[0].mxu0
        %v1977 = vadd.f32 0.0, %v1976
        %v1978 = vpop.f32.mrb[0].mxu0
        %v1979 = vpop.f32.mrb[0].mxu0
        %v1980 = vadd.f32 0.0, %v1979
        %1981 = vmatprep.mubr.bf16.mxu0 0
        %1982 = vmatmul.mubr.bf16.gmra.mrb[0].mxu0 %v1648
        %v1983 = vpop.f32.mrb[0].mxu0
        %v1984 = vadd.f32 0.0, %v1983
        %v1985 = vpop.f32.mrb[0].mxu0
        %v1986 = vadd.f32 0.0, %v1985
        %v1987 = vpop.f32.mrb[0].mxu0
        %v1988 = vadd.f32 0.0, %v1987
        %v1989 = vpop.f32.mrb[0].mxu0
        %v1990 = vadd.f32 0.0, %v1989
        %1991 = vmatprep.mubr.bf16.mxu0 0
        %1992 = vmatmul.mubr.bf16.gmra.mrb[0].mxu0 %v1649
        %v1993 = vpop.f32.mrb[0].mxu0
        %v1994 = vpop.f32.mrb[0].mxu0
        %v1995 = vadd.f32 0.0, %v1994
        %v1996 = vpop.f32.mrb[0].mxu0
        %v1997 = vadd.f32 0.0, %v1996
        %v1998 = vpop.f32.mrb[0].mxu0
        %v1999 = vadd.f32 0.0, %v1998
        %2000 = vmatprep.mubr.bf16.mxu0 0
        %2001 = vmatmul.mubr.bf16.gmra.mrb[0].mxu0 %v1650
        %v2002 = vpop.f32.mrb[0].mxu0
        %v2003 = vadd.f32 0.0, %v2002
        %v2004 = vpop.f32.mrb[0].mxu0
        %v2005 = vadd.f32 0.0, %v2004
        %v2006 = vpop.f32.mrb[0].mxu0
        %v2007 = vpop.f32.mrb[0].mxu0
        %v2008 = vadd.f32 0.0, %v2007
        %2009 = vmatprep.mubr.bf16.mxu0 0
        %2010 = vmatmul.mubr.bf16.gmra.mrb[0].mxu0 %v1651
        %v2011 = vpop.f32.mrb[0].mxu0
        %v2012 = vadd.f32 0.0, %v2011
        %v2013 = vpop.f32.mrb[0].mxu0
        %v2014 = vadd.f32 0.0, %v2013
        %v2015 = vpop.f32.mrb[0].mxu0
        %v2016 = vadd.f32 0.0, %v2015
        %v2017 = vpop.f32.mrb[0].mxu0
        %v2018 = vadd.f32 0.0, %v2017
        %2019 = vmatprep.mubr.bf16.mxu0 0
        %2020 = vmatmul.mubr.bf16.gmra.mrb[0].mxu0 %v1652
        %v2021 = vpop.f32.mrb[0].mxu0
        %v2022 = vpop.f32.mrb[0].mxu0
        %v2023 = vadd.f32 0.0, %v2022
        %v2024 = vpop.f32.mrb[0].mxu0
        %v2025 = vadd.f32 0.0, %v2024
        %v2026 = vpop.f32.mrb[0].mxu0
        %v2027 = vadd.f32 0.0, %v2026
        %2028 = vmatprep.mubr.bf16.mxu0 0
        %2029 = vmatmul.mubr.bf16.gmra.mrb[0].mxu0 %v1653
        %v2030 = vpop.f32.mrb[0].mxu0
        %v2031 = vadd.f32 0.0, %v2030
        %v2032 = vpop.f32.mrb[0].mxu0
        %v2033 = vadd.f32 0.0, %v2032
        %v2034 = vpop.f32.mrb[0].mxu0
        %v2035 = vpop.f32.mrb[0].mxu0
        %v2036 = vadd.f32 0.0, %v2035
        %2037 = vmatprep.mubr.bf16.mxu0 0
        %2038 = vmatmul.mubr.bf16.gmra.mrb[0].mxu0 %v1654
        %v2039 = vpop.f32.mrb[0].mxu0
        %v2040 = vadd.f32 0.0, %v2039
        %v2041 = vpop.f32.mrb[0].mxu0
        %v2042 = vadd.f32 0.0, %v2041
        %v2043 = vpop.f32.mrb[0].mxu0
        %v2044 = vadd.f32 0.0, %v2043
        %v2045 = vpop.f32.mrb[0].mxu0
        %v2046 = vadd.f32 0.0, %v2045
        %2047 = vmatprep.mubr.bf16.mxu0 0
        %2048 = vmatmul.mubr.bf16.gmra.mrb[0].mxu0 %v1655
        %v2049 = vpop.f32.mrb[0].mxu0
        %v2050 = vpop.f32.mrb[0].mxu0
        %v2051 = vadd.f32 0.0, %v2050
        %v2052 = vpop.f32.mrb[0].mxu0
        %v2053 = vadd.f32 0.0, %v2052
        %v2054 = vpop.f32.mrb[0].mxu0
        %v2055 = vadd.f32 0.0, %v2054
        %2056 = vmatprep.mubr.bf16.mxu0 0
        %2057 = vmatmul.mubr.bf16.gmra.mrb[0].mxu0 %v1656
        %v2058 = vpop.f32.mrb[0].mxu0
        %v2059 = vadd.f32 0.0, %v2058
        %v2060 = vpop.f32.mrb[0].mxu0
        %v2061 = vadd.f32 0.0, %v2060
        %v2062 = vpop.f32.mrb[0].mxu0
        %v2063 = vpop.f32.mrb[0].mxu0
        %v2064 = vadd.f32 0.0, %v2063
        %2065 = vdwg.mxu0
        %2066 = vmatprep.subr.bf16.mxu0 0
        %2067 = vmatpush1.bf16.msra.mxu0 %v1763
        %2068 = vmatprep.subr.bf16.mxu0 0
        %2069 = vmatpush1.bf16.msra.mxu0 %v1766
        %2070 = vmatprep.subr.bf16.mxu0 0
        %2071 = vmatpush1.bf16.msra.mxu0 %v1769
        %2072 = vmatprep.subr.bf16.mxu0 0
        %2073 = vmatpush1.bf16.msra.mxu0 %v1772
        %2074 = vmatprep.subr.bf16.mxu0 0
        %2075 = vmatpush1.bf16.msra.mxu0 %v1775
        %2076 = vmatprep.subr.bf16.mxu0 0
        %2077 = vmatpush1.bf16.msra.mxu0 %v1778
        %2078 = vmatprep.subr.bf16.mxu0 0
        %2079 = vmatpush1.bf16.msra.mxu0 %v1781
        %2080 = vmatprep.subr.bf16.mxu0 0
        %2081 = vmatpush1.bf16.msra.mxu0 %v1784
        %2082 = vmatprep.subr.bf16.mxu0 0
        %2083 = vmatpush1.bf16.msra.mxu0 0
        %2084 = vmatprep.subr.bf16.mxu0 0
        %2085 = vmatpush1.bf16.msra.mxu0 0
        %2086 = vmatprep.subr.bf16.mxu0 0
        %2087 = vmatpush1.bf16.msra.mxu0 0
        %2088 = vmatprep.subr.bf16.mxu0 0
        %2089 = vmatpush1.bf16.msra.mxu0 0
        %2090 = vmatprep.subr.bf16.mxu0 0
        %2091 = vmatpush1.bf16.msra.mxu0 0
        %2092 = vmatprep.subr.bf16.mxu0 0
        %2093 = vmatpush1.bf16.msra.mxu0 0
        %2094 = vmatprep.subr.bf16.mxu0 0
        %2095 = vmatpush1.bf16.msra.mxu0 0
        %2096 = vmatprep.subr.bf16.mxu0 0
        %2097 = vmatpush1.bf16.msra.mxu0 0
        %2098 = vmatprep.mubr.bf16.mxu0 0
        %2099 = vmatmul.mubr.bf16.gmra.mrb[0].mxu0 %v1633
        %v2100 = vpop.f32.mrb[0].mxu0
        %v2101 = vadd.f32 0.0, %v2100
        %v2102 = vpop.f32.mrb[0].mxu0
        %v2103 = vpop.f32.mrb[0].mxu0
        %v2104 = vadd.f32 0.0, %v2103
        %v2105 = vpop.f32.mrb[0].mxu0
        %2106 = vmatprep.mubr.bf16.mxu0 0
        %2107 = vmatmul.mubr.bf16.gmra.mrb[0].mxu0 %v1634
        %v2108 = vpop.f32.mrb[0].mxu0
        %v2109 = vadd.f32 0.0, %v2108
        %v2110 = vpop.f32.mrb[0].mxu0
        %v2111 = vpop.f32.mrb[0].mxu0
        %v2112 = vadd.f32 0.0, %v2111
        %v2113 = vpop.f32.mrb[0].mxu0
        %2114 = vmatprep.mubr.bf16.mxu0 0
        %2115 = vmatmul.mubr.bf16.gmra.mrb[0].mxu0 %v1635
        %v2116 = vpop.f32.mrb[0].mxu0
        %v2117 = vadd.f32 0.0, %v2116
        %v2118 = vpop.f32.mrb[0].mxu0
        %v2119 = vpop.f32.mrb[0].mxu0
        %v2120 = vadd.f32 0.0, %v2119
        %v2121 = vpop.f32.mrb[0].mxu0
        %2122 = vmatprep.mubr.bf16.mxu0 0
        %2123 = vmatmul.mubr.bf16.gmra.mrb[0].mxu0 %v1636
        %v2124 = vpop.f32.mrb[0].mxu0
        %v2125 = vadd.f32 0.0, %v2124
        %v2126 = vpop.f32.mrb[0].mxu0
        %v2127 = vpop.f32.mrb[0].mxu0
        %v2128 = vadd.f32 0.0, %v2127
        %v2129 = vpop.f32.mrb[0].mxu0
        %2130 = vmatprep.mubr.bf16.mxu0 0
        %2131 = vmatmul.mubr.bf16.gmra.mrb[0].mxu0 %v1637
        %v2132 = vpop.f32.mrb[0].mxu0
        %v2133 = vadd.f32 0.0, %v2132
        %v2134 = vpop.f32.mrb[0].mxu0
        %v2135 = vpop.f32.mrb[0].mxu0
        %v2136 = vadd.f32 0.0, %v2135
        %v2137 = vpop.f32.mrb[0].mxu0
        %2138 = vmatprep.mubr.bf16.mxu0 0
        %2139 = vmatmul.mubr.bf16.gmra.mrb[0].mxu0 %v1638
        %v2140 = vpop.f32.mrb[0].mxu0
        %v2141 = vadd.f32 0.0, %v2140
        %v2142 = vpop.f32.mrb[0].mxu0
        %v2143 = vpop.f32.mrb[0].mxu0
        %v2144 = vadd.f32 0.0, %v2143
        %v2145 = vpop.f32.mrb[0].mxu0
        %2146 = vmatprep.mubr.bf16.mxu0 0
        %2147 = vmatmul.mubr.bf16.gmra.mrb[0].mxu0 %v1639
        %v2148 = vpop.f32.mrb[0].mxu0
        %v2149 = vadd.f32 0.0, %v2148
        %v2150 = vpop.f32.mrb[0].mxu0
        %v2151 = vpop.f32.mrb[0].mxu0
        %v2152 = vadd.f32 0.0, %v2151
        %v2153 = vpop.f32.mrb[0].mxu0
        %2154 = vmatprep.mubr.bf16.mxu0 0
        %2155 = vmatmul.mubr.bf16.gmra.mrb[0].mxu0 %v1640
        %v2156 = vpop.f32.mrb[0].mxu0
        %v2157 = vadd.f32 0.0, %v2156
        %v2158 = vpop.f32.mrb[0].mxu0
        %v2159 = vpop.f32.mrb[0].mxu0
        %v2160 = vadd.f32 0.0, %v2159
        %v2161 = vpop.f32.mrb[0].mxu0
        %2162 = vmatprep.mubr.bf16.mxu0 0
        %2163 = vmatmul.mubr.bf16.gmra.mrb[0].mxu0 %v1641
        %v2164 = vpop.f32.mrb[0].mxu0
        %v2165 = vadd.f32 0.0, %v2164
        %v2166 = vpop.f32.mrb[0].mxu0
        %v2167 = vpop.f32.mrb[0].mxu0
        %v2168 = vadd.f32 0.0, %v2167
        %v2169 = vpop.f32.mrb[0].mxu0
        %2170 = vmatprep.mubr.bf16.mxu0 0
        %2171 = vmatmul.mubr.bf16.gmra.mrb[0].mxu0 %v1642
        %v2172 = vpop.f32.mrb[0].mxu0
        %v2173 = vadd.f32 0.0, %v2172
        %v2174 = vpop.f32.mrb[0].mxu0
        %v2175 = vpop.f32.mrb[0].mxu0
        %v2176 = vadd.f32 0.0, %v2175
        %v2177 = vpop.f32.mrb[0].mxu0
        %2178 = vmatprep.mubr.bf16.mxu0 0
        %2179 = vmatmul.mubr.bf16.gmra.mrb[0].mxu0 %v1643
        %v2180 = vpop.f32.mrb[0].mxu0
        %v2181 = vadd.f32 0.0, %v2180
        %v2182 = vpop.f32.mrb[0].mxu0
        %v2183 = vpop.f32.mrb[0].mxu0
        %v2184 = vadd.f32 0.0, %v2183
        %v2185 = vpop.f32.mrb[0].mxu0
        %2186 = vmatprep.mubr.bf16.mxu0 0
        %2187 = vmatmul.mubr.bf16.gmra.mrb[0].mxu0 %v1644
        %v2188 = vpop.f32.mrb[0].mxu0
        %v2189 = vadd.f32 0.0, %v2188
        %v2190 = vpop.f32.mrb[0].mxu0
        %v2191 = vpop.f32.mrb[0].mxu0
        %v2192 = vadd.f32 0.0, %v2191
        %v2193 = vpop.f32.mrb[0].mxu0
        %2194 = vmatprep.mubr.bf16.mxu0 0
        %2195 = vmatmul.mubr.bf16.gmra.mrb[0].mxu0 %v1645
        %v2196 = vpop.f32.mrb[0].mxu0
        %v2197 = vadd.f32 0.0, %v2196
        %v2198 = vpop.f32.mrb[0].mxu0
        %v2199 = vpop.f32.mrb[0].mxu0
        %v2200 = vadd.f32 0.0, %v2199
        %v2201 = vpop.f32.mrb[0].mxu0
        %2202 = vmatprep.mubr.bf16.mxu0 0
        %2203 = vmatmul.mubr.bf16.gmra.mrb[0].mxu0 %v1646
        %v2204 = vpop.f32.mrb[0].mxu0
        %v2205 = vadd.f32 0.0, %v2204
        %v2206 = vpop.f32.mrb[0].mxu0
        %v2207 = vpop.f32.mrb[0].mxu0
        %v2208 = vadd.f32 0.0, %v2207
        %v2209 = vpop.f32.mrb[0].mxu0
        %2210 = vmatprep.mubr.bf16.mxu0 0
        %2211 = vmatmul.mubr.bf16.gmra.mrb[0].mxu0 %v1647
        %v2212 = vpop.f32.mrb[0].mxu0
        %v2213 = vadd.f32 0.0, %v2212
        %v2214 = vpop.f32.mrb[0].mxu0
        %v2215 = vpop.f32.mrb[0].mxu0
        %v2216 = vadd.f32 0.0, %v2215
        %v2217 = vpop.f32.mrb[0].mxu0
        %2218 = vmatprep.mubr.bf16.mxu0 0
        %2219 = vmatmul.mubr.bf16.gmra.mrb[0].mxu0 %v1648
        %v2220 = vpop.f32.mrb[0].mxu0
        %v2221 = vadd.f32 0.0, %v2220
        %v2222 = vpop.f32.mrb[0].mxu0
        %v2223 = vpop.f32.mrb[0].mxu0
        %v2224 = vadd.f32 0.0, %v2223
        %v2225 = vpop.f32.mrb[0].mxu0
        %2226 = vmatprep.mubr.bf16.mxu0 0
        %2227 = vmatmul.mubr.bf16.gmra.mrb[0].mxu0 %v1649
        %v2228 = vpop.f32.mrb[0].mxu0
        %v2229 = vadd.f32 0.0, %v2228
        %v2230 = vpop.f32.mrb[0].mxu0
        %v2231 = vpop.f32.mrb[0].mxu0
        %v2232 = vadd.f32 0.0, %v2231
        %v2233 = vpop.f32.mrb[0].mxu0
        %2234 = vmatprep.mubr.bf16.mxu0 0
        %2235 = vmatmul.mubr.bf16.gmra.mrb[0].mxu0 %v1650
        %v2236 = vpop.f32.mrb[0].mxu0
        %v2237 = vadd.f32 0.0, %v2236
        %v2238 = vpop.f32.mrb[0].mxu0
        %v2239 = vpop.f32.mrb[0].mxu0
        %v2240 = vadd.f32 0.0, %v2239
        %v2241 = vpop.f32.mrb[0].mxu0
        %2242 = vmatprep.mubr.bf16.mxu0 0
        %2243 = vmatmul.mubr.bf16.gmra.mrb[0].mxu0 %v1651
        %v2244 = vpop.f32.mrb[0].mxu0
        %v2245 = vadd.f32 0.0, %v2244
        %v2246 = vpop.f32.mrb[0].mxu0
        %v2247 = vpop.f32.mrb[0].mxu0
        %v2248 = vadd.f32 0.0, %v2247
        %v2249 = vpop.f32.mrb[0].mxu0
        %2250 = vmatprep.mubr.bf16.mxu0 0
        %2251 = vmatmul.mubr.bf16.gmra.mrb[0].mxu0 %v1652
        %v2252 = vpop.f32.mrb[0].mxu0
        %v2253 = vadd.f32 0.0, %v2252
        %v2254 = vpop.f32.mrb[0].mxu0
        %v2255 = vpop.f32.mrb[0].mxu0
        %v2256 = vadd.f32 0.0, %v2255
        %v2257 = vpop.f32.mrb[0].mxu0
        %2258 = vmatprep.mubr.bf16.mxu0 0
        %2259 = vmatmul.mubr.bf16.gmra.mrb[0].mxu0 %v1653
        %v2260 = vpop.f32.mrb[0].mxu0
        %v2261 = vadd.f32 0.0, %v2260
        %v2262 = vpop.f32.mrb[0].mxu0
        %v2263 = vpop.f32.mrb[0].mxu0
        %v2264 = vadd.f32 0.0, %v2263
        %v2265 = vpop.f32.mrb[0].mxu0
        %2266 = vmatprep.mubr.bf16.mxu0 0
        %2267 = vmatmul.mubr.bf16.gmra.mrb[0].mxu0 %v1654
        %v2268 = vpop.f32.mrb[0].mxu0
        %v2269 = vadd.f32 0.0, %v2268
        %v2270 = vpop.f32.mrb[0].mxu0
        %v2271 = vpop.f32.mrb[0].mxu0
        %v2272 = vadd.f32 0.0, %v2271
        %v2273 = vpop.f32.mrb[0].mxu0
        %2274 = vmatprep.mubr.bf16.mxu0 0
        %2275 = vmatmul.mubr.bf16.gmra.mrb[0].mxu0 %v1655
        %v2276 = vpop.f32.mrb[0].mxu0
        %v2277 = vadd.f32 0.0, %v2276
        %v2278 = vpop.f32.mrb[0].mxu0
        %v2279 = vpop.f32.mrb[0].mxu0
        %v2280 = vadd.f32 0.0, %v2279
        %v2281 = vpop.f32.mrb[0].mxu0
        %2282 = vmatprep.mubr.bf16.mxu0 0
        %2283 = vmatmul.mubr.bf16.gmra.mrb[0].mxu0 %v1656
        %v2284 = vpop.f32.mrb[0].mxu0
        %v2285 = vadd.f32 0.0, %v2284
        %v2286 = vpop.f32.mrb[0].mxu0
        %v2287 = vpop.f32.mrb[0].mxu0
        %v2288 = vadd.f32 0.0, %v2287
        %v2289 = vpop.f32.mrb[0].mxu0
        %2290 = vdwg.mxu0
        %v2291 = vadd.f32 %v1420, %v1844
        %v2292 = vadd.f32 %v1421, %v1848
        %v2293 = vadd.f32 %v1422, %v1857
        %v2294 = vadd.f32 %v1423, %v1863
        %v2295 = vadd.f32 %v1424, %v1872
        %v2296 = vadd.f32 %v1425, %v1876
        %v2297 = vadd.f32 %v1426, %v1885
        %v2298 = vadd.f32 %v1427, %v1891
        %v2299 = vadd.f32 %v1428, %v1900
        %v2300 = vadd.f32 %v1429, %v1904
        %v2301 = vadd.f32 %v1430, %v1913
        %v2302 = vadd.f32 %v1431, %v1919
        %v2303 = vadd.f32 %v1432, %v1928
        %v2304 = vadd.f32 %v1433, %v1932
        %v2305 = vadd.f32 %v1434, %v1941
        %v2306 = vadd.f32 %v1435, %v1947
        %v2307 = vadd.f32 %v1436, %v1956
        %v2308 = vadd.f32 %v1437, %v1960
        %v2309 = vadd.f32 %v1438, %v1969
        %v2310 = vadd.f32 %v1439, %v1975
        %v2311 = vadd.f32 %v1440, %v1984
        %v2312 = vadd.f32 %v1441, %v1988
        %v2313 = vadd.f32 %v1442, %v1997
        %v2314 = vadd.f32 %v1443, %v2003
        %v2315 = vadd.f32 %v1444, %v2012
        %v2316 = vadd.f32 %v1445, %v2016
        %v2317 = vadd.f32 %v1446, %v2025
        %v2318 = vadd.f32 %v1447, %v2031
        %v2319 = vadd.f32 %v1448, %v2040
        %v2320 = vadd.f32 %v1449, %v2044
        %v2321 = vadd.f32 %v1450, %v2053
        %v2322 = vadd.f32 %v1451, %v2059
        %v2371 = vrot.slane %v1846, 1
        %v2372 = vrot.slane %v1850, 1
        %v2373 = vsel %vm1114, %v2371, %v2372
        %v2374 = vrot.slane %v1855, 1
        %v2375 = vsel %vm1114, %v2372, %v2374
        %v2376 = vrot.slane %v1859, 1
        %v2377 = vrot.slane %v1865, 1
        %v2378 = vsel %vm1114, %v2376, %v2377
        %v2379 = vrot.slane %v1868, 1
        %v2380 = vsel %vm1114, %v2377, %v2379
        %v2381 = vrot.slane %v1874, 1
        %v2382 = vrot.slane %v1878, 1
        %v2383 = vsel %vm1114, %v2381, %v2382
        %v2384 = vrot.slane %v1883, 1
        %v2385 = vsel %vm1114, %v2382, %v2384
        %v2386 = vrot.slane %v1887, 1
        %v2387 = vrot.slane %v1893, 1
        %v2388 = vsel %vm1114, %v2386, %v2387
        %v2389 = vrot.slane %v1896, 1
        %v2390 = vsel %vm1114, %v2387, %v2389
        %v2391 = vrot.slane %v1902, 1
        %v2392 = vrot.slane %v1906, 1
        %v2393 = vsel %vm1114, %v2391, %v2392
        %v2394 = vrot.slane %v1911, 1
        %v2395 = vsel %vm1114, %v2392, %v2394
        %v2396 = vrot.slane %v1915, 1
        %v2397 = vrot.slane %v1921, 1
        %v2398 = vsel %vm1114, %v2396, %v2397
        %v2399 = vrot.slane %v1924, 1
        %v2400 = vsel %vm1114, %v2397, %v2399
        %v2401 = vrot.slane %v1930, 1
        %v2402 = vrot.slane %v1934, 1
        %v2403 = vsel %vm1114, %v2401, %v2402
        %v2404 = vrot.slane %v1939, 1
        %v2405 = vsel %vm1114, %v2402, %v2404
        %v2406 = vrot.slane %v1943, 1
        %v2407 = vrot.slane %v1949, 1
        %v2408 = vsel %vm1114, %v2406, %v2407
        %v2409 = vrot.slane %v1952, 1
        %v2410 = vsel %vm1114, %v2407, %v2409
        %v2411 = vrot.slane %v1958, 1
        %v2412 = vrot.slane %v1962, 1
        %v2413 = vsel %vm1114, %v2411, %v2412
        %v2414 = vrot.slane %v1967, 1
        %v2415 = vsel %vm1114, %v2412, %v2414
        %v2416 = vrot.slane %v1971, 1
        %v2417 = vrot.slane %v1977, 1
        %v2418 = vsel %vm1114, %v2416, %v2417
        %v2419 = vrot.slane %v1980, 1
        %v2420 = vsel %vm1114, %v2417, %v2419
        %v2421 = vrot.slane %v1986, 1
        %v2422 = vrot.slane %v1990, 1
        %v2423 = vsel %vm1114, %v2421, %v2422
        %v2424 = vrot.slane %v1995, 1
        %v2425 = vsel %vm1114, %v2422, %v2424
        %v2426 = vrot.slane %v1999, 1
        %v2427 = vrot.slane %v2005, 1
        %v2428 = vsel %vm1114, %v2426, %v2427
        %v2429 = vrot.slane %v2008, 1
        %v2430 = vsel %vm1114, %v2427, %v2429
        %v2431 = vrot.slane %v2014, 1
        %v2432 = vrot.slane %v2018, 1
        %v2433 = vsel %vm1114, %v2431, %v2432
        %v2434 = vrot.slane %v2023, 1
        %v2435 = vsel %vm1114, %v2432, %v2434
        %v2436 = vrot.slane %v2027, 1
        %v2437 = vrot.slane %v2033, 1
        %v2438 = vsel %vm1114, %v2436, %v2437
        %v2439 = vrot.slane %v2036, 1
        %v2440 = vsel %vm1114, %v2437, %v2439
        %v2441 = vrot.slane %v2042, 1
        %v2442 = vrot.slane %v2046, 1
        %v2443 = vsel %vm1114, %v2441, %v2442
        %v2444 = vrot.slane %v2051, 1
        %v2445 = vsel %vm1114, %v2442, %v2444
        %v2446 = vrot.slane %v2055, 1
        %v2447 = vrot.slane %v2061, 1
        %v2448 = vsel %vm1114, %v2446, %v2447
        %v2449 = vrot.slane %v2064, 1
        %v2450 = vsel %vm1114, %v2447, %v2449
        %v2483 = vadd.f32 %v2291, %v2373
        %v2484 = vadd.f32 %v2292, %v2375
        %v2485 = vadd.f32 %v2293, %v2378
        %v2486 = vadd.f32 %v2294, %v2380
        %v2487 = vadd.f32 %v2295, %v2383
        %v2488 = vadd.f32 %v2296, %v2385
        %v2489 = vadd.f32 %v2297, %v2388
        %v2490 = vadd.f32 %v2298, %v2390
        %v2491 = vadd.f32 %v2299, %v2393
        %v2492 = vadd.f32 %v2300, %v2395
        %v2493 = vadd.f32 %v2301, %v2398
        %v2494 = vadd.f32 %v2302, %v2400
        %v2495 = vadd.f32 %v2303, %v2403
        %v2496 = vadd.f32 %v2304, %v2405
        %v2497 = vadd.f32 %v2305, %v2408
        %v2498 = vadd.f32 %v2306, %v2410
        %v2499 = vadd.f32 %v2307, %v2413
        %v2500 = vadd.f32 %v2308, %v2415
        %v2501 = vadd.f32 %v2309, %v2418
        %v2502 = vadd.f32 %v2310, %v2420
        %v2503 = vadd.f32 %v2311, %v2423
        %v2504 = vadd.f32 %v2312, %v2425
        %v2505 = vadd.f32 %v2313, %v2428
        %v2506 = vadd.f32 %v2314, %v2430
        %v2507 = vadd.f32 %v2315, %v2433
        %v2508 = vadd.f32 %v2316, %v2435
        %v2509 = vadd.f32 %v2317, %v2438
        %v2510 = vadd.f32 %v2318, %v2440
        %v2511 = vadd.f32 %v2319, %v2443
        %v2512 = vadd.f32 %v2320, %v2445
        %v2513 = vadd.f32 %v2321, %v2448
        %v2514 = vadd.f32 %v2322, %v2450
        %v2563 = vrot.slane %v2101, 2
        %v2564 = vrot.slane %v2104, 2
        %v2565 = vsel %vm1307, %v2563, %v2564
        %v2566 = vrot.slane %v2109, 2
        %v2567 = vsel %vm1307, %v2564, %v2566
        %v2568 = vrot.slane %v2112, 2
        %v2569 = vrot.slane %v2117, 2
        %v2570 = vsel %vm1307, %v2568, %v2569
        %v2571 = vrot.slane %v2120, 2
        %v2572 = vsel %vm1307, %v2569, %v2571
        %v2573 = vrot.slane %v2125, 2
        %v2574 = vrot.slane %v2128, 2
        %v2575 = vsel %vm1307, %v2573, %v2574
        %v2576 = vrot.slane %v2133, 2
        %v2577 = vsel %vm1307, %v2574, %v2576
        %v2578 = vrot.slane %v2136, 2
        %v2579 = vrot.slane %v2141, 2
        %v2580 = vsel %vm1307, %v2578, %v2579
        %v2581 = vrot.slane %v2144, 2
        %v2582 = vsel %vm1307, %v2579, %v2581
        %v2583 = vrot.slane %v2149, 2
        %v2584 = vrot.slane %v2152, 2
        %v2585 = vsel %vm1307, %v2583, %v2584
        %v2586 = vrot.slane %v2157, 2
        %v2587 = vsel %vm1307, %v2584, %v2586
        %v2588 = vrot.slane %v2160, 2
        %v2589 = vrot.slane %v2165, 2
        %v2590 = vsel %vm1307, %v2588, %v2589
        %v2591 = vrot.slane %v2168, 2
        %v2592 = vsel %vm1307, %v2589, %v2591
        %v2593 = vrot.slane %v2173, 2
        %v2594 = vrot.slane %v2176, 2
        %v2595 = vsel %vm1307, %v2593, %v2594
        %v2596 = vrot.slane %v2181, 2
        %v2597 = vsel %vm1307, %v2594, %v2596
        %v2598 = vrot.slane %v2184, 2
        %v2599 = vrot.slane %v2189, 2
        %v2600 = vsel %vm1307, %v2598, %v2599
        %v2601 = vrot.slane %v2192, 2
        %v2602 = vsel %vm1307, %v2599, %v2601
        %v2603 = vrot.slane %v2197, 2
        %v2604 = vrot.slane %v2200, 2
        %v2605 = vsel %vm1307, %v2603, %v2604
        %v2606 = vrot.slane %v2205, 2
        %v2607 = vsel %vm1307, %v2604, %v2606
        %v2608 = vrot.slane %v2208, 2
        %v2609 = vrot.slane %v2213, 2
        %v2610 = vsel %vm1307, %v2608, %v2609
        %v2611 = vrot.slane %v2216, 2
        %v2612 = vsel %vm1307, %v2609, %v2611
        %v2613 = vrot.slane %v2221, 2
        %v2614 = vrot.slane %v2224, 2
        %v2615 = vsel %vm1307, %v2613, %v2614
        %v2616 = vrot.slane %v2229, 2
        %v2617 = vsel %vm1307, %v2614, %v2616
        %v2618 = vrot.slane %v2232, 2
        %v2619 = vrot.slane %v2237, 2
        %v2620 = vsel %vm1307, %v2618, %v2619
        %v2621 = vrot.slane %v2240, 2
        %v2622 = vsel %vm1307, %v2619, %v2621
        %v2623 = vrot.slane %v2245, 2
        %v2624 = vrot.slane %v2248, 2
        %v2625 = vsel %vm1307, %v2623, %v2624
        %v2626 = vrot.slane %v2253, 2
        %v2627 = vsel %vm1307, %v2624, %v2626
        %v2628 = vrot.slane %v2256, 2
        %v2629 = vrot.slane %v2261, 2
        %v2630 = vsel %vm1307, %v2628, %v2629
        %v2631 = vrot.slane %v2264, 2
        %v2632 = vsel %vm1307, %v2629, %v2631
        %v2633 = vrot.slane %v2269, 2
        %v2634 = vrot.slane %v2272, 2
        %v2635 = vsel %vm1307, %v2633, %v2634
        %v2636 = vrot.slane %v2277, 2
        %v2637 = vsel %vm1307, %v2634, %v2636
        %v2638 = vrot.slane %v2280, 2
        %v2639 = vrot.slane %v2285, 2
        %v2640 = vsel %vm1307, %v2638, %v2639
        %v2641 = vrot.slane %v2288, 2
        %v2642 = vsel %vm1307, %v2639, %v2641
        %v2675 = vadd.f32 %v2483, %v2565
        %v2676 = vadd.f32 %v2484, %v2567
        %v2677 = vadd.f32 %v2485, %v2570
        %v2678 = vadd.f32 %v2486, %v2572
        %v2679 = vadd.f32 %v2487, %v2575
        %v2680 = vadd.f32 %v2488, %v2577
        %v2681 = vadd.f32 %v2489, %v2580
        %v2682 = vadd.f32 %v2490, %v2582
        %v2683 = vadd.f32 %v2491, %v2585
        %v2684 = vadd.f32 %v2492, %v2587
        %v2685 = vadd.f32 %v2493, %v2590
        %v2686 = vadd.f32 %v2494, %v2592
        %v2687 = vadd.f32 %v2495, %v2595
        %v2688 = vadd.f32 %v2496, %v2597
        %v2689 = vadd.f32 %v2497, %v2600
        %v2690 = vadd.f32 %v2498, %v2602
        %v2691 = vadd.f32 %v2499, %v2605
        %v2692 = vadd.f32 %v2500, %v2607
        %v2693 = vadd.f32 %v2501, %v2610
        %v2694 = vadd.f32 %v2502, %v2612
        %v2695 = vadd.f32 %v2503, %v2615
        %v2696 = vadd.f32 %v2504, %v2617
        %v2697 = vadd.f32 %v2505, %v2620
        %v2698 = vadd.f32 %v2506, %v2622
        %v2699 = vadd.f32 %v2507, %v2625
        %v2700 = vadd.f32 %v2508, %v2627
        %v2701 = vadd.f32 %v2509, %v2630
        %v2702 = vadd.f32 %v2510, %v2632
        %v2703 = vadd.f32 %v2511, %v2635
        %v2704 = vadd.f32 %v2512, %v2637
        %v2705 = vadd.f32 %v2513, %v2640
        %v2706 = vadd.f32 %v2514, %v2642
        %s2707 = sadd.s32 %s190, 2
        %s2708 = smul.u32 %s2707, 3
        %s2709 = smul.addr %s2708, 4
        %s2710 = scalar_lea.vmem %s164, %s2709 [#allocation4]
        %v2711 = vld [vmem:[%s2710] sm:$0xf]
        %v2712 = vld [vmem:[%s2710 + $0x4] sm:$0xf]
        %v2713 = vld [vmem:[%s2710 + $0x8] sm:$0xf]
        %v2714 = vld [vmem:[%s2710 + $0xc] sm:$0xf]
        %v2715 = vld [vmem:[%s2710 + $0x10] sm:$0xf]
        %v2716 = vld [vmem:[%s2710 + $0x14] sm:$0xf]
        %v2717 = vld [vmem:[%s2710 + $0x18] sm:$0xf]
        %v2718 = vld [vmem:[%s2710 + $0x1c] sm:$0xf]
        %v2719 = vld [vmem:[%s2710 + $0x20] sm:$0xf]
        %v2720 = vld [vmem:[%s2710 + $0x24] sm:$0xf]
        %v2721 = vld [vmem:[%s2710 + $0x28] sm:$0xf]
        %v2722 = vld [vmem:[%s2710 + $0x2c] sm:$0xf]
        %v2723 = vld [vmem:[%s2710 + $0x30] sm:$0xf]
        %v2724 = vld [vmem:[%s2710 + $0x34] sm:$0xf]
        %v2725 = vld [vmem:[%s2710 + $0x38] sm:$0xf]
        %v2726 = vld [vmem:[%s2710 + $0x3c] sm:$0xf]
        %v2727 = vld [vmem:[%s2710 + $0x40] sm:$0xf]
        %v2728 = vld [vmem:[%s2710 + $0x44] sm:$0xf]
        %v2729 = vld [vmem:[%s2710 + $0x48] sm:$0xf]
        %v2730 = vld [vmem:[%s2710 + $0x4c] sm:$0xf]
        %v2731 = vld [vmem:[%s2710 + $0x50] sm:$0xf]
        %v2732 = vld [vmem:[%s2710 + $0x54] sm:$0xf]
        %v2733 = vld [vmem:[%s2710 + $0x58] sm:$0xf]
        %v2734 = vld [vmem:[%s2710 + $0x5c] sm:$0xf]
        %v2735 = vld [vmem:[%s2710 + $0x60] sm:$0xf]
        %v2736 = vld [vmem:[%s2710 + $0x64] sm:$0xf]
        %v2737 = vld [vmem:[%s2710 + $0x68] sm:$0xf]
        %v2738 = vld [vmem:[%s2710 + $0x6c] sm:$0xf]
        %v2739 = vld [vmem:[%s2710 + $0x70] sm:$0xf]
        %v2740 = vld [vmem:[%s2710 + $0x74] sm:$0xf]
        %v2741 = vld [vmem:[%s2710 + $0x78] sm:$0xf]
        %v2742 = vld [vmem:[%s2710 + $0x7c] sm:$0xf]
        %v2743 = vld [vmem:[%s2710 + $0x80] sm:$0xf]
        %v2744 = vld [vmem:[%s2710 + $0x84] sm:$0xf]
        %v2745 = vld [vmem:[%s2710 + $0x88] sm:$0xf]
        %v2746 = vld [vmem:[%s2710 + $0x8c] sm:$0xf]
        %v2747 = vld [vmem:[%s2710 + $0x90] sm:$0xf]
        %v2748 = vld [vmem:[%s2710 + $0x94] sm:$0xf]
        %v2749 = vld [vmem:[%s2710 + $0x98] sm:$0xf]
        %v2750 = vld [vmem:[%s2710 + $0x9c] sm:$0xf]
        %v2751 = vld [vmem:[%s2710 + $0xa0] sm:$0xf]
        %v2752 = vld [vmem:[%s2710 + $0xa4] sm:$0xf]
        %v2753 = vld [vmem:[%s2710 + $0xa8] sm:$0xf]
        %v2754 = vld [vmem:[%s2710 + $0xac] sm:$0xf]
        %v2755 = vld [vmem:[%s2710 + $0xb0] sm:$0xf]
        %v2756 = vld [vmem:[%s2710 + $0xb4] sm:$0xf]
        %v2757 = vld [vmem:[%s2710 + $0xb8] sm:$0xf]
        %v2758 = vld [vmem:[%s2710 + $0xbc] sm:$0xf]
        %s2759 = scalar_lea.vmem [#allocation7], 384
        %v2760 = vld [vmem:[%s2759] sm:$0xff]
        %v2761 = vld [vmem:[%s2759 + $0x8] sm:$0xf]
        %v2762 = vld [vmem:[%s2759 + $0xc] sm:$0xff]
        %v2763 = vld [vmem:[%s2759 + $0x14] sm:$0xf]
        %v2764 = vld [vmem:[%s2759 + $0x18] sm:$0xff]
        %v2765 = vld [vmem:[%s2759 + $0x20] sm:$0xf]
        %v2766 = vld [vmem:[%s2759 + $0x24] sm:$0xff]
        %v2767 = vld [vmem:[%s2759 + $0x2c] sm:$0xf]
        %v2768 = vld [vmem:[%s2759 + $0x30] sm:$0xff]
        %v2769 = vld [vmem:[%s2759 + $0x38] sm:$0xf]
        %v2770 = vld [vmem:[%s2759 + $0x3c] sm:$0xff]
        %v2771 = vld [vmem:[%s2759 + $0x44] sm:$0xf]
        %v2772 = vld [vmem:[%s2759 + $0x48] sm:$0xff]
        %v2773 = vld [vmem:[%s2759 + $0x50] sm:$0xf]
        %v2774 = vld [vmem:[%s2759 + $0x54] sm:$0xff]
        %v2775 = vld [vmem:[%s2759 + $0x5c] sm:$0xf]
        %v2776 = vld [vmem:[%s2759 + $0x60] sm:$0xff]
        %v2777 = vld [vmem:[%s2759 + $0x68] sm:$0xf]
        %v2778 = vld [vmem:[%s2759 + $0x6c] sm:$0xff]
        %v2779 = vld [vmem:[%s2759 + $0x74] sm:$0xf]
        %v2780 = vld [vmem:[%s2759 + $0x78] sm:$0xff]
        %v2781 = vld [vmem:[%s2759 + $0x80] sm:$0xf]
        %v2782 = vld [vmem:[%s2759 + $0x84] sm:$0xff]
        %v2783 = vld [vmem:[%s2759 + $0x8c] sm:$0xf]
        %v2784 = vld [vmem:[%s2759 + $0x90] sm:$0xff]
        %v2785 = vld [vmem:[%s2759 + $0x98] sm:$0xf]
        %v2786 = vld [vmem:[%s2759 + $0x9c] sm:$0xff]
        %v2787 = vld [vmem:[%s2759 + $0xa4] sm:$0xf]
        %v2788 = vld [vmem:[%s2759 + $0xa8] sm:$0xff]
        %v2789 = vld [vmem:[%s2759 + $0xb0] sm:$0xf]
        %v2790 = vld [vmem:[%s2759 + $0xb4] sm:$0xff]
        %v2791 = vld [vmem:[%s2759 + $0xbc] sm:$0xf]
        %v2840 = vunpack.c.l.b16 %v2711
        %v2841 = vunpack.c.l.b16 %v2712
        %v2842 = vunpack.c.l.b16 %v2713
        %v2843 = vunpack.c.l.b16 %v2714
        %v2844 = vunpack.c.l.b16 %v2715
        %v2845 = vunpack.c.l.b16 %v2716
        %v2846 = vunpack.c.l.b16 %v2717
        %v2847 = vunpack.c.l.b16 %v2718
        %v2848 = vunpack.c.l.b16 %v2719
        %v2849 = vunpack.c.l.b16 %v2720
        %v2850 = vunpack.c.l.b16 %v2721
        %v2851 = vunpack.c.l.b16 %v2722
        %v2852 = vunpack.c.l.b16 %v2723
        %v2853 = vunpack.c.l.b16 %v2724
        %v2854 = vunpack.c.l.b16 %v2725
        %v2855 = vunpack.c.l.b16 %v2726
        %v2856 = vunpack.c.l.b16 %v2727
        %v2857 = vunpack.c.l.b16 %v2728
        %v2858 = vunpack.c.l.b16 %v2729
        %v2859 = vunpack.c.l.b16 %v2730
        %v2860 = vunpack.c.l.b16 %v2731
        %v2861 = vunpack.c.l.b16 %v2732
        %v2862 = vunpack.c.l.b16 %v2733
        %v2863 = vunpack.c.l.b16 %v2734
        %v2864 = vunpack.c.l.b16 %v2735
        %v2865 = vunpack.c.l.b16 %v2736
        %v2866 = vunpack.c.l.b16 %v2737
        %v2867 = vunpack.c.l.b16 %v2738
        %v2868 = vunpack.c.l.b16 %v2739
        %v2869 = vunpack.c.l.b16 %v2740
        %v2870 = vunpack.c.l.b16 %v2741
        %v2871 = vunpack.c.l.b16 %v2742
        %v2872 = vunpack.c.l.b16 %v2743
        %v2873 = vunpack.c.l.b16 %v2744
        %v2874 = vunpack.c.l.b16 %v2745
        %v2875 = vunpack.c.l.b16 %v2746
        %v2876 = vunpack.c.l.b16 %v2747
        %v2877 = vunpack.c.l.b16 %v2748
        %v2878 = vunpack.c.l.b16 %v2749
        %v2879 = vunpack.c.l.b16 %v2750
        %v2880 = vunpack.c.l.b16 %v2751
        %v2881 = vunpack.c.l.b16 %v2752
        %v2882 = vunpack.c.l.b16 %v2753
        %v2883 = vunpack.c.l.b16 %v2754
        %v2884 = vunpack.c.l.b16 %v2755
        %v2885 = vunpack.c.l.b16 %v2756
        %v2886 = vunpack.c.l.b16 %v2757
        %v2887 = vunpack.c.l.b16 %v2758
        %v2888 = vpack.c.b16 %v2841, %v2840
        %v2889 = vpack.c.b16 %v2843, %v2842
        %v2890 = vpack.c.b16 %v2845, %v2844
        %v2891 = vpack.c.b16 %v2847, %v2846
        %v2892 = vpack.c.b16 %v2849, %v2848
        %v2893 = vpack.c.b16 %v2851, %v2850
        %v2894 = vpack.c.b16 %v2853, %v2852
        %v2895 = vpack.c.b16 %v2855, %v2854
        %v2896 = vpack.c.b16 %v2857, %v2856
        %v2897 = vpack.c.b16 %v2859, %v2858
        %v2898 = vpack.c.b16 %v2861, %v2860
        %v2899 = vpack.c.b16 %v2863, %v2862
        %v2900 = vpack.c.b16 %v2865, %v2864
        %v2901 = vpack.c.b16 %v2867, %v2866
        %v2902 = vpack.c.b16 %v2869, %v2868
        %v2903 = vpack.c.b16 %v2871, %v2870
        %v2904 = vpack.c.b16 %v2873, %v2872
        %v2905 = vpack.c.b16 %v2875, %v2874
        %v2906 = vpack.c.b16 %v2877, %v2876
        %v2907 = vpack.c.b16 %v2879, %v2878
        %v2908 = vpack.c.b16 %v2881, %v2880
        %v2909 = vpack.c.b16 %v2883, %v2882
        %v2910 = vpack.c.b16 %v2885, %v2884
        %v2911 = vpack.c.b16 %v2887, %v2886
        %v2968 = vunpack.c.l.b16 %v2760
        %v2969 = vunpack.c.h.b16 %v2760
        %v2970 = vunpack.c.l.b16 %v2761
        %v2971 = vunpack.c.l.b16 %v2762
        %v2972 = vunpack.c.h.b16 %v2762
        %v2973 = vunpack.c.l.b16 %v2763
        %v2974 = vunpack.c.l.b16 %v2764
        %v2975 = vunpack.c.h.b16 %v2764
        %v2976 = vunpack.c.l.b16 %v2765
        %v2977 = vunpack.c.l.b16 %v2766
        %v2978 = vunpack.c.h.b16 %v2766
        %v2979 = vunpack.c.l.b16 %v2767
        %v2980 = vunpack.c.l.b16 %v2768
        %v2981 = vunpack.c.h.b16 %v2768
        %v2982 = vunpack.c.l.b16 %v2769
        %v2983 = vunpack.c.l.b16 %v2770
        %v2984 = vunpack.c.h.b16 %v2770
        %v2985 = vunpack.c.l.b16 %v2771
        %v2986 = vunpack.c.l.b16 %v2772
        %v2987 = vunpack.c.h.b16 %v2772
        %v2988 = vunpack.c.l.b16 %v2773
        %v2989 = vunpack.c.l.b16 %v2774
        %v2990 = vunpack.c.h.b16 %v2774
        %v2991 = vunpack.c.l.b16 %v2775
        %v2992 = vunpack.c.l.b16 %v2776
        %v2993 = vunpack.c.h.b16 %v2776
        %v2994 = vunpack.c.l.b16 %v2777
        %v2995 = vunpack.c.l.b16 %v2778
        %v2996 = vunpack.c.h.b16 %v2778
        %v2997 = vunpack.c.l.b16 %v2779
        %v2998 = vunpack.c.l.b16 %v2780
        %v2999 = vunpack.c.h.b16 %v2780
        %v3000 = vunpack.c.l.b16 %v2781
        %v3001 = vunpack.c.l.b16 %v2782
        %v3002 = vunpack.c.h.b16 %v2782
        %v3003 = vunpack.c.l.b16 %v2783
        %v3004 = vunpack.c.l.b16 %v2784
        %v3005 = vunpack.c.h.b16 %v2784
        %v3006 = vunpack.c.l.b16 %v2785
        %v3007 = vunpack.c.l.b16 %v2786
        %v3008 = vunpack.c.h.b16 %v2786
        %v3009 = vunpack.c.l.b16 %v2787
        %v3010 = vunpack.c.l.b16 %v2788
        %v3011 = vunpack.c.h.b16 %v2788
        %v3012 = vunpack.c.l.b16 %v2789
        %v3013 = vunpack.c.l.b16 %v2790
        %v3014 = vunpack.c.h.b16 %v2790
        %v3015 = vunpack.c.l.b16 %v2791
        %v3016 = vpack.c.b16 %v2971, %v2968
        %v3017 = vpack.c.b16 %v2972, %v2969
        %v3018 = vpack.c.b16 %v2973, %v2970
        %v3019 = vpack.c.b16 %v2977, %v2974
        %v3020 = vpack.c.b16 %v2978, %v2975
        %v3021 = vpack.c.b16 %v2979, %v2976
        %v3022 = vpack.c.b16 %v2983, %v2980
        %v3023 = vpack.c.b16 %v2984, %v2981
        %v3024 = vpack.c.b16 %v2985, %v2982
        %v3025 = vpack.c.b16 %v2989, %v2986
        %v3026 = vpack.c.b16 %v2990, %v2987
        %v3027 = vpack.c.b16 %v2991, %v2988
        %v3028 = vpack.c.b16 %v2995, %v2992
        %v3029 = vpack.c.b16 %v2996, %v2993
        %v3030 = vpack.c.b16 %v2997, %v2994
        %v3031 = vpack.c.b16 %v3001, %v2998
        %v3032 = vpack.c.b16 %v3002, %v2999
        %v3033 = vpack.c.b16 %v3003, %v3000
        %v3034 = vpack.c.b16 %v3007, %v3004
        %v3035 = vpack.c.b16 %v3008, %v3005
        %v3036 = vpack.c.b16 %v3009, %v3006
        %v3037 = vpack.c.b16 %v3013, %v3010
        %v3038 = vpack.c.b16 %v3014, %v3011
        %v3039 = vpack.c.b16 %v3015, %v3012
        %3064 = vmatprep.subr.bf16.mxu0 %v3017
        %3065 = vmatpush1.bf16.msra.mxu0 %v3016
        %3066 = vmatprep.subr.bf16.mxu0 %v3020
        %3067 = vmatpush1.bf16.msra.mxu0 %v3019
        %3068 = vmatprep.subr.bf16.mxu0 %v3023
        %3069 = vmatpush1.bf16.msra.mxu0 %v3022
        %3070 = vmatprep.subr.bf16.mxu0 %v3026
        %3071 = vmatpush1.bf16.msra.mxu0 %v3025
        %3072 = vmatprep.subr.bf16.mxu0 %v3029
        %3073 = vmatpush1.bf16.msra.mxu0 %v3028
        %3074 = vmatprep.subr.bf16.mxu0 %v3032
        %3075 = vmatpush1.bf16.msra.mxu0 %v3031
        %3076 = vmatprep.subr.bf16.mxu0 %v3035
        %3077 = vmatpush1.bf16.msra.mxu0 %v3034
        %3078 = vmatprep.subr.bf16.mxu0 %v3038
        %3079 = vmatpush1.bf16.msra.mxu0 %v3037
        %3080 = vmatprep.subr.bf16.mxu0 0
        %3081 = vmatpush1.bf16.msra.mxu0 0
        %3082 = vmatprep.subr.bf16.mxu0 0
        %3083 = vmatpush1.bf16.msra.mxu0 0
        %3084 = vmatprep.subr.bf16.mxu0 0
        %3085 = vmatpush1.bf16.msra.mxu0 0
        %3086 = vmatprep.subr.bf16.mxu0 0
        %3087 = vmatpush1.bf16.msra.mxu0 0
        %3088 = vmatprep.subr.bf16.mxu0 0
        %3089 = vmatpush1.bf16.msra.mxu0 0
        %3090 = vmatprep.subr.bf16.mxu0 0
        %3091 = vmatpush1.bf16.msra.mxu0 0
        %3092 = vmatprep.subr.bf16.mxu0 0
        %3093 = vmatpush1.bf16.msra.mxu0 0
        %3094 = vmatprep.subr.bf16.mxu0 0
        %3095 = vmatpush1.bf16.msra.mxu0 0
        %3096 = vmatprep.mubr.bf16.mxu0 0
        %3097 = vmatmul.mubr.bf16.gmra.mrb[0].mxu0 %v2888
        %v3098 = vpop.f32.mrb[0].mxu0
        %v3099 = vadd.f32 0.0, %v3098
        %v3100 = vpop.f32.mrb[0].mxu0
        %v3101 = vadd.f32 0.0, %v3100
        %v3102 = vpop.f32.mrb[0].mxu0
        %v3103 = vadd.f32 0.0, %v3102
        %v3104 = vpop.f32.mrb[0].mxu0
        %v3105 = vadd.f32 0.0, %v3104
        %3106 = vmatprep.mubr.bf16.mxu0 0
        %3107 = vmatmul.mubr.bf16.gmra.mrb[0].mxu0 %v2889
        %v3108 = vpop.f32.mrb[0].mxu0
        %v3109 = vpop.f32.mrb[0].mxu0
        %v3110 = vadd.f32 0.0, %v3109
        %v3111 = vpop.f32.mrb[0].mxu0
        %v3112 = vadd.f32 0.0, %v3111
        %v3113 = vpop.f32.mrb[0].mxu0
        %v3114 = vadd.f32 0.0, %v3113
        %3115 = vmatprep.mubr.bf16.mxu0 0
        %3116 = vmatmul.mubr.bf16.gmra.mrb[0].mxu0 %v2890
        %v3117 = vpop.f32.mrb[0].mxu0
        %v3118 = vadd.f32 0.0, %v3117
        %v3119 = vpop.f32.mrb[0].mxu0
        %v3120 = vadd.f32 0.0, %v3119
        %v3121 = vpop.f32.mrb[0].mxu0
        %v3122 = vpop.f32.mrb[0].mxu0
        %v3123 = vadd.f32 0.0, %v3122
        %3124 = vmatprep.mubr.bf16.mxu0 0
        %3125 = vmatmul.mubr.bf16.gmra.mrb[0].mxu0 %v2891
        %v3126 = vpop.f32.mrb[0].mxu0
        %v3127 = vadd.f32 0.0, %v3126
        %v3128 = vpop.f32.mrb[0].mxu0
        %v3129 = vadd.f32 0.0, %v3128
        %v3130 = vpop.f32.mrb[0].mxu0
        %v3131 = vadd.f32 0.0, %v3130
        %v3132 = vpop.f32.mrb[0].mxu0
        %v3133 = vadd.f32 0.0, %v3132
        %3134 = vmatprep.mubr.bf16.mxu0 0
        %3135 = vmatmul.mubr.bf16.gmra.mrb[0].mxu0 %v2892
        %v3136 = vpop.f32.mrb[0].mxu0
        %v3137 = vpop.f32.mrb[0].mxu0
        %v3138 = vadd.f32 0.0, %v3137
        %v3139 = vpop.f32.mrb[0].mxu0
        %v3140 = vadd.f32 0.0, %v3139
        %v3141 = vpop.f32.mrb[0].mxu0
        %v3142 = vadd.f32 0.0, %v3141
        %3143 = vmatprep.mubr.bf16.mxu0 0
        %3144 = vmatmul.mubr.bf16.gmra.mrb[0].mxu0 %v2893
        %v3145 = vpop.f32.mrb[0].mxu0
        %v3146 = vadd.f32 0.0, %v3145
        %v3147 = vpop.f32.mrb[0].mxu0
        %v3148 = vadd.f32 0.0, %v3147
        %v3149 = vpop.f32.mrb[0].mxu0
        %v3150 = vpop.f32.mrb[0].mxu0
        %v3151 = vadd.f32 0.0, %v3150
        %3152 = vmatprep.mubr.bf16.mxu0 0
        %3153 = vmatmul.mubr.bf16.gmra.mrb[0].mxu0 %v2894
        %v3154 = vpop.f32.mrb[0].mxu0
        %v3155 = vadd.f32 0.0, %v3154
        %v3156 = vpop.f32.mrb[0].mxu0
        %v3157 = vadd.f32 0.0, %v3156
        %v3158 = vpop.f32.mrb[0].mxu0
        %v3159 = vadd.f32 0.0, %v3158
        %v3160 = vpop.f32.mrb[0].mxu0
        %v3161 = vadd.f32 0.0, %v3160
        %3162 = vmatprep.mubr.bf16.mxu0 0
        %3163 = vmatmul.mubr.bf16.gmra.mrb[0].mxu0 %v2895
        %v3164 = vpop.f32.mrb[0].mxu0
        %v3165 = vpop.f32.mrb[0].mxu0
        %v3166 = vadd.f32 0.0, %v3165
        %v3167 = vpop.f32.mrb[0].mxu0
        %v3168 = vadd.f32 0.0, %v3167
        %v3169 = vpop.f32.mrb[0].mxu0
        %v3170 = vadd.f32 0.0, %v3169
        %3171 = vmatprep.mubr.bf16.mxu0 0
        %3172 = vmatmul.mubr.bf16.gmra.mrb[0].mxu0 %v2896
        %v3173 = vpop.f32.mrb[0].mxu0
        %v3174 = vadd.f32 0.0, %v3173
        %v3175 = vpop.f32.mrb[0].mxu0
        %v3176 = vadd.f32 0.0, %v3175
        %v3177 = vpop.f32.mrb[0].mxu0
        %v3178 = vpop.f32.mrb[0].mxu0
        %v3179 = vadd.f32 0.0, %v3178
        %3180 = vmatprep.mubr.bf16.mxu0 0
        %3181 = vmatmul.mubr.bf16.gmra.mrb[0].mxu0 %v2897
        %v3182 = vpop.f32.mrb[0].mxu0
        %v3183 = vadd.f32 0.0, %v3182
        %v3184 = vpop.f32.mrb[0].mxu0
        %v3185 = vadd.f32 0.0, %v3184
        %v3186 = vpop.f32.mrb[0].mxu0
        %v3187 = vadd.f32 0.0, %v3186
        %v3188 = vpop.f32.mrb[0].mxu0
        %v3189 = vadd.f32 0.0, %v3188
        %3190 = vmatprep.mubr.bf16.mxu0 0
        %3191 = vmatmul.mubr.bf16.gmra.mrb[0].mxu0 %v2898
        %v3192 = vpop.f32.mrb[0].mxu0
        %v3193 = vpop.f32.mrb[0].mxu0
        %v3194 = vadd.f32 0.0, %v3193
        %v3195 = vpop.f32.mrb[0].mxu0
        %v3196 = vadd.f32 0.0, %v3195
        %v3197 = vpop.f32.mrb[0].mxu0
        %v3198 = vadd.f32 0.0, %v3197
        %3199 = vmatprep.mubr.bf16.mxu0 0
        %3200 = vmatmul.mubr.bf16.gmra.mrb[0].mxu0 %v2899
        %v3201 = vpop.f32.mrb[0].mxu0
        %v3202 = vadd.f32 0.0, %v3201
        %v3203 = vpop.f32.mrb[0].mxu0
        %v3204 = vadd.f32 0.0, %v3203
        %v3205 = vpop.f32.mrb[0].mxu0
        %v3206 = vpop.f32.mrb[0].mxu0
        %v3207 = vadd.f32 0.0, %v3206
        %3208 = vmatprep.mubr.bf16.mxu0 0
        %3209 = vmatmul.mubr.bf16.gmra.mrb[0].mxu0 %v2900
        %v3210 = vpop.f32.mrb[0].mxu0
        %v3211 = vadd.f32 0.0, %v3210
        %v3212 = vpop.f32.mrb[0].mxu0
        %v3213 = vadd.f32 0.0, %v3212
        %v3214 = vpop.f32.mrb[0].mxu0
        %v3215 = vadd.f32 0.0, %v3214
        %v3216 = vpop.f32.mrb[0].mxu0
        %v3217 = vadd.f32 0.0, %v3216
        %3218 = vmatprep.mubr.bf16.mxu0 0
        %3219 = vmatmul.mubr.bf16.gmra.mrb[0].mxu0 %v2901
        %v3220 = vpop.f32.mrb[0].mxu0
        %v3221 = vpop.f32.mrb[0].mxu0
        %v3222 = vadd.f32 0.0, %v3221
        %v3223 = vpop.f32.mrb[0].mxu0
        %v3224 = vadd.f32 0.0, %v3223
        %v3225 = vpop.f32.mrb[0].mxu0
        %v3226 = vadd.f32 0.0, %v3225
        %3227 = vmatprep.mubr.bf16.mxu0 0
        %3228 = vmatmul.mubr.bf16.gmra.mrb[0].mxu0 %v2902
        %v3229 = vpop.f32.mrb[0].mxu0
        %v3230 = vadd.f32 0.0, %v3229
        %v3231 = vpop.f32.mrb[0].mxu0
        %v3232 = vadd.f32 0.0, %v3231
        %v3233 = vpop.f32.mrb[0].mxu0
        %v3234 = vpop.f32.mrb[0].mxu0
        %v3235 = vadd.f32 0.0, %v3234
        %3236 = vmatprep.mubr.bf16.mxu0 0
        %3237 = vmatmul.mubr.bf16.gmra.mrb[0].mxu0 %v2903
        %v3238 = vpop.f32.mrb[0].mxu0
        %v3239 = vadd.f32 0.0, %v3238
        %v3240 = vpop.f32.mrb[0].mxu0
        %v3241 = vadd.f32 0.0, %v3240
        %v3242 = vpop.f32.mrb[0].mxu0
        %v3243 = vadd.f32 0.0, %v3242
        %v3244 = vpop.f32.mrb[0].mxu0
        %v3245 = vadd.f32 0.0, %v3244
        %3246 = vmatprep.mubr.bf16.mxu0 0
        %3247 = vmatmul.mubr.bf16.gmra.mrb[0].mxu0 %v2904
        %v3248 = vpop.f32.mrb[0].mxu0
        %v3249 = vpop.f32.mrb[0].mxu0
        %v3250 = vadd.f32 0.0, %v3249
        %v3251 = vpop.f32.mrb[0].mxu0
        %v3252 = vadd.f32 0.0, %v3251
        %v3253 = vpop.f32.mrb[0].mxu0
        %v3254 = vadd.f32 0.0, %v3253
        %3255 = vmatprep.mubr.bf16.mxu0 0
        %3256 = vmatmul.mubr.bf16.gmra.mrb[0].mxu0 %v2905
        %v3257 = vpop.f32.mrb[0].mxu0
        %v3258 = vadd.f32 0.0, %v3257
        %v3259 = vpop.f32.mrb[0].mxu0
        %v3260 = vadd.f32 0.0, %v3259
        %v3261 = vpop.f32.mrb[0].mxu0
        %v3262 = vpop.f32.mrb[0].mxu0
        %v3263 = vadd.f32 0.0, %v3262
        %3264 = vmatprep.mubr.bf16.mxu0 0
        %3265 = vmatmul.mubr.bf16.gmra.mrb[0].mxu0 %v2906
        %v3266 = vpop.f32.mrb[0].mxu0
        %v3267 = vadd.f32 0.0, %v3266
        %v3268 = vpop.f32.mrb[0].mxu0
        %v3269 = vadd.f32 0.0, %v3268
        %v3270 = vpop.f32.mrb[0].mxu0
        %v3271 = vadd.f32 0.0, %v3270
        %v3272 = vpop.f32.mrb[0].mxu0
        %v3273 = vadd.f32 0.0, %v3272
        %3274 = vmatprep.mubr.bf16.mxu0 0
        %3275 = vmatmul.mubr.bf16.gmra.mrb[0].mxu0 %v2907
        %v3276 = vpop.f32.mrb[0].mxu0
        %v3277 = vpop.f32.mrb[0].mxu0
        %v3278 = vadd.f32 0.0, %v3277
        %v3279 = vpop.f32.mrb[0].mxu0
        %v3280 = vadd.f32 0.0, %v3279
        %v3281 = vpop.f32.mrb[0].mxu0
        %v3282 = vadd.f32 0.0, %v3281
        %3283 = vmatprep.mubr.bf16.mxu0 0
        %3284 = vmatmul.mubr.bf16.gmra.mrb[0].mxu0 %v2908
        %v3285 = vpop.f32.mrb[0].mxu0
        %v3286 = vadd.f32 0.0, %v3285
        %v3287 = vpop.f32.mrb[0].mxu0
        %v3288 = vadd.f32 0.0, %v3287
        %v3289 = vpop.f32.mrb[0].mxu0
        %v3290 = vpop.f32.mrb[0].mxu0
        %v3291 = vadd.f32 0.0, %v3290
        %3292 = vmatprep.mubr.bf16.mxu0 0
        %3293 = vmatmul.mubr.bf16.gmra.mrb[0].mxu0 %v2909
        %v3294 = vpop.f32.mrb[0].mxu0
        %v3295 = vadd.f32 0.0, %v3294
        %v3296 = vpop.f32.mrb[0].mxu0
        %v3297 = vadd.f32 0.0, %v3296
        %v3298 = vpop.f32.mrb[0].mxu0
        %v3299 = vadd.f32 0.0, %v3298
        %v3300 = vpop.f32.mrb[0].mxu0
        %v3301 = vadd.f32 0.0, %v3300
        %3302 = vmatprep.mubr.bf16.mxu0 0
        %3303 = vmatmul.mubr.bf16.gmra.mrb[0].mxu0 %v2910
        %v3304 = vpop.f32.mrb[0].mxu0
        %v3305 = vpop.f32.mrb[0].mxu0
        %v3306 = vadd.f32 0.0, %v3305
        %v3307 = vpop.f32.mrb[0].mxu0
        %v3308 = vadd.f32 0.0, %v3307
        %v3309 = vpop.f32.mrb[0].mxu0
        %v3310 = vadd.f32 0.0, %v3309
        %3311 = vmatprep.mubr.bf16.mxu0 0
        %3312 = vmatmul.mubr.bf16.gmra.mrb[0].mxu0 %v2911
        %v3313 = vpop.f32.mrb[0].mxu0
        %v3314 = vadd.f32 0.0, %v3313
        %v3315 = vpop.f32.mrb[0].mxu0
        %v3316 = vadd.f32 0.0, %v3315
        %v3317 = vpop.f32.mrb[0].mxu0
        %v3318 = vpop.f32.mrb[0].mxu0
        %v3319 = vadd.f32 0.0, %v3318
        %3320 = vdwg.mxu0
        %3321 = vmatprep.subr.bf16.mxu0 0
        %3322 = vmatpush1.bf16.msra.mxu0 %v3018
        %3323 = vmatprep.subr.bf16.mxu0 0
        %3324 = vmatpush1.bf16.msra.mxu0 %v3021
        %3325 = vmatprep.subr.bf16.mxu0 0
        %3326 = vmatpush1.bf16.msra.mxu0 %v3024
        %3327 = vmatprep.subr.bf16.mxu0 0
        %3328 = vmatpush1.bf16.msra.mxu0 %v3027
        %3329 = vmatprep.subr.bf16.mxu0 0
        %3330 = vmatpush1.bf16.msra.mxu0 %v3030
        %3331 = vmatprep.subr.bf16.mxu0 0
        %3332 = vmatpush1.bf16.msra.mxu0 %v3033
        %3333 = vmatprep.subr.bf16.mxu0 0
        %3334 = vmatpush1.bf16.msra.mxu0 %v3036
        %3335 = vmatprep.subr.bf16.mxu0 0
        %3336 = vmatpush1.bf16.msra.mxu0 %v3039
        %3337 = vmatprep.subr.bf16.mxu0 0
        %3338 = vmatpush1.bf16.msra.mxu0 0
        %3339 = vmatprep.subr.bf16.mxu0 0
        %3340 = vmatpush1.bf16.msra.mxu0 0
        %3341 = vmatprep.subr.bf16.mxu0 0
        %3342 = vmatpush1.bf16.msra.mxu0 0
        %3343 = vmatprep.subr.bf16.mxu0 0
        %3344 = vmatpush1.bf16.msra.mxu0 0
        %3345 = vmatprep.subr.bf16.mxu0 0
        %3346 = vmatpush1.bf16.msra.mxu0 0
        %3347 = vmatprep.subr.bf16.mxu0 0
        %3348 = vmatpush1.bf16.msra.mxu0 0
        %3349 = vmatprep.subr.bf16.mxu0 0
        %3350 = vmatpush1.bf16.msra.mxu0 0
        %3351 = vmatprep.subr.bf16.mxu0 0
        %3352 = vmatpush1.bf16.msra.mxu0 0
        %3353 = vmatprep.mubr.bf16.mxu0 0
        %3354 = vmatmul.mubr.bf16.gmra.mrb[0].mxu0 %v2888
        %v3355 = vpop.f32.mrb[0].mxu0
        %v3356 = vadd.f32 0.0, %v3355
        %v3357 = vpop.f32.mrb[0].mxu0
        %v3358 = vpop.f32.mrb[0].mxu0
        %v3359 = vadd.f32 0.0, %v3358
        %v3360 = vpop.f32.mrb[0].mxu0
        %3361 = vmatprep.mubr.bf16.mxu0 0
        %3362 = vmatmul.mubr.bf16.gmra.mrb[0].mxu0 %v2889
        %v3363 = vpop.f32.mrb[0].mxu0
        %v3364 = vadd.f32 0.0, %v3363
        %v3365 = vpop.f32.mrb[0].mxu0
        %v3366 = vpop.f32.mrb[0].mxu0
        %v3367 = vadd.f32 0.0, %v3366
        %v3368 = vpop.f32.mrb[0].mxu0
        %3369 = vmatprep.mubr.bf16.mxu0 0
        %3370 = vmatmul.mubr.bf16.gmra.mrb[0].mxu0 %v2890
        %v3371 = vpop.f32.mrb[0].mxu0
        %v3372 = vadd.f32 0.0, %v3371
        %v3373 = vpop.f32.mrb[0].mxu0
        %v3374 = vpop.f32.mrb[0].mxu0
        %v3375 = vadd.f32 0.0, %v3374
        %v3376 = vpop.f32.mrb[0].mxu0
        %3377 = vmatprep.mubr.bf16.mxu0 0
        %3378 = vmatmul.mubr.bf16.gmra.mrb[0].mxu0 %v2891
        %v3379 = vpop.f32.mrb[0].mxu0
        %v3380 = vadd.f32 0.0, %v3379
        %v3381 = vpop.f32.mrb[0].mxu0
        %v3382 = vpop.f32.mrb[0].mxu0
        %v3383 = vadd.f32 0.0, %v3382
        %v3384 = vpop.f32.mrb[0].mxu0
        %3385 = vmatprep.mubr.bf16.mxu0 0
        %3386 = vmatmul.mubr.bf16.gmra.mrb[0].mxu0 %v2892
        %v3387 = vpop.f32.mrb[0].mxu0
        %v3388 = vadd.f32 0.0, %v3387
        %v3389 = vpop.f32.mrb[0].mxu0
        %v3390 = vpop.f32.mrb[0].mxu0
        %v3391 = vadd.f32 0.0, %v3390
        %v3392 = vpop.f32.mrb[0].mxu0
        %3393 = vmatprep.mubr.bf16.mxu0 0
        %3394 = vmatmul.mubr.bf16.gmra.mrb[0].mxu0 %v2893
        %v3395 = vpop.f32.mrb[0].mxu0
        %v3396 = vadd.f32 0.0, %v3395
        %v3397 = vpop.f32.mrb[0].mxu0
        %v3398 = vpop.f32.mrb[0].mxu0
        %v3399 = vadd.f32 0.0, %v3398
        %v3400 = vpop.f32.mrb[0].mxu0
        %3401 = vmatprep.mubr.bf16.mxu0 0
        %3402 = vmatmul.mubr.bf16.gmra.mrb[0].mxu0 %v2894
        %v3403 = vpop.f32.mrb[0].mxu0
        %v3404 = vadd.f32 0.0, %v3403
        %v3405 = vpop.f32.mrb[0].mxu0
        %v3406 = vpop.f32.mrb[0].mxu0
        %v3407 = vadd.f32 0.0, %v3406
        %v3408 = vpop.f32.mrb[0].mxu0
        %3409 = vmatprep.mubr.bf16.mxu0 0
        %3410 = vmatmul.mubr.bf16.gmra.mrb[0].mxu0 %v2895
        %v3411 = vpop.f32.mrb[0].mxu0
        %v3412 = vadd.f32 0.0, %v3411
        %v3413 = vpop.f32.mrb[0].mxu0
        %v3414 = vpop.f32.mrb[0].mxu0
        %v3415 = vadd.f32 0.0, %v3414
        %v3416 = vpop.f32.mrb[0].mxu0
        %3417 = vmatprep.mubr.bf16.mxu0 0
        %3418 = vmatmul.mubr.bf16.gmra.mrb[0].mxu0 %v2896
        %v3419 = vpop.f32.mrb[0].mxu0
        %v3420 = vadd.f32 0.0, %v3419
        %v3421 = vpop.f32.mrb[0].mxu0
        %v3422 = vpop.f32.mrb[0].mxu0
        %v3423 = vadd.f32 0.0, %v3422
        %v3424 = vpop.f32.mrb[0].mxu0
        %3425 = vmatprep.mubr.bf16.mxu0 0
        %3426 = vmatmul.mubr.bf16.gmra.mrb[0].mxu0 %v2897
        %v3427 = vpop.f32.mrb[0].mxu0
        %v3428 = vadd.f32 0.0, %v3427
        %v3429 = vpop.f32.mrb[0].mxu0
        %v3430 = vpop.f32.mrb[0].mxu0
        %v3431 = vadd.f32 0.0, %v3430
        %v3432 = vpop.f32.mrb[0].mxu0
        %3433 = vmatprep.mubr.bf16.mxu0 0
        %3434 = vmatmul.mubr.bf16.gmra.mrb[0].mxu0 %v2898
        %v3435 = vpop.f32.mrb[0].mxu0
        %v3436 = vadd.f32 0.0, %v3435
        %v3437 = vpop.f32.mrb[0].mxu0
        %v3438 = vpop.f32.mrb[0].mxu0
        %v3439 = vadd.f32 0.0, %v3438
        %v3440 = vpop.f32.mrb[0].mxu0
        %3441 = vmatprep.mubr.bf16.mxu0 0
        %3442 = vmatmul.mubr.bf16.gmra.mrb[0].mxu0 %v2899
        %v3443 = vpop.f32.mrb[0].mxu0
        %v3444 = vadd.f32 0.0, %v3443
        %v3445 = vpop.f32.mrb[0].mxu0
        %v3446 = vpop.f32.mrb[0].mxu0
        %v3447 = vadd.f32 0.0, %v3446
        %v3448 = vpop.f32.mrb[0].mxu0
        %3449 = vmatprep.mubr.bf16.mxu0 0
        %3450 = vmatmul.mubr.bf16.gmra.mrb[0].mxu0 %v2900
        %v3451 = vpop.f32.mrb[0].mxu0
        %v3452 = vadd.f32 0.0, %v3451
        %v3453 = vpop.f32.mrb[0].mxu0
        %v3454 = vpop.f32.mrb[0].mxu0
        %v3455 = vadd.f32 0.0, %v3454
        %v3456 = vpop.f32.mrb[0].mxu0
        %3457 = vmatprep.mubr.bf16.mxu0 0
        %3458 = vmatmul.mubr.bf16.gmra.mrb[0].mxu0 %v2901
        %v3459 = vpop.f32.mrb[0].mxu0
        %v3460 = vadd.f32 0.0, %v3459
        %v3461 = vpop.f32.mrb[0].mxu0
        %v3462 = vpop.f32.mrb[0].mxu0
        %v3463 = vadd.f32 0.0, %v3462
        %v3464 = vpop.f32.mrb[0].mxu0
        %3465 = vmatprep.mubr.bf16.mxu0 0
        %3466 = vmatmul.mubr.bf16.gmra.mrb[0].mxu0 %v2902
        %v3467 = vpop.f32.mrb[0].mxu0
        %v3468 = vadd.f32 0.0, %v3467
        %v3469 = vpop.f32.mrb[0].mxu0
        %v3470 = vpop.f32.mrb[0].mxu0
        %v3471 = vadd.f32 0.0, %v3470
        %v3472 = vpop.f32.mrb[0].mxu0
        %3473 = vmatprep.mubr.bf16.mxu0 0
        %3474 = vmatmul.mubr.bf16.gmra.mrb[0].mxu0 %v2903
        %v3475 = vpop.f32.mrb[0].mxu0
        %v3476 = vadd.f32 0.0, %v3475
        %v3477 = vpop.f32.mrb[0].mxu0
        %v3478 = vpop.f32.mrb[0].mxu0
        %v3479 = vadd.f32 0.0, %v3478
        %v3480 = vpop.f32.mrb[0].mxu0
        %3481 = vmatprep.mubr.bf16.mxu0 0
        %3482 = vmatmul.mubr.bf16.gmra.mrb[0].mxu0 %v2904
        %v3483 = vpop.f32.mrb[0].mxu0
        %v3484 = vadd.f32 0.0, %v3483
        %v3485 = vpop.f32.mrb[0].mxu0
        %v3486 = vpop.f32.mrb[0].mxu0
        %v3487 = vadd.f32 0.0, %v3486
        %v3488 = vpop.f32.mrb[0].mxu0
        %3489 = vmatprep.mubr.bf16.mxu0 0
        %3490 = vmatmul.mubr.bf16.gmra.mrb[0].mxu0 %v2905
        %v3491 = vpop.f32.mrb[0].mxu0
        %v3492 = vadd.f32 0.0, %v3491
        %v3493 = vpop.f32.mrb[0].mxu0
        %v3494 = vpop.f32.mrb[0].mxu0
        %v3495 = vadd.f32 0.0, %v3494
        %v3496 = vpop.f32.mrb[0].mxu0
        %3497 = vmatprep.mubr.bf16.mxu0 0
        %3498 = vmatmul.mubr.bf16.gmra.mrb[0].mxu0 %v2906
        %v3499 = vpop.f32.mrb[0].mxu0
        %v3500 = vadd.f32 0.0, %v3499
        %v3501 = vpop.f32.mrb[0].mxu0
        %v3502 = vpop.f32.mrb[0].mxu0
        %v3503 = vadd.f32 0.0, %v3502
        %v3504 = vpop.f32.mrb[0].mxu0
        %3505 = vmatprep.mubr.bf16.mxu0 0
        %3506 = vmatmul.mubr.bf16.gmra.mrb[0].mxu0 %v2907
        %v3507 = vpop.f32.mrb[0].mxu0
        %v3508 = vadd.f32 0.0, %v3507
        %v3509 = vpop.f32.mrb[0].mxu0
        %v3510 = vpop.f32.mrb[0].mxu0
        %v3511 = vadd.f32 0.0, %v3510
        %v3512 = vpop.f32.mrb[0].mxu0
        %3513 = vmatprep.mubr.bf16.mxu0 0
        %3514 = vmatmul.mubr.bf16.gmra.mrb[0].mxu0 %v2908
        %v3515 = vpop.f32.mrb[0].mxu0
        %v3516 = vadd.f32 0.0, %v3515
        %v3517 = vpop.f32.mrb[0].mxu0
        %v3518 = vpop.f32.mrb[0].mxu0
        %v3519 = vadd.f32 0.0, %v3518
        %v3520 = vpop.f32.mrb[0].mxu0
        %3521 = vmatprep.mubr.bf16.mxu0 0
        %3522 = vmatmul.mubr.bf16.gmra.mrb[0].mxu0 %v2909
        %v3523 = vpop.f32.mrb[0].mxu0
        %v3524 = vadd.f32 0.0, %v3523
        %v3525 = vpop.f32.mrb[0].mxu0
        %v3526 = vpop.f32.mrb[0].mxu0
        %v3527 = vadd.f32 0.0, %v3526
        %v3528 = vpop.f32.mrb[0].mxu0
        %3529 = vmatprep.mubr.bf16.mxu0 0
        %3530 = vmatmul.mubr.bf16.gmra.mrb[0].mxu0 %v2910
        %v3531 = vpop.f32.mrb[0].mxu0
        %v3532 = vadd.f32 0.0, %v3531
        %v3533 = vpop.f32.mrb[0].mxu0
        %v3534 = vpop.f32.mrb[0].mxu0
        %v3535 = vadd.f32 0.0, %v3534
        %v3536 = vpop.f32.mrb[0].mxu0
        %3537 = vmatprep.mubr.bf16.mxu0 0
        %3538 = vmatmul.mubr.bf16.gmra.mrb[0].mxu0 %v2911
        %v3539 = vpop.f32.mrb[0].mxu0
        %v3540 = vadd.f32 0.0, %v3539
        %v3541 = vpop.f32.mrb[0].mxu0
        %v3542 = vpop.f32.mrb[0].mxu0
        %v3543 = vadd.f32 0.0, %v3542
        %v3544 = vpop.f32.mrb[0].mxu0
        %3545 = vdwg.mxu0
        %v3546 = vadd.f32 %v2675, %v3099
        %v3547 = vadd.f32 %v2676, %v3103
        %v3548 = vadd.f32 %v2677, %v3112
        %v3549 = vadd.f32 %v2678, %v3118
        %v3550 = vadd.f32 %v2679, %v3127
        %v3551 = vadd.f32 %v2680, %v3131
        %v3552 = vadd.f32 %v2681, %v3140
        %v3553 = vadd.f32 %v2682, %v3146
        %v3554 = vadd.f32 %v2683, %v3155
        %v3555 = vadd.f32 %v2684, %v3159
        %v3556 = vadd.f32 %v2685, %v3168
        %v3557 = vadd.f32 %v2686, %v3174
        %v3558 = vadd.f32 %v2687, %v3183
        %v3559 = vadd.f32 %v2688, %v3187
        %v3560 = vadd.f32 %v2689, %v3196
        %v3561 = vadd.f32 %v2690, %v3202
        %v3562 = vadd.f32 %v2691, %v3211
        %v3563 = vadd.f32 %v2692, %v3215
        %v3564 = vadd.f32 %v2693, %v3224
        %v3565 = vadd.f32 %v2694, %v3230
        %v3566 = vadd.f32 %v2695, %v3239
        %v3567 = vadd.f32 %v2696, %v3243
        %v3568 = vadd.f32 %v2697, %v3252
        %v3569 = vadd.f32 %v2698, %v3258
        %v3570 = vadd.f32 %v2699, %v3267
        %v3571 = vadd.f32 %v2700, %v3271
        %v3572 = vadd.f32 %v2701, %v3280
        %v3573 = vadd.f32 %v2702, %v3286
        %v3574 = vadd.f32 %v2703, %v3295
        %v3575 = vadd.f32 %v2704, %v3299
        %v3576 = vadd.f32 %v2705, %v3308
        %v3577 = vadd.f32 %v2706, %v3314
        %v3626 = vrot.slane %v3101, 1
        %v3627 = vrot.slane %v3105, 1
        %v3628 = vsel %vm1114, %v3626, %v3627
        %v3629 = vrot.slane %v3110, 1
        %v3630 = vsel %vm1114, %v3627, %v3629
        %v3631 = vrot.slane %v3114, 1
        %v3632 = vrot.slane %v3120, 1
        %v3633 = vsel %vm1114, %v3631, %v3632
        %v3634 = vrot.slane %v3123, 1
        %v3635 = vsel %vm1114, %v3632, %v3634
        %v3636 = vrot.slane %v3129, 1
        %v3637 = vrot.slane %v3133, 1
        %v3638 = vsel %vm1114, %v3636, %v3637
        %v3639 = vrot.slane %v3138, 1
        %v3640 = vsel %vm1114, %v3637, %v3639
        %v3641 = vrot.slane %v3142, 1
        %v3642 = vrot.slane %v3148, 1
        %v3643 = vsel %vm1114, %v3641, %v3642
        %v3644 = vrot.slane %v3151, 1
        %v3645 = vsel %vm1114, %v3642, %v3644
        %v3646 = vrot.slane %v3157, 1
        %v3647 = vrot.slane %v3161, 1
        %v3648 = vsel %vm1114, %v3646, %v3647
        %v3649 = vrot.slane %v3166, 1
        %v3650 = vsel %vm1114, %v3647, %v3649
        %v3651 = vrot.slane %v3170, 1
        %v3652 = vrot.slane %v3176, 1
        %v3653 = vsel %vm1114, %v3651, %v3652
        %v3654 = vrot.slane %v3179, 1
        %v3655 = vsel %vm1114, %v3652, %v3654
        %v3656 = vrot.slane %v3185, 1
        %v3657 = vrot.slane %v3189, 1
        %v3658 = vsel %vm1114, %v3656, %v3657
        %v3659 = vrot.slane %v3194, 1
        %v3660 = vsel %vm1114, %v3657, %v3659
        %v3661 = vrot.slane %v3198, 1
        %v3662 = vrot.slane %v3204, 1
        %v3663 = vsel %vm1114, %v3661, %v3662
        %v3664 = vrot.slane %v3207, 1
        %v3665 = vsel %vm1114, %v3662, %v3664
        %v3666 = vrot.slane %v3213, 1
        %v3667 = vrot.slane %v3217, 1
        %v3668 = vsel %vm1114, %v3666, %v3667
        %v3669 = vrot.slane %v3222, 1
        %v3670 = vsel %vm1114, %v3667, %v3669
        %v3671 = vrot.slane %v3226, 1
        %v3672 = vrot.slane %v3232, 1
        %v3673 = vsel %vm1114, %v3671, %v3672
        %v3674 = vrot.slane %v3235, 1
        %v3675 = vsel %vm1114, %v3672, %v3674
        %v3676 = vrot.slane %v3241, 1
        %v3677 = vrot.slane %v3245, 1
        %v3678 = vsel %vm1114, %v3676, %v3677
        %v3679 = vrot.slane %v3250, 1
        %v3680 = vsel %vm1114, %v3677, %v3679
        %v3681 = vrot.slane %v3254, 1
        %v3682 = vrot.slane %v3260, 1
        %v3683 = vsel %vm1114, %v3681, %v3682
        %v3684 = vrot.slane %v3263, 1
        %v3685 = vsel %vm1114, %v3682, %v3684
        %v3686 = vrot.slane %v3269, 1
        %v3687 = vrot.slane %v3273, 1
        %v3688 = vsel %vm1114, %v3686, %v3687
        %v3689 = vrot.slane %v3278, 1
        %v3690 = vsel %vm1114, %v3687, %v3689
        %v3691 = vrot.slane %v3282, 1
        %v3692 = vrot.slane %v3288, 1
        %v3693 = vsel %vm1114, %v3691, %v3692
        %v3694 = vrot.slane %v3291, 1
        %v3695 = vsel %vm1114, %v3692, %v3694
        %v3696 = vrot.slane %v3297, 1
        %v3697 = vrot.slane %v3301, 1
        %v3698 = vsel %vm1114, %v3696, %v3697
        %v3699 = vrot.slane %v3306, 1
        %v3700 = vsel %vm1114, %v3697, %v3699
        %v3701 = vrot.slane %v3310, 1
        %v3702 = vrot.slane %v3316, 1
        %v3703 = vsel %vm1114, %v3701, %v3702
        %v3704 = vrot.slane %v3319, 1
        %v3705 = vsel %vm1114, %v3702, %v3704
        %v3738 = vadd.f32 %v3546, %v3628
        %v3739 = vadd.f32 %v3547, %v3630
        %v3740 = vadd.f32 %v3548, %v3633
        %v3741 = vadd.f32 %v3549, %v3635
        %v3742 = vadd.f32 %v3550, %v3638
        %v3743 = vadd.f32 %v3551, %v3640
        %v3744 = vadd.f32 %v3552, %v3643
        %v3745 = vadd.f32 %v3553, %v3645
        %v3746 = vadd.f32 %v3554, %v3648
        %v3747 = vadd.f32 %v3555, %v3650
        %v3748 = vadd.f32 %v3556, %v3653
        %v3749 = vadd.f32 %v3557, %v3655
        %v3750 = vadd.f32 %v3558, %v3658
        %v3751 = vadd.f32 %v3559, %v3660
        %v3752 = vadd.f32 %v3560, %v3663
        %v3753 = vadd.f32 %v3561, %v3665
        %v3754 = vadd.f32 %v3562, %v3668
        %v3755 = vadd.f32 %v3563, %v3670
        %v3756 = vadd.f32 %v3564, %v3673
        %v3757 = vadd.f32 %v3565, %v3675
        %v3758 = vadd.f32 %v3566, %v3678
        %v3759 = vadd.f32 %v3567, %v3680
        %v3760 = vadd.f32 %v3568, %v3683
        %v3761 = vadd.f32 %v3569, %v3685
        %v3762 = vadd.f32 %v3570, %v3688
        %v3763 = vadd.f32 %v3571, %v3690
        %v3764 = vadd.f32 %v3572, %v3693
        %v3765 = vadd.f32 %v3573, %v3695
        %v3766 = vadd.f32 %v3574, %v3698
        %v3767 = vadd.f32 %v3575, %v3700
        %v3768 = vadd.f32 %v3576, %v3703
        %v3769 = vadd.f32 %v3577, %v3705
        %v3818 = vrot.slane %v3356, 2
        %v3819 = vrot.slane %v3359, 2
        %v3820 = vsel %vm1307, %v3818, %v3819
        %v3821 = vrot.slane %v3364, 2
        %v3822 = vsel %vm1307, %v3819, %v3821
        %v3823 = vrot.slane %v3367, 2
        %v3824 = vrot.slane %v3372, 2
        %v3825 = vsel %vm1307, %v3823, %v3824
        %v3826 = vrot.slane %v3375, 2
        %v3827 = vsel %vm1307, %v3824, %v3826
        %v3828 = vrot.slane %v3380, 2
        %v3829 = vrot.slane %v3383, 2
        %v3830 = vsel %vm1307, %v3828, %v3829
        %v3831 = vrot.slane %v3388, 2
        %v3832 = vsel %vm1307, %v3829, %v3831
        %v3833 = vrot.slane %v3391, 2
        %v3834 = vrot.slane %v3396, 2
        %v3835 = vsel %vm1307, %v3833, %v3834
        %v3836 = vrot.slane %v3399, 2
        %v3837 = vsel %vm1307, %v3834, %v3836
        %v3838 = vrot.slane %v3404, 2
        %v3839 = vrot.slane %v3407, 2
        %v3840 = vsel %vm1307, %v3838, %v3839
        %v3841 = vrot.slane %v3412, 2
        %v3842 = vsel %vm1307, %v3839, %v3841
        %v3843 = vrot.slane %v3415, 2
        %v3844 = vrot.slane %v3420, 2
        %v3845 = vsel %vm1307, %v3843, %v3844
        %v3846 = vrot.slane %v3423, 2
        %v3847 = vsel %vm1307, %v3844, %v3846
        %v3848 = vrot.slane %v3428, 2
        %v3849 = vrot.slane %v3431, 2
        %v3850 = vsel %vm1307, %v3848, %v3849
        %v3851 = vrot.slane %v3436, 2
        %v3852 = vsel %vm1307, %v3849, %v3851
        %v3853 = vrot.slane %v3439, 2
        %v3854 = vrot.slane %v3444, 2
        %v3855 = vsel %vm1307, %v3853, %v3854
        %v3856 = vrot.slane %v3447, 2
        %v3857 = vsel %vm1307, %v3854, %v3856
        %v3858 = vrot.slane %v3452, 2
        %v3859 = vrot.slane %v3455, 2
        %v3860 = vsel %vm1307, %v3858, %v3859
        %v3861 = vrot.slane %v3460, 2
        %v3862 = vsel %vm1307, %v3859, %v3861
        %v3863 = vrot.slane %v3463, 2
        %v3864 = vrot.slane %v3468, 2
        %v3865 = vsel %vm1307, %v3863, %v3864
        %v3866 = vrot.slane %v3471, 2
        %v3867 = vsel %vm1307, %v3864, %v3866
        %v3868 = vrot.slane %v3476, 2
        %v3869 = vrot.slane %v3479, 2
        %v3870 = vsel %vm1307, %v3868, %v3869
        %v3871 = vrot.slane %v3484, 2
        %v3872 = vsel %vm1307, %v3869, %v3871
        %v3873 = vrot.slane %v3487, 2
        %v3874 = vrot.slane %v3492, 2
        %v3875 = vsel %vm1307, %v3873, %v3874
        %v3876 = vrot.slane %v3495, 2
        %v3877 = vsel %vm1307, %v3874, %v3876
        %v3878 = vrot.slane %v3500, 2
        %v3879 = vrot.slane %v3503, 2
        %v3880 = vsel %vm1307, %v3878, %v3879
        %v3881 = vrot.slane %v3508, 2
        %v3882 = vsel %vm1307, %v3879, %v3881
        %v3883 = vrot.slane %v3511, 2
        %v3884 = vrot.slane %v3516, 2
        %v3885 = vsel %vm1307, %v3883, %v3884
        %v3886 = vrot.slane %v3519, 2
        %v3887 = vsel %vm1307, %v3884, %v3886
        %v3888 = vrot.slane %v3524, 2
        %v3889 = vrot.slane %v3527, 2
        %v3890 = vsel %vm1307, %v3888, %v3889
        %v3891 = vrot.slane %v3532, 2
        %v3892 = vsel %vm1307, %v3889, %v3891
        %v3893 = vrot.slane %v3535, 2
        %v3894 = vrot.slane %v3540, 2
        %v3895 = vsel %vm1307, %v3893, %v3894
        %v3896 = vrot.slane %v3543, 2
        %v3897 = vsel %vm1307, %v3894, %v3896
        %v3930 = vadd.f32 %v3738, %v3820
        %v3931 = vadd.f32 %v3739, %v3822
        %v3932 = vadd.f32 %v3740, %v3825
        %v3933 = vadd.f32 %v3741, %v3827
        %v3934 = vadd.f32 %v3742, %v3830
        %v3935 = vadd.f32 %v3743, %v3832
        %v3936 = vadd.f32 %v3744, %v3835
        %v3937 = vadd.f32 %v3745, %v3837
        %v3938 = vadd.f32 %v3746, %v3840
        %v3939 = vadd.f32 %v3747, %v3842
        %v3940 = vadd.f32 %v3748, %v3845
        %v3941 = vadd.f32 %v3749, %v3847
        %v3942 = vadd.f32 %v3750, %v3850
        %v3943 = vadd.f32 %v3751, %v3852
        %v3944 = vadd.f32 %v3752, %v3855
        %v3945 = vadd.f32 %v3753, %v3857
        %v3946 = vadd.f32 %v3754, %v3860
        %v3947 = vadd.f32 %v3755, %v3862
        %v3948 = vadd.f32 %v3756, %v3865
        %v3949 = vadd.f32 %v3757, %v3867
        %v3950 = vadd.f32 %v3758, %v3870
        %v3951 = vadd.f32 %v3759, %v3872
        %v3952 = vadd.f32 %v3760, %v3875
        %v3953 = vadd.f32 %v3761, %v3877
        %v3954 = vadd.f32 %v3762, %v3880
        %v3955 = vadd.f32 %v3763, %v3882
        %v3956 = vadd.f32 %v3764, %v3885
        %v3957 = vadd.f32 %v3765, %v3887
        %v3958 = vadd.f32 %v3766, %v3890
        %v3959 = vadd.f32 %v3767, %v3892
        %v3960 = vadd.f32 %v3768, %v3895
        %v3961 = vadd.f32 %v3769, %v3897
        %s3962 = smul.u32 %s190, 16
        %s3963 = scalar_lea.vmem %s188, %s3962 [#allocation9]
        %3964 = vst [vmem:[%s3963] sm:$0xff] %v3930
        %3965 = vst [vmem:[%s3963 + $0x8] sm:$0xff] %v3931
        %3966 = vst [vmem:[%s3963 + $0x10] sm:$0xff] %v3932
        %3967 = vst [vmem:[%s3963 + $0x18] sm:$0xff] %v3933
        %3968 = vst [vmem:[%s3963 + $0x20] sm:$0xff] %v3934
        %3969 = vst [vmem:[%s3963 + $0x28] sm:$0xff] %v3935
        %3970 = vst [vmem:[%s3963 + $0x30] sm:$0xff] %v3936
        %3971 = vst [vmem:[%s3963 + $0x38] sm:$0xff] %v3937
        %3972 = vst [vmem:[%s3963 + $0x40] sm:$0xff] %v3938
        %3973 = vst [vmem:[%s3963 + $0x48] sm:$0xff] %v3939
        %3974 = vst [vmem:[%s3963 + $0x50] sm:$0xff] %v3940
        %3975 = vst [vmem:[%s3963 + $0x58] sm:$0xff] %v3941
        %3976 = vst [vmem:[%s3963 + $0x60] sm:$0xff] %v3942
        %3977 = vst [vmem:[%s3963 + $0x68] sm:$0xff] %v3943
        %3978 = vst [vmem:[%s3963 + $0x70] sm:$0xff] %v3944
        %3979 = vst [vmem:[%s3963 + $0x78] sm:$0xff] %v3945
        %3980 = vst [vmem:[%s3963 + $0x80] sm:$0xff] %v3946
        %3981 = vst [vmem:[%s3963 + $0x88] sm:$0xff] %v3947
        %3982 = vst [vmem:[%s3963 + $0x90] sm:$0xff] %v3948
        %3983 = vst [vmem:[%s3963 + $0x98] sm:$0xff] %v3949
        %3984 = vst [vmem:[%s3963 + $0xa0] sm:$0xff] %v3950
        %3985 = vst [vmem:[%s3963 + $0xa8] sm:$0xff] %v3951
        %3986 = vst [vmem:[%s3963 + $0xb0] sm:$0xff] %v3952
        %3987 = vst [vmem:[%s3963 + $0xb8] sm:$0xff] %v3953
        %3988 = vst [vmem:[%s3963 + $0xc0] sm:$0xff] %v3954
        %3989 = vst [vmem:[%s3963 + $0xc8] sm:$0xff] %v3955
        %3990 = vst [vmem:[%s3963 + $0xd0] sm:$0xff] %v3956
        %3991 = vst [vmem:[%s3963 + $0xd8] sm:$0xff] %v3957
        %3992 = vst [vmem:[%s3963 + $0xe0] sm:$0xff] %v3958
        %3993 = vst [vmem:[%s3963 + $0xe8] sm:$0xff] %v3959
        %3994 = vst [vmem:[%s3963 + $0xf0] sm:$0xff] %v3960
        %3995 = vst [vmem:[%s3963 + $0xf8] sm:$0xff] %v3961
        %v3996 = vld [vmem:[#allocation2] sm:$0x1]
        %v3997 = vadd.f32 %v3930, %v3931
        %v3998 = vadd.f32 %v3997, %v3932
        %v3999 = vadd.f32 %v3998, %v3933
        %v4000 = vadd.f32 %v3999, %v3934
        %v4001 = vadd.f32 %v4000, %v3935
        %v4002 = vadd.f32 %v4001, %v3936
        %v4003 = vadd.f32 %v4002, %v3937
        %v4004 = vadd.f32 %v4003, %v3938
        %v4005 = vadd.f32 %v4004, %v3939
        %v4006 = vadd.f32 %v4005, %v3940
        %v4007 = vadd.f32 %v4006, %v3941
        %v4008 = vadd.f32 %v4007, %v3942
        %v4009 = vadd.f32 %v4008, %v3943
        %v4010 = vadd.f32 %v4009, %v3944
        %v4011 = vadd.f32 %v4010, %v3945
        %v4012 = vadd.f32 %v4011, %v3946
        %v4013 = vadd.f32 %v4012, %v3947
        %v4014 = vadd.f32 %v4013, %v3948
        %v4015 = vadd.f32 %v4014, %v3949
        %v4016 = vadd.f32 %v4015, %v3950
        %v4017 = vadd.f32 %v4016, %v3951
        %v4018 = vadd.f32 %v4017, %v3952
        %v4019 = vadd.f32 %v4018, %v3953
        %v4020 = vadd.f32 %v4019, %v3954
        %v4021 = vadd.f32 %v4020, %v3955
        %v4022 = vadd.f32 %v4021, %v3956
        %v4023 = vadd.f32 %v4022, %v3957
        %v4024 = vadd.f32 %v4023, %v3958
        %v4025 = vadd.f32 %v4024, %v3959
        %v4026 = vadd.f32 %v4025, %v3960
        %v4027 = vadd.f32 %v4026, %v3961
        %v4028 = vrot.slane %v4027, 4
        %v4029 = vadd.f32 %v4027, %v4028
        %v4030 = vrot.slane %v4029, 2
        %v4031 = vadd.f32 %v4029, %v4030
        %v4032 = vrot.slane %v4031, 1
        %v4033 = vadd.f32 %v4031, %v4032
        %v4034 = vadd.f32 %v3996, %v4033
        %4035 = vst [vmem:[#allocation2] sm:$0x1] %v4034
        %v4036 = vld [vmem:[#allocation3] sm:$0x1]
        %v4037 = vmul.f32 %v3930, %v3930
        %v4038 = vmul.f32 %v3931, %v3931
        %v4039 = vmul.f32 %v3932, %v3932
        %v4040 = vmul.f32 %v3933, %v3933
        %v4041 = vmul.f32 %v3934, %v3934
        %v4042 = vmul.f32 %v3935, %v3935
        %v4043 = vmul.f32 %v3936, %v3936
        %v4044 = vmul.f32 %v3937, %v3937
        %v4045 = vmul.f32 %v3938, %v3938
        %v4046 = vmul.f32 %v3939, %v3939
        %v4047 = vmul.f32 %v3940, %v3940
        %v4048 = vmul.f32 %v3941, %v3941
        %v4049 = vmul.f32 %v3942, %v3942
        %v4050 = vmul.f32 %v3943, %v3943
        %v4051 = vmul.f32 %v3944, %v3944
        %v4052 = vmul.f32 %v3945, %v3945
        %v4053 = vmul.f32 %v3946, %v3946
        %v4054 = vmul.f32 %v3947, %v3947
        %v4055 = vmul.f32 %v3948, %v3948
        %v4056 = vmul.f32 %v3949, %v3949
        %v4057 = vmul.f32 %v3950, %v3950
        %v4058 = vmul.f32 %v3951, %v3951
        %v4059 = vmul.f32 %v3952, %v3952
        %v4060 = vmul.f32 %v3953, %v3953
        %v4061 = vmul.f32 %v3954, %v3954
        %v4062 = vmul.f32 %v3955, %v3955
        %v4063 = vmul.f32 %v3956, %v3956
        %v4064 = vmul.f32 %v3957, %v3957
        %v4065 = vmul.f32 %v3958, %v3958
        %v4066 = vmul.f32 %v3959, %v3959
        %v4067 = vmul.f32 %v3960, %v3960
        %v4068 = vmul.f32 %v3961, %v3961
        %v4069 = vadd.f32 %v4037, %v4038
        %v4070 = vadd.f32 %v4069, %v4039
        %v4071 = vadd.f32 %v4070, %v4040
        %v4072 = vadd.f32 %v4071, %v4041
        %v4073 = vadd.f32 %v4072, %v4042
        %v4074 = vadd.f32 %v4073, %v4043
        %v4075 = vadd.f32 %v4074, %v4044
        %v4076 = vadd.f32 %v4075, %v4045
        %v4077 = vadd.f32 %v4076, %v4046
        %v4078 = vadd.f32 %v4077, %v4047
        %v4079 = vadd.f32 %v4078, %v4048
        %v4080 = vadd.f32 %v4079, %v4049
        %v4081 = vadd.f32 %v4080, %v4050
        %v4082 = vadd.f32 %v4081, %v4051
        %v4083 = vadd.f32 %v4082, %v4052
        %v4084 = vadd.f32 %v4083, %v4053
        %v4085 = vadd.f32 %v4084, %v4054
        %v4086 = vadd.f32 %v4085, %v4055
        %v4087 = vadd.f32 %v4086, %v4056
        %v4088 = vadd.f32 %v4087, %v4057
        %v4089 = vadd.f32 %v4088, %v4058
        %v4090 = vadd.f32 %v4089, %v4059
        %v4091 = vadd.f32 %v4090, %v4060
        %v4092 = vadd.f32 %v4091, %v4061
        %v4093 = vadd.f32 %v4092, %v4062
        %v4094 = vadd.f32 %v4093, %v4063
        %v4095 = vadd.f32 %v4094, %v4064
        %v4096 = vadd.f32 %v4095, %v4065
        %v4097 = vadd.f32 %v4096, %v4066
        %v4098 = vadd.f32 %v4097, %v4067
        %v4099 = vadd.f32 %v4098, %v4068
        %v4100 = vrot.slane %v4099, 4
        %v4101 = vadd.f32 %v4099, %v4100
        %v4102 = vrot.slane %v4101, 2
        %v4103 = vadd.f32 %v4101, %v4102
        %v4104 = vrot.slane %v4103, 1
        %v4105 = vadd.f32 %v4103, %v4104
        %v4106 = vadd.f32 %v4036, %v4105
        %4107 = vst [vmem:[#allocation3] sm:$0x1] %v4106
        // Predicated region
        $region41: #{tpu_custom_call.1} parent=27 // pred_check
          %p4108 = pneg %p191
        $region42: #{tpu_custom_call.1} parent=27 // pred_check_branch
          %4110 = sbr.rel (%p4108) target = $region44
        $region43: #{tpu_custom_call.1} parent=27 // pred_region
          %v4111 = vld [vmem:[#allocation2] sm:$0x1]
          %v4112 = vrcp.pop 256.0
          %v4113 = vmul.f32 %v4111, %v4112
          %v4114 = vld [vmem:[#allocation3] sm:$0x1]
          %v4115 = vmul.f32 %v4114, %v4112
          %v4116 = vmul.f32 %v4113, %v4113
          %v4117 = vsub.f32 %v4115, %v4116
          %v4118 = vmax.f32 %v4117, 0.0
          %v4119 = vadd.f32 %v4118, 1e-05
          %v4120 = vrsqrt.pop %v4119
          %v4121 = vsub.f32 0.0, %v4113
          %v4122 = vmul.f32 %v4121, %v4120
          %v4123 = vld [vmem:[%s188] sm:$0xff]
          %v4124 = vld [vmem:[%s188 + $0x8] sm:$0xff]
          %v4125 = vld [vmem:[%s188 + $0x10] sm:$0xff]
          %v4126 = vld [vmem:[%s188 + $0x18] sm:$0xff]
          %v4127 = vld [vmem:[%s188 + $0x20] sm:$0xff]
          %v4128 = vld [vmem:[%s188 + $0x28] sm:$0xff]
          %v4129 = vld [vmem:[%s188 + $0x30] sm:$0xff]
          %v4130 = vld [vmem:[%s188 + $0x38] sm:$0xff]
          %v4131 = vld [vmem:[%s188 + $0x40] sm:$0xff]
          %v4132 = vld [vmem:[%s188 + $0x48] sm:$0xff]
          %v4133 = vld [vmem:[%s188 + $0x50] sm:$0xff]
          %v4134 = vld [vmem:[%s188 + $0x58] sm:$0xff]
          %v4135 = vld [vmem:[%s188 + $0x60] sm:$0xff]
          %v4136 = vld [vmem:[%s188 + $0x68] sm:$0xff]
          %v4137 = vld [vmem:[%s188 + $0x70] sm:$0xff]
          %v4138 = vld [vmem:[%s188 + $0x78] sm:$0xff]
          %v4139 = vld [vmem:[%s188 + $0x80] sm:$0xff]
          %v4140 = vld [vmem:[%s188 + $0x88] sm:$0xff]
          %v4141 = vld [vmem:[%s188 + $0x90] sm:$0xff]
          %v4142 = vld [vmem:[%s188 + $0x98] sm:$0xff]
          %v4143 = vld [vmem:[%s188 + $0xa0] sm:$0xff]
          %v4144 = vld [vmem:[%s188 + $0xa8] sm:$0xff]
          %v4145 = vld [vmem:[%s188 + $0xb0] sm:$0xff]
          %v4146 = vld [vmem:[%s188 + $0xb8] sm:$0xff]
          %v4147 = vld [vmem:[%s188 + $0xc0] sm:$0xff]
          %v4148 = vld [vmem:[%s188 + $0xc8] sm:$0xff]
          %v4149 = vld [vmem:[%s188 + $0xd0] sm:$0xff]
          %v4150 = vld [vmem:[%s188 + $0xd8] sm:$0xff]
          %v4151 = vld [vmem:[%s188 + $0xe0] sm:$0xff]
          %v4152 = vld [vmem:[%s188 + $0xe8] sm:$0xff]
          %v4153 = vld [vmem:[%s188 + $0xf0] sm:$0xff]
          %v4154 = vld [vmem:[%s188 + $0xf8] sm:$0xff]
          %v4156 = vlaneseq
          %v4157 = vshrl.u32 %v4156, 7
          %v4158 = vsub.s32 0, %v4157
          %v4159 = vrot.slane %v4120, %v4158
          %v4161 = vmul.f32 %v4123, %v4159
          %v4162 = vmul.f32 %v4124, %v4159
          %v4163 = vmul.f32 %v4125, %v4159
          %v4164 = vmul.f32 %v4126, %v4159
          %v4165 = vmul.f32 %v4127, %v4159
          %v4166 = vmul.f32 %v4128, %v4159
          %v4167 = vmul.f32 %v4129, %v4159
          %v4168 = vmul.f32 %v4130, %v4159
          %v4169 = vmul.f32 %v4131, %v4159
          %v4170 = vmul.f32 %v4132, %v4159
          %v4171 = vmul.f32 %v4133, %v4159
          %v4172 = vmul.f32 %v4134, %v4159
          %v4173 = vmul.f32 %v4135, %v4159
          %v4174 = vmul.f32 %v4136, %v4159
          %v4175 = vmul.f32 %v4137, %v4159
          %v4176 = vmul.f32 %v4138, %v4159
          %v4177 = vmul.f32 %v4139, %v4159
          %v4178 = vmul.f32 %v4140, %v4159
          %v4179 = vmul.f32 %v4141, %v4159
          %v4180 = vmul.f32 %v4142, %v4159
          %v4181 = vmul.f32 %v4143, %v4159
          %v4182 = vmul.f32 %v4144, %v4159
          %v4183 = vmul.f32 %v4145, %v4159
          %v4184 = vmul.f32 %v4146, %v4159
          %v4185 = vmul.f32 %v4147, %v4159
          %v4186 = vmul.f32 %v4148, %v4159
          %v4187 = vmul.f32 %v4149, %v4159
          %v4188 = vmul.f32 %v4150, %v4159
          %v4189 = vmul.f32 %v4151, %v4159
          %v4190 = vmul.f32 %v4152, %v4159
          %v4191 = vmul.f32 %v4153, %v4159
          %v4192 = vmul.f32 %v4154, %v4159
          %v4194 = vlaneseq
          %v4195 = vshrl.u32 %v4194, 7
          %v4196 = vsub.s32 0, %v4195
          %v4197 = vrot.slane %v4122, %v4196
          %v4199 = vadd.f32 %v4161, %v4197
          %v4200 = vadd.f32 %v4162, %v4197
          %v4201 = vadd.f32 %v4163, %v4197
          %v4202 = vadd.f32 %v4164, %v4197
          %v4203 = vadd.f32 %v4165, %v4197
          %v4204 = vadd.f32 %v4166, %v4197
          %v4205 = vadd.f32 %v4167, %v4197
          %v4206 = vadd.f32 %v4168, %v4197
          %v4207 = vadd.f32 %v4169, %v4197
          %v4208 = vadd.f32 %v4170, %v4197
          %v4209 = vadd.f32 %v4171, %v4197
          %v4210 = vadd.f32 %v4172, %v4197
          %v4211 = vadd.f32 %v4173, %v4197
          %v4212 = vadd.f32 %v4174, %v4197
          %v4213 = vadd.f32 %v4175, %v4197
          %v4214 = vadd.f32 %v4176, %v4197
          %v4215 = vadd.f32 %v4177, %v4197
          %v4216 = vadd.f32 %v4178, %v4197
          %v4217 = vadd.f32 %v4179, %v4197
          %v4218 = vadd.f32 %v4180, %v4197
          %v4219 = vadd.f32 %v4181, %v4197
          %v4220 = vadd.f32 %v4182, %v4197
          %v4221 = vadd.f32 %v4183, %v4197
          %v4222 = vadd.f32 %v4184, %v4197
          %v4223 = vadd.f32 %v4185, %v4197
          %v4224 = vadd.f32 %v4186, %v4197
          %v4225 = vadd.f32 %v4187, %v4197
          %v4226 = vadd.f32 %v4188, %v4197
          %v4227 = vadd.f32 %v4189, %v4197
          %v4228 = vadd.f32 %v4190, %v4197
          %v4229 = vadd.f32 %v4191, %v4197
          %v4230 = vadd.f32 %v4192, %v4197
          %v4231 = vmax.f32 %v4199, 0.0
          %v4232 = vmax.f32 %v4200, 0.0
          %v4233 = vmax.f32 %v4201, 0.0
          %v4234 = vmax.f32 %v4202, 0.0
          %v4235 = vmax.f32 %v4203, 0.0
          %v4236 = vmax.f32 %v4204, 0.0
          %v4237 = vmax.f32 %v4205, 0.0
          %v4238 = vmax.f32 %v4206, 0.0
          %v4239 = vmax.f32 %v4207, 0.0
          %v4240 = vmax.f32 %v4208, 0.0
          %v4241 = vmax.f32 %v4209, 0.0
          %v4242 = vmax.f32 %v4210, 0.0
          %v4243 = vmax.f32 %v4211, 0.0
          %v4244 = vmax.f32 %v4212, 0.0
          %v4245 = vmax.f32 %v4213, 0.0
          %v4246 = vmax.f32 %v4214, 0.0
          %v4247 = vmax.f32 %v4215, 0.0
          %v4248 = vmax.f32 %v4216, 0.0
          %v4249 = vmax.f32 %v4217, 0.0
          %v4250 = vmax.f32 %v4218, 0.0
          %v4251 = vmax.f32 %v4219, 0.0
          %v4252 = vmax.f32 %v4220, 0.0
          %v4253 = vmax.f32 %v4221, 0.0
          %v4254 = vmax.f32 %v4222, 0.0
          %v4255 = vmax.f32 %v4223, 0.0
          %v4256 = vmax.f32 %v4224, 0.0
          %v4257 = vmax.f32 %v4225, 0.0
          %v4258 = vmax.f32 %v4226, 0.0
          %v4259 = vmax.f32 %v4227, 0.0
          %v4260 = vmax.f32 %v4228, 0.0
          %v4261 = vmax.f32 %v4229, 0.0
          %v4262 = vmax.f32 %v4230, 0.0
          %4263 = vst [vmem:[%s188] sm:$0xff] %v4231
          %4264 = vst [vmem:[%s188 + $0x8] sm:$0xff] %v4232
          %4265 = vst [vmem:[%s188 + $0x10] sm:$0xff] %v4233
          %4266 = vst [vmem:[%s188 + $0x18] sm:$0xff] %v4234
          %4267 = vst [vmem:[%s188 + $0x20] sm:$0xff] %v4235
          %4268 = vst [vmem:[%s188 + $0x28] sm:$0xff] %v4236
          %4269 = vst [vmem:[%s188 + $0x30] sm:$0xff] %v4237
          %4270 = vst [vmem:[%s188 + $0x38] sm:$0xff] %v4238
          %4271 = vst [vmem:[%s188 + $0x40] sm:$0xff] %v4239
          %4272 = vst [vmem:[%s188 + $0x48] sm:$0xff] %v4240
          %4273 = vst [vmem:[%s188 + $0x50] sm:$0xff] %v4241
          %4274 = vst [vmem:[%s188 + $0x58] sm:$0xff] %v4242
          %4275 = vst [vmem:[%s188 + $0x60] sm:$0xff] %v4243
          %4276 = vst [vmem:[%s188 + $0x68] sm:$0xff] %v4244
          %4277 = vst [vmem:[%s188 + $0x70] sm:$0xff] %v4245
          %4278 = vst [vmem:[%s188 + $0x78] sm:$0xff] %v4246
          %4279 = vst [vmem:[%s188 + $0x80] sm:$0xff] %v4247
          %4280 = vst [vmem:[%s188 + $0x88] sm:$0xff] %v4248
          %4281 = vst [vmem:[%s188 + $0x90] sm:$0xff] %v4249
          %4282 = vst [vmem:[%s188 + $0x98] sm:$0xff] %v4250
          %4283 = vst [vmem:[%s188 + $0xa0] sm:$0xff] %v4251
          %4284 = vst [vmem:[%s188 + $0xa8] sm:$0xff] %v4252
          %4285 = vst [vmem:[%s188 + $0xb0] sm:$0xff] %v4253
          %4286 = vst [vmem:[%s188 + $0xb8] sm:$0xff] %v4254
          %4287 = vst [vmem:[%s188 + $0xc0] sm:$0xff] %v4255
          %4288 = vst [vmem:[%s188 + $0xc8] sm:$0xff] %v4256
          %4289 = vst [vmem:[%s188 + $0xd0] sm:$0xff] %v4257
          %4290 = vst [vmem:[%s188 + $0xd8] sm:$0xff] %v4258
          %4291 = vst [vmem:[%s188 + $0xe0] sm:$0xff] %v4259
          %4292 = vst [vmem:[%s188 + $0xe8] sm:$0xff] %v4260
          %4293 = vst [vmem:[%s188 + $0xf0] sm:$0xff] %v4261
          %4294 = vst [vmem:[%s188 + $0xf8] sm:$0xff] %v4262
        $region44: #{tpu_custom_call.1} parent=27 // pred_fallthru
          _
        %s4295 = sand.u32 %s87, 1
        %s4296 = scalar_lea.sflag [#allocation6], %s4295
        %s4297 = sand.u32 %s87, 1
        %s4298 = smul.addr %s4297, 256
        %s4299 = scalar_lea.vmem [#allocation9], %s4298
        // Predicated region
        $region45: #{tpu_custom_call.1} parent=27 // pred_check
          %p4300 = pneg %p97
        $region46: #{tpu_custom_call.1} parent=27 // pred_check_branch
          %4302 = sbr.rel (%p4300) target = $region48
        $region47: #{tpu_custom_call.1} parent=27 // pred_region
          %s4304 = ssub.s32 4096, 4096
          %4305 = vsyncadd %s4296, %s4304
          %s4306 = smul.addr %s24, 32
          %s4307 = smul.addr %s4306, 128
          %s4308 = scalar_lea.hbm %s2, %s4307
          %s4309 = sshll.u32 %s4299, 4
          %s4310 = int_to_ptr.vmem [resolvable:$true] %s4309
          %4315 = dma.vmem_to_hbm [thread:$0]  %s4310, 4096, %s4308, %s4296, 128, 128, 8
        $region48: #{tpu_custom_call.1} parent=27 // pred_fallthru
          _
      $region28: #{tpu_custom_call.1} parent=5 // pred_fallthru
        _
      %p4316 = scmp.le.s32.totalorder 2, %s15
      // Predicated region
      $region49: #{tpu_custom_call.1} parent=5 // pred_check
        %p4317 = pneg %p4316
      $region50: #{tpu_custom_call.1} parent=5 // pred_check_branch
        %4319 = sbr.rel (%p4317) target = $region52
      $region51: #{tpu_custom_call.1} parent=5 // pred_region
        %s4320 = ssub.s32 %s15, 2
        // Predicated region
        $region53: #{tpu_custom_call.1} parent=51 // pred_check
          %p4321 = pneg %p103
        $region54: #{tpu_custom_call.1} parent=51 // pred_check_branch
          %4323 = sbr.rel (%p4321) target = $region56
        $region55: #{tpu_custom_call.1} parent=51 // pred_region
          %s4324 = sand.u32 %s88, 1
          %s4325 = scalar_lea.sflag [#allocation6], %s4324
          %s4326 = sand.u32 %s88, 1
          %s4327 = smul.addr %s4326, 256
          %s4328 = scalar_lea.vmem [#allocation9], %s4327
          %4329 = dma.done %s4325, 4096
        $region56: #{tpu_custom_call.1} parent=51 // pred_fallthru
          _
      $region52: #{tpu_custom_call.1} parent=5 // pred_fallthru
        _
    $region6: #{tpu_custom_call.1} parent=1 // loop_footer
      %s19 = sadd.s32 1, %s15
    $region7: #{tpu_custom_call.1} parent=1 // loop_footer_branch
      %14 = sbr.rel target = $region3
    $region8: #{tpu_custom_call.1} parent=1 // loop_exit
      _
    %4330 = vsyncpa [#allocation5], 1
    %s4331 = scalar_lea.sflag [#allocation5], 1
    %4332 = vsyncpa %s4331, 1
    %4333 = vsyncpa [#allocation8], 1
    %4334 = vsyncpa [#allocation6], 1
    %s4335 = scalar_lea.sflag [#allocation6], 1
    %4336 = vsyncpa %s4335, 1

</llo_original>
